<compile_context>
chip_gen: v6e
topology: v6e:2x2x1
jax: 0.10.0
libtpu: 0.0.40
codegen_flags: <defaults>
</compile_context>

<pallas_src>
import functools
import math

import jax
import jax.numpy as jnp
from jax import lax
from jax.experimental import pallas as pl
from jax.experimental.pallas import tpu as pltpu

NEG_INF = -1e30          # stands in for float('-inf') of the causal mask
LN_EPS = 1e-5            # PyTorch nn.Transformer layer_norm_eps default


# ------------------------- shared in-kernel helpers -------------------------

def _ln(x, g, b, eps=LN_EPS):
    """LayerNorm over the last dim (biased variance, PyTorch semantics). f32 math."""
    mu = jnp.mean(x, axis=-1, keepdims=True)
    xc = x - mu
    var = jnp.mean(xc * xc, axis=-1, keepdims=True)
    return xc * lax.rsqrt(var + eps) * g + b


def _heads_attention(q, k, v, w_out, nhead, causal):
    """q:(Lq,d) f32 (already scaled), k/v:(Lk,d) f32, w_out:(d,d) bf16.
    Returns sum_h softmax(q_h k_h^T) v_h @ W_out[h] : (Lq, d) f32 (no bias)."""
    Lq, d = q.shape
    Lk = k.shape[0]
    dh = d // nhead

    if causal:
        row = lax.broadcasted_iota(jnp.int32, (Lq, Lk), 0)
        col = lax.broadcasted_iota(jnp.int32, (Lq, Lk), 1)
        keep = col <= row

    y = jnp.zeros((Lq, d), jnp.float32)
    for h in range(nhead):
        sl = slice(h * dh, (h + 1) * dh)
        qh = q[:, sl].astype(jnp.bfloat16)
        kh = k[:, sl].astype(jnp.bfloat16)
        vh = v[:, sl].astype(jnp.bfloat16)
        # q @ k^T, contraction on the head dim (no explicit transpose materialized).
        s = lax.dot_general(qh, kh, (((1,), (1,)), ((), ())),
                            preferred_element_type=jnp.float32)
        if causal:
            s = jnp.where(keep, s, NEG_INF)
        s = s - jnp.max(s, axis=-1, keepdims=True)
        p = jnp.exp(s)
        p = p * pl.reciprocal(jnp.sum(p, axis=-1, keepdims=True), approx=True)
        oh = jnp.dot(p.astype(jnp.bfloat16), vh, preferred_element_type=jnp.float32)
        # fold the output projection per head: concat_h(o_h) @ W_out == sum_h o_h @ W_out[h]
        y = y + jnp.dot(oh.astype(jnp.bfloat16), w_out[sl, :],
                        preferred_element_type=jnp.float32)
    return y


def _self_attn_sublayer(x, wqkv, bqkv, wout, bout, g, b, nhead, causal):
    """Post-norm self-attention sublayer on a single (L, d) slab (all f32 in/out)."""
    d = x.shape[1]
    dh = d // nhead
    scale = 1.0 / math.sqrt(dh)
    qkv = jnp.dot(x.astype(jnp.bfloat16), wqkv,
                  preferred_element_type=jnp.float32) + bqkv          # (L, 3d)
    q = qkv[:, :d] * scale
    k = qkv[:, d:2 * d]
    v = qkv[:, 2 * d:]
    y = _heads_attention(q, k, v, wout, nhead, causal) + bout
    return _ln(x + y, g, b)


def _cross_attn_sublayer(x, mem, wq, bq, wkv, bkv, wout, bout, g, b, nhead):
    d = x.shape[1]
    dh = d // nhead
    scale = 1.0 / math.sqrt(dh)
    q = (jnp.dot(x.astype(jnp.bfloat16), wq,
                 preferred_element_type=jnp.float32) + bq) * scale
    kv = jnp.dot(mem.astype(jnp.bfloat16), wkv,
                 preferred_element_type=jnp.float32) + bkv            # (Lk, 2d)
    k = kv[:, :d]
    v = kv[:, d:]
    y = _heads_attention(q, k, v, wout, nhead, causal=False) + bout
    return _ln(x + y, g, b)


def _ffn_sublayer(x, w1, b1, w2, b2, g, b):
    h = jnp.dot(x.astype(jnp.bfloat16), w1,
                preferred_element_type=jnp.float32) + b1
    h = jnp.maximum(h, 0.0)
    y = jnp.dot(h.astype(jnp.bfloat16), w2,
                preferred_element_type=jnp.float32) + b2
    return _ln(x + y, g, b)


# ------------------------- fused per-layer Pallas kernels -------------------------

def _encoder_layer_kernel(x_ref,
                          wqkv_ref, bqkv_ref, wout_ref, bout_ref, ln1g_ref, ln1b_ref,
                          w1_ref, b1_ref, w2_ref, b2_ref, ln2g_ref, ln2b_ref,
                          fng_ref, fnb_ref,
                          o_ref, *, nhead, final_norm):
    """One full encoder layer (self-attn + FFN sublayers); optionally fused final
    encoder LayerNorm (applied only for the last layer)."""
    x = x_ref[0]                                                       # (L, d) f32
    x = _self_attn_sublayer(x, wqkv_ref[...], bqkv_ref[...], wout_ref[...],
                            bout_ref[...], ln1g_ref[...], ln1b_ref[...],
                            nhead, causal=False)
    x = _ffn_sublayer(x, w1_ref[...], b1_ref[...], w2_ref[...], b2_ref[...],
                      ln2g_ref[...], ln2b_ref[...])
    if final_norm:
        x = _ln(x, fng_ref[...], fnb_ref[...])
    o_ref[0] = x.astype(o_ref.dtype)


def _decoder_layer_kernel(x_ref, m_ref,
                          wqkv_ref, bqkv_ref, saout_ref, sabout_ref, ln1g_ref, ln1b_ref,
                          wq_ref, bq_ref, wkv_ref, bkv_ref, caout_ref, cabout_ref,
                          ln2g_ref, ln2b_ref,
                          w1_ref, b1_ref, w2_ref, b2_ref, ln3g_ref, ln3b_ref,
                          fng_ref, fnb_ref, genw_ref, genb_ref,
                          o_ref, *, nhead, final_norm, apply_gen):
    """One full decoder layer (causal self-attn + cross-attn + FFN); the last
    layer also fuses the final decoder LayerNorm and the generator Linear."""
    x = x_ref[0]                                                       # (Lq, d)
    mem = m_ref[0]                                                     # (Lk, d)
    x = _self_attn_sublayer(x, wqkv_ref[...], bqkv_ref[...], saout_ref[...],
                            sabout_ref[...], ln1g_ref[...], ln1b_ref[...],
                            nhead, causal=True)
    x = _cross_attn_sublayer(x, mem, wq_ref[...], bq_ref[...], wkv_ref[...],
                             bkv_ref[...], caout_ref[...], cabout_ref[...],
                             ln2g_ref[...], ln2b_ref[...], nhead)
    x = _ffn_sublayer(x, w1_ref[...], b1_ref[...], w2_ref[...], b2_ref[...],
                      ln3g_ref[...], ln3b_ref[...])
    if final_norm:
        x = _ln(x, fng_ref[...], fnb_ref[...])
    if apply_gen:
        x = jnp.dot(x.astype(jnp.bfloat16), genw_ref[...],
                    preferred_element_type=jnp.float32) + genb_ref[...]
    o_ref[0] = x.astype(o_ref.dtype)


# ------------------------- pallas_call wrappers -------------------------

def _bspec(shape):
    """Broadcast BlockSpec: same (whole-array) block for every grid step."""
    return pl.BlockSpec(shape, lambda i, _n=len(shape): (0,) * _n)


def encoder_layer(x, p, fn_g, fn_b, *, nhead, final_norm):
    """x: (bs, L, d).  One grid step per batch element (parallel across TCs)."""
    bs, L, d = x.shape
    dff = p["ff_w1"].shape[1]
    flops = 2 * bs * (L * d * 3 * d + 2 * L * L * d + L * d * d + 2 * L * d * dff)
    bytes_accessed = 2 * bs * L * d * 4 + 2 * (4 * d * d + 2 * d * dff)
    return pl.pallas_call(
        functools.partial(_encoder_layer_kernel, nhead=nhead, final_norm=final_norm),
        grid=(bs,),
        out_shape=jax.ShapeDtypeStruct((bs, L, d), jnp.float32),
        in_specs=[
            pl.BlockSpec((1, L, d), lambda i: (i, 0, 0)),
            _bspec((d, 3 * d)), _bspec((1, 3 * d)),
            _bspec((d, d)), _bspec((1, d)),
            _bspec((1, d)), _bspec((1, d)),
            _bspec((d, dff)), _bspec((1, dff)),
            _bspec((dff, d)), _bspec((1, d)),
            _bspec((1, d)), _bspec((1, d)),
            _bspec((1, d)), _bspec((1, d)),
        ],
        out_specs=pl.BlockSpec((1, L, d), lambda i: (i, 0, 0)),
        compiler_params=pltpu.CompilerParams(dimension_semantics=("parallel",)),
        cost_estimate=pl.CostEstimate(flops=flops, transcendentals=bs * nhead * L * L,
                                      bytes_accessed=bytes_accessed),
    )(x, p["sa_wqkv"], p["sa_bqkv"], p["sa_wout"], p["sa_bout"],
      p["ln1_g"], p["ln1_b"],
      p["ff_w1"], p["ff_b1"], p["ff_w2"], p["ff_b2"],
      p["ln2_g"], p["ln2_b"], fn_g, fn_b)


def decoder_layer(x, mem, p, fn_g, fn_b, gen_w, gen_b, *, nhead, final_norm, apply_gen):
    bs, Lq, d = x.shape
    Lk = mem.shape[1]
    dff = p["ff_w1"].shape[1]
    flops = 2 * bs * (Lq * d * 3 * d + 2 * Lq * Lq * d + Lq * d * d
                      + Lq * d * d + Lk * d * 2 * d + 2 * Lq * Lk * d + Lq * d * d
                      + 2 * Lq * d * dff + (Lq * d * d if apply_gen else 0))
    bytes_accessed = bs * (2 * Lq + Lk) * d * 4 + 2 * (9 * d * d + 2 * d * dff)
    return pl.pallas_call(
        functools.partial(_decoder_layer_kernel, nhead=nhead,
                          final_norm=final_norm, apply_gen=apply_gen),
        grid=(bs,),
        out_shape=jax.ShapeDtypeStruct((bs, Lq, d), jnp.float32),
        in_specs=[
            pl.BlockSpec((1, Lq, d), lambda i: (i, 0, 0)),
            pl.BlockSpec((1, Lk, d), lambda i: (i, 0, 0)),
            _bspec((d, 3 * d)), _bspec((1, 3 * d)),
            _bspec((d, d)), _bspec((1, d)),
            _bspec((1, d)), _bspec((1, d)),
            _bspec((d, d)), _bspec((1, d)),
            _bspec((d, 2 * d)), _bspec((1, 2 * d)),
            _bspec((d, d)), _bspec((1, d)),
            _bspec((1, d)), _bspec((1, d)),
            _bspec((d, dff)), _bspec((1, dff)),
            _bspec((dff, d)), _bspec((1, d)),
            _bspec((1, d)), _bspec((1, d)),
            _bspec((1, d)), _bspec((1, d)),
            _bspec((d, d)), _bspec((1, d)),
        ],
        out_specs=pl.BlockSpec((1, Lq, d), lambda i: (i, 0, 0)),
        compiler_params=pltpu.CompilerParams(dimension_semantics=("parallel",)),
        cost_estimate=pl.CostEstimate(
            flops=flops,
            transcendentals=bs * nhead * (Lq * Lq + Lq * Lk),
            bytes_accessed=bytes_accessed),
    )(x, mem,
      p["sa_wqkv"], p["sa_bqkv"], p["sa_wout"], p["sa_bout"], p["ln1_g"], p["ln1_b"],
      p["ca_wq"], p["ca_bq"], p["ca_wkv"], p["ca_bkv"], p["ca_wout"], p["ca_bout"],
      p["ln2_g"], p["ln2_b"],
      p["ff_w1"], p["ff_b1"], p["ff_w2"], p["ff_b2"], p["ln3_g"], p["ln3_b"],
      fn_g, fn_b, gen_w, gen_b)


# ------------------------- glue (reshapes, PE) -------------------------

def flatten_img(x):
    # (bs, c, n, h, w) -> (bs, n, c*h*w)   (batch-first form of the reference flatten)
    bs, c, n, h, w = x.shape
    return jnp.transpose(x, (0, 2, 1, 3, 4)).reshape(bs, n, c * h * w)


def sine_positional_encoding(maxlen, d):
    pos = jnp.arange(maxlen, dtype=jnp.float32)[:, None]
    den = jnp.exp(-jnp.arange(0, d, 2, dtype=jnp.float32) * math.log(10000.0) / d)
    pe = jnp.zeros((maxlen, d), jnp.float32)
    pe = pe.at[:, 0::2].set(jnp.sin(pos * den))
    pe = pe.at[:, 1::2].set(jnp.cos(pos * den))
    return pe


# TODO(synk): PositionEmbeddingSineTokens is not defined in vid2vid.bak.py; inferred here
# as n_token learned prefix tokens prepended to the sequence plus additive sinusoidal
# positional encoding (dropout = 0 / eval mode).
def position_embedding_sine_tokens(x, tokens, pe):
    bs, n, d = x.shape
    n_token = tokens.shape[0]
    tok = jnp.broadcast_to(tokens[None], (bs, n_token, d))
    x = jnp.concatenate([tok, x], axis=1)
    return x + pe[None, : n + n_token, :]


# ------------------------- full forward -------------------------

def vid2vid_forward(params, src, trg, cfg):
    nc, ps, nhead, n_token = (cfg["n_channels"], cfg["patch_size"],
                              cfg["nhead"], cfg["n_token"])

    src_emb = position_embedding_sine_tokens(flatten_img(src), params["tokens"], params["pe"])
    tgt_emb = position_embedding_sine_tokens(flatten_img(trg), params["tokens"], params["pe"])
    # src_mask is all-zeros in the reference -> no-op (not passed); tgt_mask is causal
    # and generated inside the decoder self-attention kernel (no HBM mask array).

    # encoder (post-norm layers + final encoder norm fused into the last layer's kernel)
    mem = src_emb
    n_enc = len(params["encoder_layers"])
    for li, p in enumerate(params["encoder_layers"]):
        mem = encoder_layer(mem, p, params["enc_norm_g"], params["enc_norm_b"],
                            nhead=nhead, final_norm=(li == n_enc - 1))

    # decoder (+ final decoder norm + generator Linear fused into the last layer)
    out = tgt_emb
    n_dec = len(params["decoder_layers"])
    for li, p in enumerate(params["decoder_layers"]):
        last = li == n_dec - 1
        out = decoder_layer(out, mem, p, params["dec_norm_g"], params["dec_norm_b"],
                            params["gen_w"], params["gen_b"],
                            nhead=nhead, final_norm=last, apply_gen=last)

    # reconstruction (replicates the reference _recon_img reshape exactly) + residual
    bs, Lt, d = out.shape
    out = out.reshape(bs, nc, Lt, ps, ps)
    out = out[:, :, n_token:]
    return out + src


# ------------------------- deterministic parameter init -------------------------

def init_params(key, cfg):
    d = cfg["patch_size"] ** 2 * cfg["n_channels"]
    dff = cfg["dim_feedforward"]
    maxlen = cfg["n_frames"] + cfg["n_token"]

    keys = iter(jax.random.split(key, 256))

    def w(shape, scale=0.02):
        # weights are stored pre-transposed (x @ W orientation) and in bf16 for the MXU
        return (scale * jax.random.normal(next(keys), shape, jnp.float32)).astype(jnp.bfloat16)

    def zeros(n):
        return jnp.zeros((1, n), jnp.float32)

    def ones(n):
        return jnp.ones((1, n), jnp.float32)

    def enc_layer():
        return dict(
            sa_wqkv=w((d, 3 * d)), sa_bqkv=zeros(3 * d),
            sa_wout=w((d, d)), sa_bout=zeros(d),
            ln1_g=ones(d), ln1_b=zeros(d),
            ff_w1=w((d, dff)), ff_b1=zeros(dff),
            ff_w2=w((dff, d)), ff_b2=zeros(d),
            ln2_g=ones(d), ln2_b=zeros(d),
        )

    def dec_layer():
        return dict(
            sa_wqkv=w((d, 3 * d)), sa_bqkv=zeros(3 * d),
            sa_wout=w((d, d)), sa_bout=zeros(d),
            ln1_g=ones(d), ln1_b=zeros(d),
            ca_wq=w((d, d)), ca_bq=zeros(d),
            ca_wkv=w((d, 2 * d)), ca_bkv=zeros(2 * d),
            ca_wout=w((d, d)), ca_bout=zeros(d),
            ln2_g=ones(d), ln2_b=zeros(d),
            ff_w1=w((d, dff)), ff_b1=zeros(dff),
            ff_w2=w((dff, d)), ff_b2=zeros(d),
            ln3_g=ones(d), ln3_b=zeros(d),
        )

    return dict(
        tokens=(0.02 * jax.random.normal(next(keys), (cfg["n_token"], d), jnp.float32)),
        pe=sine_positional_encoding(maxlen, d),
        encoder_layers=[enc_layer() for _ in range(cfg["num_encoder_layers"])],
        decoder_layers=[dec_layer() for _ in range(cfg["num_decoder_layers"])],
        enc_norm_g=ones(d), enc_norm_b=zeros(d),
        dec_norm_g=ones(d), dec_norm_b=zeros(d),
        gen_w=w((d, d)), gen_b=zeros(d),
    )


if __name__ == "__main__":
    cfg = dict(patch_size=4, n_channels=4, nhead=4,
               num_encoder_layers=1, num_decoder_layers=1,
               dim_feedforward=32, dropout=0.0,
               n_token=2, n_frames=8)

    key = jax.random.PRNGKey(0)
    k_src, k_trg, k_param = jax.random.split(key, 3)
    bs = 2
    shape = (bs, cfg["n_channels"], cfg["n_frames"], cfg["patch_size"], cfg["patch_size"])
    src = jax.random.normal(k_src, shape, jnp.float32)
    trg = jax.random.normal(k_trg, shape, jnp.float32)
    params = init_params(k_param, cfg)

    fwd = jax.jit(lambda p, s, t: vid2vid_forward(p, s, t, cfg))
    out = jax.block_until_ready(fwd(params, src, trg))
    assert out.shape == src.shape and out.dtype == jnp.float32
    print("KERNEL_OK")
</pallas_src>

<mosaic_0001>
module attributes {stable_mosaic.version = 11 : i64} {
  func.func @_encoder_layer_kernel(%arg0: i32, %arg1: memref<1x10x64xf32, #tpu.memory_space<vmem>>, %arg2: memref<64x192xbf16, #tpu.memory_space<vmem>>, %arg3: memref<1x192xf32, #tpu.memory_space<vmem>>, %arg4: memref<64x64xbf16, #tpu.memory_space<vmem>>, %arg5: memref<1x64xf32, #tpu.memory_space<vmem>>, %arg6: memref<1x64xf32, #tpu.memory_space<vmem>>, %arg7: memref<1x64xf32, #tpu.memory_space<vmem>>, %arg8: memref<64x32xbf16, #tpu.memory_space<vmem>>, %arg9: memref<1x32xf32, #tpu.memory_space<vmem>>, %arg10: memref<32x64xbf16, #tpu.memory_space<vmem>>, %arg11: memref<1x64xf32, #tpu.memory_space<vmem>>, %arg12: memref<1x64xf32, #tpu.memory_space<vmem>>, %arg13: memref<1x64xf32, #tpu.memory_space<vmem>>, %arg14: memref<1x64xf32, #tpu.memory_space<vmem>>, %arg15: memref<1x64xf32, #tpu.memory_space<vmem>>, %arg16: memref<1x10x64xf32, #tpu.memory_space<vmem>>) attributes {dimension_semantics = [#tpu.dimension_semantics<parallel>], iteration_bounds = array<i64: 2>, scalar_prefetch = 0 : i64, scratch_operands = 0 : i64, tpu.core_type = #tpu.core_type<tc>, window_params = [{transform_indices = @transform_0, window_bounds = array<i64: 1, 10, 64>}, {pipeline_mode = #tpu.pipeline_mode<synchronous>, transform_indices = @transform_1, window_bounds = array<i64: 64, 192>}, {pipeline_mode = #tpu.pipeline_mode<synchronous>, transform_indices = @transform_2, window_bounds = array<i64: 1, 192>}, {pipeline_mode = #tpu.pipeline_mode<synchronous>, transform_indices = @transform_3, window_bounds = array<i64: 64, 64>}, {pipeline_mode = #tpu.pipeline_mode<synchronous>, transform_indices = @transform_4, window_bounds = array<i64: 1, 64>}, {pipeline_mode = #tpu.pipeline_mode<synchronous>, transform_indices = @transform_5, window_bounds = array<i64: 1, 64>}, {pipeline_mode = #tpu.pipeline_mode<synchronous>, transform_indices = @transform_6, window_bounds = array<i64: 1, 64>}, {pipeline_mode = #tpu.pipeline_mode<synchronous>, transform_indices = @transform_7, window_bounds = array<i64: 64, 32>}, {pipeline_mode = #tpu.pipeline_mode<synchronous>, transform_indices = @transform_8, window_bounds = array<i64: 1, 32>}, {pipeline_mode = #tpu.pipeline_mode<synchronous>, transform_indices = @transform_9, window_bounds = array<i64: 32, 64>}, {pipeline_mode = #tpu.pipeline_mode<synchronous>, transform_indices = @transform_10, window_bounds = array<i64: 1, 64>}, {pipeline_mode = #tpu.pipeline_mode<synchronous>, transform_indices = @transform_11, window_bounds = array<i64: 1, 64>}, {pipeline_mode = #tpu.pipeline_mode<synchronous>, transform_indices = @transform_12, window_bounds = array<i64: 1, 64>}, {pipeline_mode = #tpu.pipeline_mode<synchronous>, transform_indices = @transform_13, window_bounds = array<i64: 1, 64>}, {pipeline_mode = #tpu.pipeline_mode<synchronous>, transform_indices = @transform_14, window_bounds = array<i64: 1, 64>}, {transform_indices = @transform_15, window_bounds = array<i64: 1, 10, 64>}]} {
    %c0 = arith.constant 0 : index
    %c0_0 = arith.constant 0 : index
    %c0_1 = arith.constant 0 : index
    %0 = vector.load %arg1[%c0, %c0_0, %c0_1] : memref<1x10x64xf32, #tpu.memory_space<vmem>>, vector<1x10x64xf32>
    %1 = vector.shape_cast %0 : vector<1x10x64xf32> to vector<10x64xf32>
    %c0_2 = arith.constant 0 : index
    %c0_3 = arith.constant 0 : index
    %2 = vector.load %arg2[%c0_2, %c0_3] : memref<64x192xbf16, #tpu.memory_space<vmem>>, vector<64x192xbf16>
    %c0_4 = arith.constant 0 : index
    %c0_5 = arith.constant 0 : index
    %3 = vector.load %arg3[%c0_4, %c0_5] : memref<1x192xf32, #tpu.memory_space<vmem>>, vector<1x192xf32>
    %c0_6 = arith.constant 0 : index
    %c0_7 = arith.constant 0 : index
    %4 = vector.load %arg4[%c0_6, %c0_7] : memref<64x64xbf16, #tpu.memory_space<vmem>>, vector<64x64xbf16>
    %c0_8 = arith.constant 0 : index
    %c0_9 = arith.constant 0 : index
    %5 = vector.load %arg5[%c0_8, %c0_9] : memref<1x64xf32, #tpu.memory_space<vmem>>, vector<1x64xf32>
    %c0_10 = arith.constant 0 : index
    %c0_11 = arith.constant 0 : index
    %6 = vector.load %arg6[%c0_10, %c0_11] : memref<1x64xf32, #tpu.memory_space<vmem>>, vector<1x64xf32>
    %c0_12 = arith.constant 0 : index
    %c0_13 = arith.constant 0 : index
    %7 = vector.load %arg7[%c0_12, %c0_13] : memref<1x64xf32, #tpu.memory_space<vmem>>, vector<1x64xf32>
    %8 = arith.truncf %1 : vector<10x64xf32> to vector<10x64xbf16>
    %cst = arith.constant dense<0.000000e+00> : vector<10x192xf32>
    %9 = tpu.matmul %8, %2, %cst {dimension_numbers = #tpu.dot_dimension_numbers<[1], [0], [0], [1], [0, 0, 1, 1], [], []>} : vector<10x64xbf16>, vector<64x192xbf16>, vector<10x192xf32> -> vector<10x192xf32>
    %10 = vector.broadcast %3 : vector<1x192xf32> to vector<10x192xf32>
    %11 = arith.addf %9, %10 : vector<10x192xf32>
    %12 = vector.extract_strided_slice %11 {offsets = [0, 0], sizes = [10, 64], strides = [1, 1]} : vector<10x192xf32> to vector<10x64xf32>
    %cst_14 = arith.constant 2.500000e-01 : f32
    %13 = vector.broadcast %cst_14 : f32 to vector<10x64xf32>
    %14 = arith.mulf %12, %13 : vector<10x64xf32>
    %15 = vector.extract_strided_slice %11 {offsets = [0, 64], sizes = [10, 64], strides = [1, 1]} : vector<10x192xf32> to vector<10x64xf32>
    %16 = vector.extract_strided_slice %11 {offsets = [0, 128], sizes = [10, 64], strides = [1, 1]} : vector<10x192xf32> to vector<10x64xf32>
    %cst_15 = arith.constant 0.000000e+00 : f32
    %17 = vector.broadcast %cst_15 : f32 to vector<10x64xf32>
    %18 = vector.extract_strided_slice %14 {offsets = [0, 0], sizes = [10, 16], strides = [1, 1]} : vector<10x64xf32> to vector<10x16xf32>
    %19 = arith.truncf %18 : vector<10x16xf32> to vector<10x16xbf16>
    %20 = vector.extract_strided_slice %15 {offsets = [0, 0], sizes = [10, 16], strides = [1, 1]} : vector<10x64xf32> to vector<10x16xf32>
    %21 = arith.truncf %20 : vector<10x16xf32> to vector<10x16xbf16>
    %22 = vector.extract_strided_slice %16 {offsets = [0, 0], sizes = [10, 16], strides = [1, 1]} : vector<10x64xf32> to vector<10x16xf32>
    %23 = arith.truncf %22 : vector<10x16xf32> to vector<10x16xbf16>
    %cst_16 = arith.constant dense<0.000000e+00> : vector<10x10xf32>
    %24 = tpu.matmul %19, %21, %cst_16 {dimension_numbers = #tpu.dot_dimension_numbers<[1], [1], [0], [0], [0, 0, 1, 0], [], []>} : vector<10x16xbf16>, vector<10x16xbf16>, vector<10x10xf32> -> vector<10x10xf32>
    %cst_17 = arith.constant dense<0xFF800000> : vector<10xf32>
    %25 = vector.multi_reduction <maximumf>, %24, %cst_17 [1] : vector<10x10xf32> to vector<10xf32>
    %26 = vector.shape_cast %25 : vector<10xf32> to vector<10x1xf32>
    %27 = vector.broadcast %26 : vector<10x1xf32> to vector<10x10xf32>
    %28 = arith.subf %24, %27 : vector<10x10xf32>
    %29 = math.exp %28 : vector<10x10xf32>
    %cst_18 = arith.constant dense<0.000000e+00> : vector<10xf32>
    %30 = vector.multi_reduction <add>, %29, %cst_18 [1] : vector<10x10xf32> to vector<10xf32>
    %31 = vector.shape_cast %30 : vector<10xf32> to vector<10x1xf32>
    %32 = tpu.reciprocal %31 {approx = true} : vector<10x1xf32> -> vector<10x1xf32>
    %33 = vector.broadcast %32 : vector<10x1xf32> to vector<10x10xf32>
    %34 = arith.mulf %29, %33 : vector<10x10xf32>
    %35 = arith.truncf %34 : vector<10x10xf32> to vector<10x10xbf16>
    %cst_19 = arith.constant dense<0.000000e+00> : vector<10x16xf32>
    %36 = tpu.matmul %35, %23, %cst_19 {dimension_numbers = #tpu.dot_dimension_numbers<[1], [0], [0], [1], [0, 0, 1, 1], [], []>} : vector<10x10xbf16>, vector<10x16xbf16>, vector<10x16xf32> -> vector<10x16xf32>
    %37 = arith.truncf %36 : vector<10x16xf32> to vector<10x16xbf16>
    %38 = vector.extract_strided_slice %4 {offsets = [0, 0], sizes = [16, 64], strides = [1, 1]} : vector<64x64xbf16> to vector<16x64xbf16>
    %cst_20 = arith.constant dense<0.000000e+00> : vector<10x64xf32>
    %39 = tpu.matmul %37, %38, %cst_20 {dimension_numbers = #tpu.dot_dimension_numbers<[1], [0], [0], [1], [0, 0, 1, 1], [], []>} : vector<10x16xbf16>, vector<16x64xbf16>, vector<10x64xf32> -> vector<10x64xf32>
    %40 = arith.addf %17, %39 : vector<10x64xf32>
    %41 = vector.extract_strided_slice %14 {offsets = [0, 16], sizes = [10, 16], strides = [1, 1]} : vector<10x64xf32> to vector<10x16xf32>
    %42 = arith.truncf %41 : vector<10x16xf32> to vector<10x16xbf16>
    %43 = vector.extract_strided_slice %15 {offsets = [0, 16], sizes = [10, 16], strides = [1, 1]} : vector<10x64xf32> to vector<10x16xf32>
    %44 = arith.truncf %43 : vector<10x16xf32> to vector<10x16xbf16>
    %45 = vector.extract_strided_slice %16 {offsets = [0, 16], sizes = [10, 16], strides = [1, 1]} : vector<10x64xf32> to vector<10x16xf32>
    %46 = arith.truncf %45 : vector<10x16xf32> to vector<10x16xbf16>
    %cst_21 = arith.constant dense<0.000000e+00> : vector<10x10xf32>
    %47 = tpu.matmul %42, %44, %cst_21 {dimension_numbers = #tpu.dot_dimension_numbers<[1], [1], [0], [0], [0, 0, 1, 0], [], []>} : vector<10x16xbf16>, vector<10x16xbf16>, vector<10x10xf32> -> vector<10x10xf32>
    %cst_22 = arith.constant dense<0xFF800000> : vector<10xf32>
    %48 = vector.multi_reduction <maximumf>, %47, %cst_22 [1] : vector<10x10xf32> to vector<10xf32>
    %49 = vector.shape_cast %48 : vector<10xf32> to vector<10x1xf32>
    %50 = vector.broadcast %49 : vector<10x1xf32> to vector<10x10xf32>
    %51 = arith.subf %47, %50 : vector<10x10xf32>
    %52 = math.exp %51 : vector<10x10xf32>
    %cst_23 = arith.constant dense<0.000000e+00> : vector<10xf32>
    %53 = vector.multi_reduction <add>, %52, %cst_23 [1] : vector<10x10xf32> to vector<10xf32>
    %54 = vector.shape_cast %53 : vector<10xf32> to vector<10x1xf32>
    %55 = tpu.reciprocal %54 {approx = true} : vector<10x1xf32> -> vector<10x1xf32>
    %56 = vector.broadcast %55 : vector<10x1xf32> to vector<10x10xf32>
    %57 = arith.mulf %52, %56 : vector<10x10xf32>
    %58 = arith.truncf %57 : vector<10x10xf32> to vector<10x10xbf16>
    %cst_24 = arith.constant dense<0.000000e+00> : vector<10x16xf32>
    %59 = tpu.matmul %58, %46, %cst_24 {dimension_numbers = #tpu.dot_dimension_numbers<[1], [0], [0], [1], [0, 0, 1, 1], [], []>} : vector<10x10xbf16>, vector<10x16xbf16>, vector<10x16xf32> -> vector<10x16xf32>
    %60 = arith.truncf %59 : vector<10x16xf32> to vector<10x16xbf16>
    %61 = vector.extract_strided_slice %4 {offsets = [16, 0], sizes = [16, 64], strides = [1, 1]} : vector<64x64xbf16> to vector<16x64xbf16>
    %cst_25 = arith.constant dense<0.000000e+00> : vector<10x64xf32>
    %62 = tpu.matmul %60, %61, %cst_25 {dimension_numbers = #tpu.dot_dimension_numbers<[1], [0], [0], [1], [0, 0, 1, 1], [], []>} : vector<10x16xbf16>, vector<16x64xbf16>, vector<10x64xf32> -> vector<10x64xf32>
    %63 = arith.addf %40, %62 : vector<10x64xf32>
    %64 = vector.extract_strided_slice %14 {offsets = [0, 32], sizes = [10, 16], strides = [1, 1]} : vector<10x64xf32> to vector<10x16xf32>
    %65 = arith.truncf %64 : vector<10x16xf32> to vector<10x16xbf16>
    %66 = vector.extract_strided_slice %15 {offsets = [0, 32], sizes = [10, 16], strides = [1, 1]} : vector<10x64xf32> to vector<10x16xf32>
    %67 = arith.truncf %66 : vector<10x16xf32> to vector<10x16xbf16>
    %68 = vector.extract_strided_slice %16 {offsets = [0, 32], sizes = [10, 16], strides = [1, 1]} : vector<10x64xf32> to vector<10x16xf32>
    %69 = arith.truncf %68 : vector<10x16xf32> to vector<10x16xbf16>
    %cst_26 = arith.constant dense<0.000000e+00> : vector<10x10xf32>
    %70 = tpu.matmul %65, %67, %cst_26 {dimension_numbers = #tpu.dot_dimension_numbers<[1], [1], [0], [0], [0, 0, 1, 0], [], []>} : vector<10x16xbf16>, vector<10x16xbf16>, vector<10x10xf32> -> vector<10x10xf32>
    %cst_27 = arith.constant dense<0xFF800000> : vector<10xf32>
    %71 = vector.multi_reduction <maximumf>, %70, %cst_27 [1] : vector<10x10xf32> to vector<10xf32>
    %72 = vector.shape_cast %71 : vector<10xf32> to vector<10x1xf32>
    %73 = vector.broadcast %72 : vector<10x1xf32> to vector<10x10xf32>
    %74 = arith.subf %70, %73 : vector<10x10xf32>
    %75 = math.exp %74 : vector<10x10xf32>
    %cst_28 = arith.constant dense<0.000000e+00> : vector<10xf32>
    %76 = vector.multi_reduction <add>, %75, %cst_28 [1] : vector<10x10xf32> to vector<10xf32>
    %77 = vector.shape_cast %76 : vector<10xf32> to vector<10x1xf32>
    %78 = tpu.reciprocal %77 {approx = true} : vector<10x1xf32> -> vector<10x1xf32>
    %79 = vector.broadcast %78 : vector<10x1xf32> to vector<10x10xf32>
    %80 = arith.mulf %75, %79 : vector<10x10xf32>
    %81 = arith.truncf %80 : vector<10x10xf32> to vector<10x10xbf16>
    %cst_29 = arith.constant dense<0.000000e+00> : vector<10x16xf32>
    %82 = tpu.matmul %81, %69, %cst_29 {dimension_numbers = #tpu.dot_dimension_numbers<[1], [0], [0], [1], [0, 0, 1, 1], [], []>} : vector<10x10xbf16>, vector<10x16xbf16>, vector<10x16xf32> -> vector<10x16xf32>
    %83 = arith.truncf %82 : vector<10x16xf32> to vector<10x16xbf16>
    %84 = vector.extract_strided_slice %4 {offsets = [32, 0], sizes = [16, 64], strides = [1, 1]} : vector<64x64xbf16> to vector<16x64xbf16>
    %cst_30 = arith.constant dense<0.000000e+00> : vector<10x64xf32>
    %85 = tpu.matmul %83, %84, %cst_30 {dimension_numbers = #tpu.dot_dimension_numbers<[1], [0], [0], [1], [0, 0, 1, 1], [], []>} : vector<10x16xbf16>, vector<16x64xbf16>, vector<10x64xf32> -> vector<10x64xf32>
    %86 = arith.addf %63, %85 : vector<10x64xf32>
    %87 = vector.extract_strided_slice %14 {offsets = [0, 48], sizes = [10, 16], strides = [1, 1]} : vector<10x64xf32> to vector<10x16xf32>
    %88 = arith.truncf %87 : vector<10x16xf32> to vector<10x16xbf16>
    %89 = vector.extract_strided_slice %15 {offsets = [0, 48], sizes = [10, 16], strides = [1, 1]} : vector<10x64xf32> to vector<10x16xf32>
    %90 = arith.truncf %89 : vector<10x16xf32> to vector<10x16xbf16>
    %91 = vector.extract_strided_slice %16 {offsets = [0, 48], sizes = [10, 16], strides = [1, 1]} : vector<10x64xf32> to vector<10x16xf32>
    %92 = arith.truncf %91 : vector<10x16xf32> to vector<10x16xbf16>
    %cst_31 = arith.constant dense<0.000000e+00> : vector<10x10xf32>
    %93 = tpu.matmul %88, %90, %cst_31 {dimension_numbers = #tpu.dot_dimension_numbers<[1], [1], [0], [0], [0, 0, 1, 0], [], []>} : vector<10x16xbf16>, vector<10x16xbf16>, vector<10x10xf32> -> vector<10x10xf32>
    %cst_32 = arith.constant dense<0xFF800000> : vector<10xf32>
    %94 = vector.multi_reduction <maximumf>, %93, %cst_32 [1] : vector<10x10xf32> to vector<10xf32>
    %95 = vector.shape_cast %94 : vector<10xf32> to vector<10x1xf32>
    %96 = vector.broadcast %95 : vector<10x1xf32> to vector<10x10xf32>
    %97 = arith.subf %93, %96 : vector<10x10xf32>
    %98 = math.exp %97 : vector<10x10xf32>
    %cst_33 = arith.constant dense<0.000000e+00> : vector<10xf32>
    %99 = vector.multi_reduction <add>, %98, %cst_33 [1] : vector<10x10xf32> to vector<10xf32>
    %100 = vector.shape_cast %99 : vector<10xf32> to vector<10x1xf32>
    %101 = tpu.reciprocal %100 {approx = true} : vector<10x1xf32> -> vector<10x1xf32>
    %102 = vector.broadcast %101 : vector<10x1xf32> to vector<10x10xf32>
    %103 = arith.mulf %98, %102 : vector<10x10xf32>
    %104 = arith.truncf %103 : vector<10x10xf32> to vector<10x10xbf16>
    %cst_34 = arith.constant dense<0.000000e+00> : vector<10x16xf32>
    %105 = tpu.matmul %104, %92, %cst_34 {dimension_numbers = #tpu.dot_dimension_numbers<[1], [0], [0], [1], [0, 0, 1, 1], [], []>} : vector<10x10xbf16>, vector<10x16xbf16>, vector<10x16xf32> -> vector<10x16xf32>
    %106 = arith.truncf %105 : vector<10x16xf32> to vector<10x16xbf16>
    %107 = vector.extract_strided_slice %4 {offsets = [48, 0], sizes = [16, 64], strides = [1, 1]} : vector<64x64xbf16> to vector<16x64xbf16>
    %cst_35 = arith.constant dense<0.000000e+00> : vector<10x64xf32>
    %108 = tpu.matmul %106, %107, %cst_35 {dimension_numbers = #tpu.dot_dimension_numbers<[1], [0], [0], [1], [0, 0, 1, 1], [], []>} : vector<10x16xbf16>, vector<16x64xbf16>, vector<10x64xf32> -> vector<10x64xf32>
    %109 = arith.addf %86, %108 : vector<10x64xf32>
    %110 = vector.broadcast %5 : vector<1x64xf32> to vector<10x64xf32>
    %111 = arith.addf %109, %110 : vector<10x64xf32>
    %112 = arith.addf %1, %111 : vector<10x64xf32>
    %cst_36 = arith.constant dense<0.000000e+00> : vector<10xf32>
    %113 = vector.multi_reduction <add>, %112, %cst_36 [1] : vector<10x64xf32> to vector<10xf32>
    %114 = vector.shape_cast %113 : vector<10xf32> to vector<10x1xf32>
    %cst_37 = arith.constant 6.400000e+01 : f32
    %115 = vector.broadcast %cst_37 : f32 to vector<10x1xf32>
    %116 = arith.divf %114, %115 : vector<10x1xf32>
    %117 = vector.broadcast %116 : vector<10x1xf32> to vector<10x64xf32>
    %118 = arith.subf %112, %117 : vector<10x64xf32>
    %119 = arith.mulf %118, %118 : vector<10x64xf32>
    %cst_38 = arith.constant dense<0.000000e+00> : vector<10xf32>
    %120 = vector.multi_reduction <add>, %119, %cst_38 [1] : vector<10x64xf32> to vector<10xf32>
    %121 = vector.shape_cast %120 : vector<10xf32> to vector<10x1xf32>
    %cst_39 = arith.constant 6.400000e+01 : f32
    %122 = vector.broadcast %cst_39 : f32 to vector<10x1xf32>
    %123 = arith.divf %121, %122 : vector<10x1xf32>
    %cst_40 = arith.constant 9.99999974E-6 : f32
    %124 = vector.broadcast %cst_40 : f32 to vector<10x1xf32>
    %125 = arith.addf %123, %124 : vector<10x1xf32>
    %126 = math.rsqrt %125 : vector<10x1xf32>
    %127 = vector.broadcast %126 : vector<10x1xf32> to vector<10x64xf32>
    %128 = arith.mulf %118, %127 : vector<10x64xf32>
    %129 = vector.broadcast %6 : vector<1x64xf32> to vector<10x64xf32>
    %130 = arith.mulf %128, %129 : vector<10x64xf32>
    %131 = vector.broadcast %7 : vector<1x64xf32> to vector<10x64xf32>
    %132 = arith.addf %130, %131 : vector<10x64xf32>
    %c0_41 = arith.constant 0 : index
    %c0_42 = arith.constant 0 : index
    %133 = vector.load %arg8[%c0_41, %c0_42] : memref<64x32xbf16, #tpu.memory_space<vmem>>, vector<64x32xbf16>
    %c0_43 = arith.constant 0 : index
    %c0_44 = arith.constant 0 : index
    %134 = vector.load %arg9[%c0_43, %c0_44] : memref<1x32xf32, #tpu.memory_space<vmem>>, vector<1x32xf32>
    %c0_45 = arith.constant 0 : index
    %c0_46 = arith.constant 0 : index
    %135 = vector.load %arg10[%c0_45, %c0_46] : memref<32x64xbf16, #tpu.memory_space<vmem>>, vector<32x64xbf16>
    %c0_47 = arith.constant 0 : index
    %c0_48 = arith.constant 0 : index
    %136 = vector.load %arg11[%c0_47, %c0_48] : memref<1x64xf32, #tpu.memory_space<vmem>>, vector<1x64xf32>
    %c0_49 = arith.constant 0 : index
    %c0_50 = arith.constant 0 : index
    %137 = vector.load %arg12[%c0_49, %c0_50] : memref<1x64xf32, #tpu.memory_space<vmem>>, vector<1x64xf32>
    %c0_51 = arith.constant 0 : index
    %c0_52 = arith.constant 0 : index
    %138 = vector.load %arg13[%c0_51, %c0_52] : memref<1x64xf32, #tpu.memory_space<vmem>>, vector<1x64xf32>
    %139 = arith.truncf %132 : vector<10x64xf32> to vector<10x64xbf16>
    %cst_53 = arith.constant dense<0.000000e+00> : vector<10x32xf32>
    %140 = tpu.matmul %139, %133, %cst_53 {dimension_numbers = #tpu.dot_dimension_numbers<[1], [0], [0], [1], [0, 0, 1, 1], [], []>} : vector<10x64xbf16>, vector<64x32xbf16>, vector<10x32xf32> -> vector<10x32xf32>
    %141 = vector.broadcast %134 : vector<1x32xf32> to vector<10x32xf32>
    %142 = arith.addf %140, %141 : vector<10x32xf32>
    %cst_54 = arith.constant 0.000000e+00 : f32
    %143 = vector.broadcast %cst_54 : f32 to vector<10x32xf32>
    %144 = arith.maximumf %142, %143 : vector<10x32xf32>
    %145 = arith.truncf %144 : vector<10x32xf32> to vector<10x32xbf16>
    %cst_55 = arith.constant dense<0.000000e+00> : vector<10x64xf32>
    %146 = tpu.matmul %145, %135, %cst_55 {dimension_numbers = #tpu.dot_dimension_numbers<[1], [0], [0], [1], [0, 0, 1, 1], [], []>} : vector<10x32xbf16>, vector<32x64xbf16>, vector<10x64xf32> -> vector<10x64xf32>
    %147 = vector.broadcast %136 : vector<1x64xf32> to vector<10x64xf32>
    %148 = arith.addf %146, %147 : vector<10x64xf32>
    %149 = arith.addf %132, %148 : vector<10x64xf32>
    %cst_56 = arith.constant dense<0.000000e+00> : vector<10xf32>
    %150 = vector.multi_reduction <add>, %149, %cst_56 [1] : vector<10x64xf32> to vector<10xf32>
    %151 = vector.shape_cast %150 : vector<10xf32> to vector<10x1xf32>
    %cst_57 = arith.constant 6.400000e+01 : f32
    %152 = vector.broadcast %cst_57 : f32 to vector<10x1xf32>
    %153 = arith.divf %151, %152 : vector<10x1xf32>
    %154 = vector.broadcast %153 : vector<10x1xf32> to vector<10x64xf32>
    %155 = arith.subf %149, %154 : vector<10x64xf32>
    %156 = arith.mulf %155, %155 : vector<10x64xf32>
    %cst_58 = arith.constant dense<0.000000e+00> : vector<10xf32>
    %157 = vector.multi_reduction <add>, %156, %cst_58 [1] : vector<10x64xf32> to vector<10xf32>
    %158 = vector.shape_cast %157 : vector<10xf32> to vector<10x1xf32>
    %cst_59 = arith.constant 6.400000e+01 : f32
    %159 = vector.broadcast %cst_59 : f32 to vector<10x1xf32>
    %160 = arith.divf %158, %159 : vector<10x1xf32>
    %cst_60 = arith.constant 9.99999974E-6 : f32
    %161 = vector.broadcast %cst_60 : f32 to vector<10x1xf32>
    %162 = arith.addf %160, %161 : vector<10x1xf32>
    %163 = math.rsqrt %162 : vector<10x1xf32>
    %164 = vector.broadcast %163 : vector<10x1xf32> to vector<10x64xf32>
    %165 = arith.mulf %155, %164 : vector<10x64xf32>
    %166 = vector.broadcast %137 : vector<1x64xf32> to vector<10x64xf32>
    %167 = arith.mulf %165, %166 : vector<10x64xf32>
    %168 = vector.broadcast %138 : vector<1x64xf32> to vector<10x64xf32>
    %169 = arith.addf %167, %168 : vector<10x64xf32>
    %c0_61 = arith.constant 0 : index
    %c0_62 = arith.constant 0 : index
    %170 = vector.load %arg14[%c0_61, %c0_62] : memref<1x64xf32, #tpu.memory_space<vmem>>, vector<1x64xf32>
    %c0_63 = arith.constant 0 : index
    %c0_64 = arith.constant 0 : index
    %171 = vector.load %arg15[%c0_63, %c0_64] : memref<1x64xf32, #tpu.memory_space<vmem>>, vector<1x64xf32>
    %cst_65 = arith.constant dense<0.000000e+00> : vector<10xf32>
    %172 = vector.multi_reduction <add>, %169, %cst_65 [1] : vector<10x64xf32> to vector<10xf32>
    %173 = vector.shape_cast %172 : vector<10xf32> to vector<10x1xf32>
    %cst_66 = arith.constant 6.400000e+01 : f32
    %174 = vector.broadcast %cst_66 : f32 to vector<10x1xf32>
    %175 = arith.divf %173, %174 : vector<10x1xf32>
    %176 = vector.broadcast %175 : vector<10x1xf32> to vector<10x64xf32>
    %177 = arith.subf %169, %176 : vector<10x64xf32>
    %178 = arith.mulf %177, %177 : vector<10x64xf32>
    %cst_67 = arith.constant dense<0.000000e+00> : vector<10xf32>
    %179 = vector.multi_reduction <add>, %178, %cst_67 [1] : vector<10x64xf32> to vector<10xf32>
    %180 = vector.shape_cast %179 : vector<10xf32> to vector<10x1xf32>
    %cst_68 = arith.constant 6.400000e+01 : f32
    %181 = vector.broadcast %cst_68 : f32 to vector<10x1xf32>
    %182 = arith.divf %180, %181 : vector<10x1xf32>
    %cst_69 = arith.constant 9.99999974E-6 : f32
    %183 = vector.broadcast %cst_69 : f32 to vector<10x1xf32>
    %184 = arith.addf %182, %183 : vector<10x1xf32>
    %185 = math.rsqrt %184 : vector<10x1xf32>
    %186 = vector.broadcast %185 : vector<10x1xf32> to vector<10x64xf32>
    %187 = arith.mulf %177, %186 : vector<10x64xf32>
    %188 = vector.broadcast %170 : vector<1x64xf32> to vector<10x64xf32>
    %189 = arith.mulf %187, %188 : vector<10x64xf32>
    %190 = vector.broadcast %171 : vector<1x64xf32> to vector<10x64xf32>
    %191 = arith.addf %189, %190 : vector<10x64xf32>
    %c0_70 = arith.constant 0 : index
    %c0_71 = arith.constant 0 : index
    %c0_72 = arith.constant 0 : index
    %192 = vector.load %arg16[%c0_70, %c0_71, %c0_72] : memref<1x10x64xf32, #tpu.memory_space<vmem>>, vector<1x10x64xf32>
    %193 = vector.shape_cast %192 : vector<1x10x64xf32> to vector<10x64xf32>
    %194 = vector.shape_cast %191 : vector<10x64xf32> to vector<1x10x64xf32>
    tpu.vector_store %arg16[%c0_70, %c0_71, %c0_72], %194 {strides = array<i32>} : memref<1x10x64xf32, #tpu.memory_space<vmem>>, vector<1x10x64xf32>,
    return
  }
  func.func @transform_0(%arg0: i32) -> (i32, i32, i32) {
    %c0_i32 = arith.constant 0 : i32
    %c0_i32_0 = arith.constant 0 : i32
    %c0_i32_1 = arith.constant 0 : i32
    return %arg0, %c0_i32, %c0_i32_0 : i32, i32, i32
  }
  func.func @transform_1(%arg0: i32) -> (i32, i32) {
    %c0_i32 = arith.constant 0 : i32
    %c0_i32_0 = arith.constant 0 : i32
    %c0_i32_1 = arith.constant 0 : i32
    return %c0_i32, %c0_i32_0 : i32, i32
  }
  func.func @transform_2(%arg0: i32) -> (i32, i32) {
    %c0_i32 = arith.constant 0 : i32
    %c0_i32_0 = arith.constant 0 : i32
    %c0_i32_1 = arith.constant 0 : i32
    return %c0_i32, %c0_i32_0 : i32, i32
  }
  func.func @transform_3(%arg0: i32) -> (i32, i32) {
    %c0_i32 = arith.constant 0 : i32
    %c0_i32_0 = arith.constant 0 : i32
    %c0_i32_1 = arith.constant 0 : i32
    return %c0_i32, %c0_i32_0 : i32, i32
  }
  func.func @transform_4(%arg0: i32) -> (i32, i32) {
    %c0_i32 = arith.constant 0 : i32
    %c0_i32_0 = arith.constant 0 : i32
    %c0_i32_1 = arith.constant 0 : i32
    return %c0_i32, %c0_i32_0 : i32, i32
  }
  func.func @transform_5(%arg0: i32) -> (i32, i32) {
    %c0_i32 = arith.constant 0 : i32
    %c0_i32_0 = arith.constant 0 : i32
    %c0_i32_1 = arith.constant 0 : i32
    return %c0_i32, %c0_i32_0 : i32, i32
  }
  func.func @transform_6(%arg0: i32) -> (i32, i32) {
    %c0_i32 = arith.constant 0 : i32
    %c0_i32_0 = arith.constant 0 : i32
    %c0_i32_1 = arith.constant 0 : i32
    return %c0_i32, %c0_i32_0 : i32, i32
  }
  func.func @transform_7(%arg0: i32) -> (i32, i32) {
    %c0_i32 = arith.constant 0 : i32
    %c0_i32_0 = arith.constant 0 : i32
    %c0_i32_1 = arith.constant 0 : i32
    return %c0_i32, %c0_i32_0 : i32, i32
  }
  func.func @transform_8(%arg0: i32) -> (i32, i32) {
    %c0_i32 = arith.constant 0 : i32
    %c0_i32_0 = arith.constant 0 : i32
    %c0_i32_1 = arith.constant 0 : i32
    return %c0_i32, %c0_i32_0 : i32, i32
  }
  func.func @transform_9(%arg0: i32) -> (i32, i32) {
    %c0_i32 = arith.constant 0 : i32
    %c0_i32_0 = arith.constant 0 : i32
    %c0_i32_1 = arith.constant 0 : i32
    return %c0_i32, %c0_i32_0 : i32, i32
  }
  func.func @transform_10(%arg0: i32) -> (i32, i32) {
    %c0_i32 = arith.constant 0 : i32
    %c0_i32_0 = arith.constant 0 : i32
    %c0_i32_1 = arith.constant 0 : i32
    return %c0_i32, %c0_i32_0 : i32, i32
  }
  func.func @transform_11(%arg0: i32) -> (i32, i32) {
    %c0_i32 = arith.constant 0 : i32
    %c0_i32_0 = arith.constant 0 : i32
    %c0_i32_1 = arith.constant 0 : i32
    return %c0_i32, %c0_i32_0 : i32, i32
  }
  func.func @transform_12(%arg0: i32) -> (i32, i32) {
    %c0_i32 = arith.constant 0 : i32
    %c0_i32_0 = arith.constant 0 : i32
    %c0_i32_1 = arith.constant 0 : i32
    return %c0_i32, %c0_i32_0 : i32, i32
  }
  func.func @transform_13(%arg0: i32) -> (i32, i32) {
    %c0_i32 = arith.constant 0 : i32
    %c0_i32_0 = arith.constant 0 : i32
    %c0_i32_1 = arith.constant 0 : i32
    return %c0_i32, %c0_i32_0 : i32, i32
  }
  func.func @transform_14(%arg0: i32) -> (i32, i32) {
    %c0_i32 = arith.constant 0 : i32
    %c0_i32_0 = arith.constant 0 : i32
    %c0_i32_1 = arith.constant 0 : i32
    return %c0_i32, %c0_i32_0 : i32, i32
  }
  func.func @transform_15(%arg0: i32) -> (i32, i32, i32) {
    %c0_i32 = arith.constant 0 : i32
    %c0_i32_0 = arith.constant 0 : i32
    %c0_i32_1 = arith.constant 0 : i32
    return %arg0, %c0_i32, %c0_i32_0 : i32, i32, i32
  }
}

module attributes {stable_mosaic.version = 11 : i64} {
  func.func @_decoder_layer_kernel(%arg0: i32, %arg1: memref<1x10x64xf32, #tpu.memory_space<vmem>>, %arg2: memref<1x10x64xf32, #tpu.memory_space<vmem>>, %arg3: memref<64x192xbf16, #tpu.memory_space<vmem>>, %arg4: memref<1x192xf32, #tpu.memory_space<vmem>>, %arg5: memref<64x64xbf16, #tpu.memory_space<vmem>>, %arg6: memref<1x64xf32, #tpu.memory_space<vmem>>, %arg7: memref<1x64xf32, #tpu.memory_space<vmem>>, %arg8: memref<1x64xf32, #tpu.memory_space<vmem>>, %arg9: memref<64x64xbf16, #tpu.memory_space<vmem>>, %arg10: memref<1x64xf32, #tpu.memory_space<vmem>>, %arg11: memref<64x128xbf16, #tpu.memory_space<vmem>>, %arg12: memref<1x128xf32, #tpu.memory_space<vmem>>, %arg13: memref<64x64xbf16, #tpu.memory_space<vmem>>, %arg14: memref<1x64xf32, #tpu.memory_space<vmem>>, %arg15: memref<1x64xf32, #tpu.memory_space<vmem>>, %arg16: memref<1x64xf32, #tpu.memory_space<vmem>>, %arg17: memref<64x32xbf16, #tpu.memory_space<vmem>>, %arg18: memref<1x32xf32, #tpu.memory_space<vmem>>, %arg19: memref<32x64xbf16, #tpu.memory_space<vmem>>, %arg20: memref<1x64xf32, #tpu.memory_space<vmem>>, %arg21: memref<1x64xf32, #tpu.memory_space<vmem>>, %arg22: memref<1x64xf32, #tpu.memory_space<vmem>>, %arg23: memref<1x64xf32, #tpu.memory_space<vmem>>, %arg24: memref<1x64xf32, #tpu.memory_space<vmem>>, %arg25: memref<64x64xbf16, #tpu.memory_space<vmem>>, %arg26: memref<1x64xf32, #tpu.memory_space<vmem>>, %arg27: memref<1x10x64xf32, #tpu.memory_space<vmem>>) attributes {dimension_semantics = [#tpu.dimension_semantics<parallel>], iteration_bounds = array<i64: 2>, scalar_prefetch = 0 : i64, scratch_operands = 0 : i64, tpu.core_type = #tpu.core_type<tc>, window_params = [{transform_indices = @transform_0, window_bounds = array<i64: 1, 10, 64>}, {transform_indices = @transform_1, window_bounds = array<i64: 1, 10, 64>}, {pipeline_mode = #tpu.pipeline_mode<synchronous>, transform_indices = @transform_2, window_bounds = array<i64: 64, 192>}, {pipeline_mode = #tpu.pipeline_mode<synchronous>, transform_indices = @transform_3, window_bounds = array<i64: 1, 192>}, {pipeline_mode = #tpu.pipeline_mode<synchronous>, transform_indices = @transform_4, window_bounds = array<i64: 64, 64>}, {pipeline_mode = #tpu.pipeline_mode<synchronous>, transform_indices = @transform_5, window_bounds = array<i64: 1, 64>}, {pipeline_mode = #tpu.pipeline_mode<synchronous>, transform_indices = @transform_6, window_bounds = array<i64: 1, 64>}, {pipeline_mode = #tpu.pipeline_mode<synchronous>, transform_indices = @transform_7, window_bounds = array<i64: 1, 64>}, {pipeline_mode = #tpu.pipeline_mode<synchronous>, transform_indices = @transform_8, window_bounds = array<i64: 64, 64>}, {pipeline_mode = #tpu.pipeline_mode<synchronous>, transform_indices = @transform_9, window_bounds = array<i64: 1, 64>}, {pipeline_mode = #tpu.pipeline_mode<synchronous>, transform_indices = @transform_10, window_bounds = array<i64: 64, 128>}, {pipeline_mode = #tpu.pipeline_mode<synchronous>, transform_indices = @transform_11, window_bounds = array<i64: 1, 128>}, {pipeline_mode = #tpu.pipeline_mode<synchronous>, transform_indices = @transform_12, window_bounds = array<i64: 64, 64>}, {pipeline_mode = #tpu.pipeline_mode<synchronous>, transform_indices = @transform_13, window_bounds = array<i64: 1, 64>}, {pipeline_mode = #tpu.pipeline_mode<synchronous>, transform_indices = @transform_14, window_bounds = array<i64: 1, 64>}, {pipeline_mode = #tpu.pipeline_mode<synchronous>, transform_indices = @transform_15, window_bounds = array<i64: 1, 64>}, {pipeline_mode = #tpu.pipeline_mode<synchronous>, transform_indices = @transform_16, window_bounds = array<i64: 64, 32>}, {pipeline_mode = #tpu.pipeline_mode<synchronous>, transform_indices = @transform_17, window_bounds = array<i64: 1, 32>}, {pipeline_mode = #tpu.pipeline_mode<synchronous>, transform_indices = @transform_18, window_bounds = array<i64: 32, 64>}, {pipeline_mode = #tpu.pipeline_mode<synchronous>, transform_indices = @transform_19, window_bounds = array<i64: 1, 64>}, {pipeline_mode = #tpu.pipeline_mode<synchronous>, transform_indices = @transform_20, window_bounds = array<i64: 1, 64>}, {pipeline_mode = #tpu.pipeline_mode<synchronous>, transform_indices = @transform_21, window_bounds = array<i64: 1, 64>}, {pipeline_mode = #tpu.pipeline_mode<synchronous>, transform_indices = @transform_22, window_bounds = array<i64: 1, 64>}, {pipeline_mode = #tpu.pipeline_mode<synchronous>, transform_indices = @transform_23, window_bounds = array<i64: 1, 64>}, {pipeline_mode = #tpu.pipeline_mode<synchronous>, transform_indices = @transform_24, window_bounds = array<i64: 64, 64>}, {pipeline_mode = #tpu.pipeline_mode<synchronous>, transform_indices = @transform_25, window_bounds = array<i64: 1, 64>}, {transform_indices = @transform_26, window_bounds = array<i64: 1, 10, 64>}]} {
    %c0 = arith.constant 0 : index
    %c0_0 = arith.constant 0 : index
    %c0_1 = arith.constant 0 : index
    %0 = vector.load %arg1[%c0, %c0_0, %c0_1] : memref<1x10x64xf32, #tpu.memory_space<vmem>>, vector<1x10x64xf32>
    %1 = vector.shape_cast %0 : vector<1x10x64xf32> to vector<10x64xf32>
    %c0_2 = arith.constant 0 : index
    %c0_3 = arith.constant 0 : index
    %c0_4 = arith.constant 0 : index
    %2 = vector.load %arg2[%c0_2, %c0_3, %c0_4] : memref<1x10x64xf32, #tpu.memory_space<vmem>>, vector<1x10x64xf32>
    %3 = vector.shape_cast %2 : vector<1x10x64xf32> to vector<10x64xf32>
    %c0_5 = arith.constant 0 : index
    %c0_6 = arith.constant 0 : index
    %4 = vector.load %arg3[%c0_5, %c0_6] : memref<64x192xbf16, #tpu.memory_space<vmem>>, vector<64x192xbf16>
    %c0_7 = arith.constant 0 : index
    %c0_8 = arith.constant 0 : index
    %5 = vector.load %arg4[%c0_7, %c0_8] : memref<1x192xf32, #tpu.memory_space<vmem>>, vector<1x192xf32>
    %c0_9 = arith.constant 0 : index
    %c0_10 = arith.constant 0 : index
    %6 = vector.load %arg5[%c0_9, %c0_10] : memref<64x64xbf16, #tpu.memory_space<vmem>>, vector<64x64xbf16>
    %c0_11 = arith.constant 0 : index
    %c0_12 = arith.constant 0 : index
    %7 = vector.load %arg6[%c0_11, %c0_12] : memref<1x64xf32, #tpu.memory_space<vmem>>, vector<1x64xf32>
    %c0_13 = arith.constant 0 : index
    %c0_14 = arith.constant 0 : index
    %8 = vector.load %arg7[%c0_13, %c0_14] : memref<1x64xf32, #tpu.memory_space<vmem>>, vector<1x64xf32>
    %c0_15 = arith.constant 0 : index
    %c0_16 = arith.constant 0 : index
    %9 = vector.load %arg8[%c0_15, %c0_16] : memref<1x64xf32, #tpu.memory_space<vmem>>, vector<1x64xf32>
    %10 = arith.truncf %1 : vector<10x64xf32> to vector<10x64xbf16>
    %cst = arith.constant dense<0.000000e+00> : vector<10x192xf32>
    %11 = tpu.matmul %10, %4, %cst {dimension_numbers = #tpu.dot_dimension_numbers<[1], [0], [0], [1], [0, 0, 1, 1], [], []>} : vector<10x64xbf16>, vector<64x192xbf16>, vector<10x192xf32> -> vector<10x192xf32>
    %12 = vector.broadcast %5 : vector<1x192xf32> to vector<10x192xf32>
    %13 = arith.addf %11, %12 : vector<10x192xf32>
    %14 = vector.extract_strided_slice %13 {offsets = [0, 0], sizes = [10, 64], strides = [1, 1]} : vector<10x192xf32> to vector<10x64xf32>
    %cst_17 = arith.constant 2.500000e-01 : f32
    %15 = vector.broadcast %cst_17 : f32 to vector<10x64xf32>
    %16 = arith.mulf %14, %15 : vector<10x64xf32>
    %17 = vector.extract_strided_slice %13 {offsets = [0, 64], sizes = [10, 64], strides = [1, 1]} : vector<10x192xf32> to vector<10x64xf32>
    %18 = vector.extract_strided_slice %13 {offsets = [0, 128], sizes = [10, 64], strides = [1, 1]} : vector<10x192xf32> to vector<10x64xf32>
    %19 = tpu.iota {dimensions = array<i32: 0>} : vector<10x10xi32>
    %20 = tpu.iota {dimensions = array<i32: 1>} : vector<10x10xi32>
    %21 = arith.cmpi sle, %20, %19 : vector<10x10xi32>
    %cst_18 = arith.constant 0.000000e+00 : f32
    %22 = vector.broadcast %cst_18 : f32 to vector<10x64xf32>
    %23 = vector.extract_strided_slice %16 {offsets = [0, 0], sizes = [10, 16], strides = [1, 1]} : vector<10x64xf32> to vector<10x16xf32>
    %24 = arith.truncf %23 : vector<10x16xf32> to vector<10x16xbf16>
    %25 = vector.extract_strided_slice %17 {offsets = [0, 0], sizes = [10, 16], strides = [1, 1]} : vector<10x64xf32> to vector<10x16xf32>
    %26 = arith.truncf %25 : vector<10x16xf32> to vector<10x16xbf16>
    %27 = vector.extract_strided_slice %18 {offsets = [0, 0], sizes = [10, 16], strides = [1, 1]} : vector<10x64xf32> to vector<10x16xf32>
    %28 = arith.truncf %27 : vector<10x16xf32> to vector<10x16xbf16>
    %cst_19 = arith.constant dense<0.000000e+00> : vector<10x10xf32>
    %29 = tpu.matmul %24, %26, %cst_19 {dimension_numbers = #tpu.dot_dimension_numbers<[1], [1], [0], [0], [0, 0, 1, 0], [], []>} : vector<10x16xbf16>, vector<10x16xbf16>, vector<10x10xf32> -> vector<10x10xf32>
    %cst_20 = arith.constant -1.000000e+30 : f32
    %30 = vector.broadcast %cst_20 : f32 to vector<10x10xf32>
    %31 = arith.select %21, %29, %30 : vector<10x10xi1>, vector<10x10xf32>
    %cst_21 = arith.constant dense<0xFF800000> : vector<10xf32>
    %32 = vector.multi_reduction <maximumf>, %31, %cst_21 [1] : vector<10x10xf32> to vector<10xf32>
    %33 = vector.shape_cast %32 : vector<10xf32> to vector<10x1xf32>
    %34 = vector.broadcast %33 : vector<10x1xf32> to vector<10x10xf32>
    %35 = arith.subf %31, %34 : vector<10x10xf32>
    %36 = math.exp %35 : vector<10x10xf32>
    %cst_22 = arith.constant dense<0.000000e+00> : vector<10xf32>
    %37 = vector.multi_reduction <add>, %36, %cst_22 [1] : vector<10x10xf32> to vector<10xf32>
    %38 = vector.shape_cast %37 : vector<10xf32> to vector<10x1xf32>
    %39 = tpu.reciprocal %38 {approx = true} : vector<10x1xf32> -> vector<10x1xf32>
    %40 = vector.broadcast %39 : vector<10x1xf32> to vector<10x10xf32>
    %41 = arith.mulf %36, %40 : vector<10x10xf32>
    %42 = arith.truncf %41 : vector<10x10xf32> to vector<10x10xbf16>
    %cst_23 = arith.constant dense<0.000000e+00> : vector<10x16xf32>
    %43 = tpu.matmul %42, %28, %cst_23 {dimension_numbers = #tpu.dot_dimension_numbers<[1], [0], [0], [1], [0, 0, 1, 1], [], []>} : vector<10x10xbf16>, vector<10x16xbf16>, vector<10x16xf32> -> vector<10x16xf32>
    %44 = arith.truncf %43 : vector<10x16xf32> to vector<10x16xbf16>
    %45 = vector.extract_strided_slice %6 {offsets = [0, 0], sizes = [16, 64], strides = [1, 1]} : vector<64x64xbf16> to vector<16x64xbf16>
    %cst_24 = arith.constant dense<0.000000e+00> : vector<10x64xf32>
    %46 = tpu.matmul %44, %45, %cst_24 {dimension_numbers = #tpu.dot_dimension_numbers<[1], [0], [0], [1], [0, 0, 1, 1], [], []>} : vector<10x16xbf16>, vector<16x64xbf16>, vector<10x64xf32> -> vector<10x64xf32>
    %47 = arith.addf %22, %46 : vector<10x64xf32>
    %48 = vector.extract_strided_slice %16 {offsets = [0, 16], sizes = [10, 16], strides = [1, 1]} : vector<10x64xf32> to vector<10x16xf32>
    %49 = arith.truncf %48 : vector<10x16xf32> to vector<10x16xbf16>
    %50 = vector.extract_strided_slice %17 {offsets = [0, 16], sizes = [10, 16], strides = [1, 1]} : vector<10x64xf32> to vector<10x16xf32>
    %51 = arith.truncf %50 : vector<10x16xf32> to vector<10x16xbf16>
    %52 = vector.extract_strided_slice %18 {offsets = [0, 16], sizes = [10, 16], strides = [1, 1]} : vector<10x64xf32> to vector<10x16xf32>
    %53 = arith.truncf %52 : vector<10x16xf32> to vector<10x16xbf16>
    %cst_25 = arith.constant dense<0.000000e+00> : vector<10x10xf32>
    %54 = tpu.matmul %49, %51, %cst_25 {dimension_numbers = #tpu.dot_dimension_numbers<[1], [1], [0], [0], [0, 0, 1, 0], [], []>} : vector<10x16xbf16>, vector<10x16xbf16>, vector<10x10xf32> -> vector<10x10xf32>
    %cst_26 = arith.constant -1.000000e+30 : f32
    %55 = vector.broadcast %cst_26 : f32 to vector<10x10xf32>
    %56 = arith.select %21, %54, %55 : vector<10x10xi1>, vector<10x10xf32>
    %cst_27 = arith.constant dense<0xFF800000> : vector<10xf32>
    %57 = vector.multi_reduction <maximumf>, %56, %cst_27 [1] : vector<10x10xf32> to vector<10xf32>
    %58 = vector.shape_cast %57 : vector<10xf32> to vector<10x1xf32>
    %59 = vector.broadcast %58 : vector<10x1xf32> to vector<10x10xf32>
    %60 = arith.subf %56, %59 : vector<10x10xf32>
    %61 = math.exp %60 : vector<10x10xf32>
    %cst_28 = arith.constant dense<0.000000e+00> : vector<10xf32>
    %62 = vector.multi_reduction <add>, %61, %cst_28 [1] : vector<10x10xf32> to vector<10xf32>
    %63 = vector.shape_cast %62 : vector<10xf32> to vector<10x1xf32>
    %64 = tpu.reciprocal %63 {approx = true} : vector<10x1xf32> -> vector<10x1xf32>
    %65 = vector.broadcast %64 : vector<10x1xf32> to vector<10x10xf32>
    %66 = arith.mulf %61, %65 : vector<10x10xf32>
    %67 = arith.truncf %66 : vector<10x10xf32> to vector<10x10xbf16>
    %cst_29 = arith.constant dense<0.000000e+00> : vector<10x16xf32>
    %68 = tpu.matmul %67, %53, %cst_29 {dimension_numbers = #tpu.dot_dimension_numbers<[1], [0], [0], [1], [0, 0, 1, 1], [], []>} : vector<10x10xbf16>, vector<10x16xbf16>, vector<10x16xf32> -> vector<10x16xf32>
    %69 = arith.truncf %68 : vector<10x16xf32> to vector<10x16xbf16>
    %70 = vector.extract_strided_slice %6 {offsets = [16, 0], sizes = [16, 64], strides = [1, 1]} : vector<64x64xbf16> to vector<16x64xbf16>
    %cst_30 = arith.constant dense<0.000000e+00> : vector<10x64xf32>
    %71 = tpu.matmul %69, %70, %cst_30 {dimension_numbers = #tpu.dot_dimension_numbers<[1], [0], [0], [1], [0, 0, 1, 1], [], []>} : vector<10x16xbf16>, vector<16x64xbf16>, vector<10x64xf32> -> vector<10x64xf32>
    %72 = arith.addf %47, %71 : vector<10x64xf32>
    %73 = vector.extract_strided_slice %16 {offsets = [0, 32], sizes = [10, 16], strides = [1, 1]} : vector<10x64xf32> to vector<10x16xf32>
    %74 = arith.truncf %73 : vector<10x16xf32> to vector<10x16xbf16>
    %75 = vector.extract_strided_slice %17 {offsets = [0, 32], sizes = [10, 16], strides = [1, 1]} : vector<10x64xf32> to vector<10x16xf32>
    %76 = arith.truncf %75 : vector<10x16xf32> to vector<10x16xbf16>
    %77 = vector.extract_strided_slice %18 {offsets = [0, 32], sizes = [10, 16], strides = [1, 1]} : vector<10x64xf32> to vector<10x16xf32>
    %78 = arith.truncf %77 : vector<10x16xf32> to vector<10x16xbf16>
    %cst_31 = arith.constant dense<0.000000e+00> : vector<10x10xf32>
    %79 = tpu.matmul %74, %76, %cst_31 {dimension_numbers = #tpu.dot_dimension_numbers<[1], [1], [0], [0], [0, 0, 1, 0], [], []>} : vector<10x16xbf16>, vector<10x16xbf16>, vector<10x10xf32> -> vector<10x10xf32>
    %cst_32 = arith.constant -1.000000e+30 : f32
    %80 = vector.broadcast %cst_32 : f32 to vector<10x10xf32>
    %81 = arith.select %21, %79, %80 : vector<10x10xi1>, vector<10x10xf32>
    %cst_33 = arith.constant dense<0xFF800000> : vector<10xf32>
    %82 = vector.multi_reduction <maximumf>, %81, %cst_33 [1] : vector<10x10xf32> to vector<10xf32>
    %83 = vector.shape_cast %82 : vector<10xf32> to vector<10x1xf32>
    %84 = vector.broadcast %83 : vector<10x1xf32> to vector<10x10xf32>
    %85 = arith.subf %81, %84 : vector<10x10xf32>
    %86 = math.exp %85 : vector<10x10xf32>
    %cst_34 = arith.constant dense<0.000000e+00> : vector<10xf32>
    %87 = vector.multi_reduction <add>, %86, %cst_34 [1] : vector<10x10xf32> to vector<10xf32>
    %88 = vector.shape_cast %87 : vector<10xf32> to vector<10x1xf32>
    %89 = tpu.reciprocal %88 {approx = true} : vector<10x1xf32> -> vector<10x1xf32>
    %90 = vector.broadcast %89 : vector<10x1xf32> to vector<10x10xf32>
    %91 = arith.mulf %86, %90 : vector<10x10xf32>
    %92 = arith.truncf %91 : vector<10x10xf32> to vector<10x10xbf16>
    %cst_35 = arith.constant dense<0.000000e+00> : vector<10x16xf32>
    %93 = tpu.matmul %92, %78, %cst_35 {dimension_numbers = #tpu.dot_dimension_numbers<[1], [0], [0], [1], [0, 0, 1, 1], [], []>} : vector<10x10xbf16>, vector<10x16xbf16>, vector<10x16xf32> -> vector<10x16xf32>
    %94 = arith.truncf %93 : vector<10x16xf32> to vector<10x16xbf16>
    %95 = vector.extract_strided_slice %6 {offsets = [32, 0], sizes = [16, 64], strides = [1, 1]} : vector<64x64xbf16> to vector<16x64xbf16>
    %cst_36 = arith.constant dense<0.000000e+00> : vector<10x64xf32>
    %96 = tpu.matmul %94, %95, %cst_36 {dimension_numbers = #tpu.dot_dimension_numbers<[1], [0], [0], [1], [0, 0, 1, 1], [], []>} : vector<10x16xbf16>, vector<16x64xbf16>, vector<10x64xf32> -> vector<10x64xf32>
    %97 = arith.addf %72, %96 : vector<10x64xf32>
    %98 = vector.extract_strided_slice %16 {offsets = [0, 48], sizes = [10, 16], strides = [1, 1]} : vector<10x64xf32> to vector<10x16xf32>
    %99 = arith.truncf %98 : vector<10x16xf32> to vector<10x16xbf16>
    %100 = vector.extract_strided_slice %17 {offsets = [0, 48], sizes = [10, 16], strides = [1, 1]} : vector<10x64xf32> to vector<10x16xf32>
    %101 = arith.truncf %100 : vector<10x16xf32> to vector<10x16xbf16>
    %102 = vector.extract_strided_slice %18 {offsets = [0, 48], sizes = [10, 16], strides = [1, 1]} : vector<10x64xf32> to vector<10x16xf32>
    %103 = arith.truncf %102 : vector<10x16xf32> to vector<10x16xbf16>
    %cst_37 = arith.constant dense<0.000000e+00> : vector<10x10xf32>
    %104 = tpu.matmul %99, %101, %cst_37 {dimension_numbers = #tpu.dot_dimension_numbers<[1], [1], [0], [0], [0, 0, 1, 0], [], []>} : vector<10x16xbf16>, vector<10x16xbf16>, vector<10x10xf32> -> vector<10x10xf32>
    %cst_38 = arith.constant -1.000000e+30 : f32
    %105 = vector.broadcast %cst_38 : f32 to vector<10x10xf32>
    %106 = arith.select %21, %104, %105 : vector<10x10xi1>, vector<10x10xf32>
    %cst_39 = arith.constant dense<0xFF800000> : vector<10xf32>
    %107 = vector.multi_reduction <maximumf>, %106, %cst_39 [1] : vector<10x10xf32> to vector<10xf32>
    %108 = vector.shape_cast %107 : vector<10xf32> to vector<10x1xf32>
    %109 = vector.broadcast %108 : vector<10x1xf32> to vector<10x10xf32>
    %110 = arith.subf %106, %109 : vector<10x10xf32>
    %111 = math.exp %110 : vector<10x10xf32>
    %cst_40 = arith.constant dense<0.000000e+00> : vector<10xf32>
    %112 = vector.multi_reduction <add>, %111, %cst_40 [1] : vector<10x10xf32> to vector<10xf32>
    %113 = vector.shape_cast %112 : vector<10xf32> to vector<10x1xf32>
    %114 = tpu.reciprocal %113 {approx = true} : vector<10x1xf32> -> vector<10x1xf32>
    %115 = vector.broadcast %114 : vector<10x1xf32> to vector<10x10xf32>
    %116 = arith.mulf %111, %115 : vector<10x10xf32>
    %117 = arith.truncf %116 : vector<10x10xf32> to vector<10x10xbf16>
    %cst_41 = arith.constant dense<0.000000e+00> : vector<10x16xf32>
    %118 = tpu.matmul %117, %103, %cst_41 {dimension_numbers = #tpu.dot_dimension_numbers<[1], [0], [0], [1], [0, 0, 1, 1], [], []>} : vector<10x10xbf16>, vector<10x16xbf16>, vector<10x16xf32> -> vector<10x16xf32>
    %119 = arith.truncf %118 : vector<10x16xf32> to vector<10x16xbf16>
    %120 = vector.extract_strided_slice %6 {offsets = [48, 0], sizes = [16, 64], strides = [1, 1]} : vector<64x64xbf16> to vector<16x64xbf16>
    %cst_42 = arith.constant dense<0.000000e+00> : vector<10x64xf32>
    %121 = tpu.matmul %119, %120, %cst_42 {dimension_numbers = #tpu.dot_dimension_numbers<[1], [0], [0], [1], [0, 0, 1, 1], [], []>} : vector<10x16xbf16>, vector<16x64xbf16>, vector<10x64xf32> -> vector<10x64xf32>
    %122 = arith.addf %97, %121 : vector<10x64xf32>
    %123 = vector.broadcast %7 : vector<1x64xf32> to vector<10x64xf32>
    %124 = arith.addf %122, %123 : vector<10x64xf32>
    %125 = arith.addf %1, %124 : vector<10x64xf32>
    %cst_43 = arith.constant dense<0.000000e+00> : vector<10xf32>
    %126 = vector.multi_reduction <add>, %125, %cst_43 [1] : vector<10x64xf32> to vector<10xf32>
    %127 = vector.shape_cast %126 : vector<10xf32> to vector<10x1xf32>
    %cst_44 = arith.constant 6.400000e+01 : f32
    %128 = vector.broadcast %cst_44 : f32 to vector<10x1xf32>
    %129 = arith.divf %127, %128 : vector<10x1xf32>
    %130 = vector.broadcast %129 : vector<10x1xf32> to vector<10x64xf32>
    %131 = arith.subf %125, %130 : vector<10x64xf32>
    %132 = arith.mulf %131, %131 : vector<10x64xf32>
    %cst_45 = arith.constant dense<0.000000e+00> : vector<10xf32>
    %133 = vector.multi_reduction <add>, %132, %cst_45 [1] : vector<10x64xf32> to vector<10xf32>
    %134 = vector.shape_cast %133 : vector<10xf32> to vector<10x1xf32>
    %cst_46 = arith.constant 6.400000e+01 : f32
    %135 = vector.broadcast %cst_46 : f32 to vector<10x1xf32>
    %136 = arith.divf %134, %135 : vector<10x1xf32>
    %cst_47 = arith.constant 9.99999974E-6 : f32
    %137 = vector.broadcast %cst_47 : f32 to vector<10x1xf32>
    %138 = arith.addf %136, %137 : vector<10x1xf32>
    %139 = math.rsqrt %138 : vector<10x1xf32>
    %140 = vector.broadcast %139 : vector<10x1xf32> to vector<10x64xf32>
    %141 = arith.mulf %131, %140 : vector<10x64xf32>
    %142 = vector.broadcast %8 : vector<1x64xf32> to vector<10x64xf32>
    %143 = arith.mulf %141, %142 : vector<10x64xf32>
    %144 = vector.broadcast %9 : vector<1x64xf32> to vector<10x64xf32>
    %145 = arith.addf %143, %144 : vector<10x64xf32>
    %c0_48 = arith.constant 0 : index
    %c0_49 = arith.constant 0 : index
    %146 = vector.load %arg9[%c0_48, %c0_49] : memref<64x64xbf16, #tpu.memory_space<vmem>>, vector<64x64xbf16>
    %c0_50 = arith.constant 0 : index
    %c0_51 = arith.constant 0 : index
    %147 = vector.load %arg10[%c0_50, %c0_51] : memref<1x64xf32, #tpu.memory_space<vmem>>, vector<1x64xf32>
    %c0_52 = arith.constant 0 : index
    %c0_53 = arith.constant 0 : index
    %148 = vector.load %arg11[%c0_52, %c0_53] : memref<64x128xbf16, #tpu.memory_space<vmem>>, vector<64x128xbf16>
    %c0_54 = arith.constant 0 : index
    %c0_55 = arith.constant 0 : index
    %149 = vector.load %arg12[%c0_54, %c0_55] : memref<1x128xf32, #tpu.memory_space<vmem>>, vector<1x128xf32>
    %c0_56 = arith.constant 0 : index
    %c0_57 = arith.constant 0 : index
    %150 = vector.load %arg13[%c0_56, %c0_57] : memref<64x64xbf16, #tpu.memory_space<vmem>>, vector<64x64xbf16>
    %c0_58 = arith.constant 0 : index
    %c0_59 = arith.constant 0 : index
    %151 = vector.load %arg14[%c0_58, %c0_59] : memref<1x64xf32, #tpu.memory_space<vmem>>, vector<1x64xf32>
    %c0_60 = arith.constant 0 : index
    %c0_61 = arith.constant 0 : index
    %152 = vector.load %arg15[%c0_60, %c0_61] : memref<1x64xf32, #tpu.memory_space<vmem>>, vector<1x64xf32>
    %c0_62 = arith.constant 0 : index
    %c0_63 = arith.constant 0 : index
    %153 = vector.load %arg16[%c0_62, %c0_63] : memref<1x64xf32, #tpu.memory_space<vmem>>, vector<1x64xf32>
    %154 = arith.truncf %145 : vector<10x64xf32> to vector<10x64xbf16>
    %cst_64 = arith.constant dense<0.000000e+00> : vector<10x64xf32>
    %155 = tpu.matmul %154, %146, %cst_64 {dimension_numbers = #tpu.dot_dimension_numbers<[1], [0], [0], [1], [0, 0, 1, 1], [], []>} : vector<10x64xbf16>, vector<64x64xbf16>, vector<10x64xf32> -> vector<10x64xf32>
    %156 = vector.broadcast %147 : vector<1x64xf32> to vector<10x64xf32>
    %157 = arith.addf %155, %156 : vector<10x64xf32>
    %cst_65 = arith.constant 2.500000e-01 : f32
    %158 = vector.broadcast %cst_65 : f32 to vector<10x64xf32>
    %159 = arith.mulf %157, %158 : vector<10x64xf32>
    %160 = arith.truncf %3 : vector<10x64xf32> to vector<10x64xbf16>
    %cst_66 = arith.constant dense<0.000000e+00> : vector<10x128xf32>
    %161 = tpu.matmul %160, %148, %cst_66 {dimension_numbers = #tpu.dot_dimension_numbers<[1], [0], [0], [1], [0, 0, 1, 1], [], []>} : vector<10x64xbf16>, vector<64x128xbf16>, vector<10x128xf32> -> vector<10x128xf32>
    %162 = vector.broadcast %149 : vector<1x128xf32> to vector<10x128xf32>
    %163 = arith.addf %161, %162 : vector<10x128xf32>
    %164 = vector.extract_strided_slice %163 {offsets = [0, 0], sizes = [10, 64], strides = [1, 1]} : vector<10x128xf32> to vector<10x64xf32>
    %165 = vector.extract_strided_slice %163 {offsets = [0, 64], sizes = [10, 64], strides = [1, 1]} : vector<10x128xf32> to vector<10x64xf32>
    %cst_67 = arith.constant 0.000000e+00 : f32
    %166 = vector.broadcast %cst_67 : f32 to vector<10x64xf32>
    %167 = vector.extract_strided_slice %159 {offsets = [0, 0], sizes = [10, 16], strides = [1, 1]} : vector<10x64xf32> to vector<10x16xf32>
    %168 = arith.truncf %167 : vector<10x16xf32> to vector<10x16xbf16>
    %169 = vector.extract_strided_slice %164 {offsets = [0, 0], sizes = [10, 16], strides = [1, 1]} : vector<10x64xf32> to vector<10x16xf32>
    %170 = arith.truncf %169 : vector<10x16xf32> to vector<10x16xbf16>
    %171 = vector.extract_strided_slice %165 {offsets = [0, 0], sizes = [10, 16], strides = [1, 1]} : vector<10x64xf32> to vector<10x16xf32>
    %172 = arith.truncf %171 : vector<10x16xf32> to vector<10x16xbf16>
    %cst_68 = arith.constant dense<0.000000e+00> : vector<10x10xf32>
    %173 = tpu.matmul %168, %170, %cst_68 {dimension_numbers = #tpu.dot_dimension_numbers<[1], [1], [0], [0], [0, 0, 1, 0], [], []>} : vector<10x16xbf16>, vector<10x16xbf16>, vector<10x10xf32> -> vector<10x10xf32>
    %cst_69 = arith.constant dense<0xFF800000> : vector<10xf32>
    %174 = vector.multi_reduction <maximumf>, %173, %cst_69 [1] : vector<10x10xf32> to vector<10xf32>
    %175 = vector.shape_cast %174 : vector<10xf32> to vector<10x1xf32>
    %176 = vector.broadcast %175 : vector<10x1xf32> to vector<10x10xf32>
    %177 = arith.subf %173, %176 : vector<10x10xf32>
    %178 = math.exp %177 : vector<10x10xf32>
    %cst_70 = arith.constant dense<0.000000e+00> : vector<10xf32>
    %179 = vector.multi_reduction <add>, %178, %cst_70 [1] : vector<10x10xf32> to vector<10xf32>
    %180 = vector.shape_cast %179 : vector<10xf32> to vector<10x1xf32>
    %181 = tpu.reciprocal %180 {approx = true} : vector<10x1xf32> -> vector<10x1xf32>
    %182 = vector.broadcast %181 : vector<10x1xf32> to vector<10x10xf32>
    %183 = arith.mulf %178, %182 : vector<10x10xf32>
    %184 = arith.truncf %183 : vector<10x10xf32> to vector<10x10xbf16>
    %cst_71 = arith.constant dense<0.000000e+00> : vector<10x16xf32>
    %185 = tpu.matmul %184, %172, %cst_71 {dimension_numbers = #tpu.dot_dimension_numbers<[1], [0], [0], [1], [0, 0, 1, 1], [], []>} : vector<10x10xbf16>, vector<10x16xbf16>, vector<10x16xf32> -> vector<10x16xf32>
    %186 = arith.truncf %185 : vector<10x16xf32> to vector<10x16xbf16>
    %187 = vector.extract_strided_slice %150 {offsets = [0, 0], sizes = [16, 64], strides = [1, 1]} : vector<64x64xbf16> to vector<16x64xbf16>
    %cst_72 = arith.constant dense<0.000000e+00> : vector<10x64xf32>
    %188 = tpu.matmul %186, %187, %cst_72 {dimension_numbers = #tpu.dot_dimension_numbers<[1], [0], [0], [1], [0, 0, 1, 1], [], []>} : vector<10x16xbf16>, vector<16x64xbf16>, vector<10x64xf32> -> vector<10x64xf32>
    %189 = arith.addf %166, %188 : vector<10x64xf32>
    %190 = vector.extract_strided_slice %159 {offsets = [0, 16], sizes = [10, 16], strides = [1, 1]} : vector<10x64xf32> to vector<10x16xf32>
    %191 = arith.truncf %190 : vector<10x16xf32> to vector<10x16xbf16>
    %192 = vector.extract_strided_slice %164 {offsets = [0, 16], sizes = [10, 16], strides = [1, 1]} : vector<10x64xf32> to vector<10x16xf32>
    %193 = arith.truncf %192 : vector<10x16xf32> to vector<10x16xbf16>
    %194 = vector.extract_strided_slice %165 {offsets = [0, 16], sizes = [10, 16], strides = [1, 1]} : vector<10x64xf32> to vector<10x16xf32>
    %195 = arith.truncf %194 : vector<10x16xf32> to vector<10x16xbf16>
    %cst_73 = arith.constant dense<0.000000e+00> : vector<10x10xf32>
    %196 = tpu.matmul %191, %193, %cst_73 {dimension_numbers = #tpu.dot_dimension_numbers<[1], [1], [0], [0], [0, 0, 1, 0], [], []>} : vector<10x16xbf16>, vector<10x16xbf16>, vector<10x10xf32> -> vector<10x10xf32>
    %cst_74 = arith.constant dense<0xFF800000> : vector<10xf32>
    %197 = vector.multi_reduction <maximumf>, %196, %cst_74 [1] : vector<10x10xf32> to vector<10xf32>
    %198 = vector.shape_cast %197 : vector<10xf32> to vector<10x1xf32>
    %199 = vector.broadcast %198 : vector<10x1xf32> to vector<10x10xf32>
    %200 = arith.subf %196, %199 : vector<10x10xf32>
    %201 = math.exp %200 : vector<10x10xf32>
    %cst_75 = arith.constant dense<0.000000e+00> : vector<10xf32>
    %202 = vector.multi_reduction <add>, %201, %cst_75 [1] : vector<10x10xf32> to vector<10xf32>
    %203 = vector.shape_cast %202 : vector<10xf32> to vector<10x1xf32>
    %204 = tpu.reciprocal %203 {approx = true} : vector<10x1xf32> -> vector<10x1xf32>
    %205 = vector.broadcast %204 : vector<10x1xf32> to vector<10x10xf32>
    %206 = arith.mulf %201, %205 : vector<10x10xf32>
    %207 = arith.truncf %206 : vector<10x10xf32> to vector<10x10xbf16>
    %cst_76 = arith.constant dense<0.000000e+00> : vector<10x16xf32>
    %208 = tpu.matmul %207, %195, %cst_76 {dimension_numbers = #tpu.dot_dimension_numbers<[1], [0], [0], [1], [0, 0, 1, 1], [], []>} : vector<10x10xbf16>, vector<10x16xbf16>, vector<10x16xf32> -> vector<10x16xf32>
    %209 = arith.truncf %208 : vector<10x16xf32> to vector<10x16xbf16>
    %210 = vector.extract_strided_slice %150 {offsets = [16, 0], sizes = [16, 64], strides = [1, 1]} : vector<64x64xbf16> to vector<16x64xbf16>
    %cst_77 = arith.constant dense<0.000000e+00> : vector<10x64xf32>
    %211 = tpu.matmul %209, %210, %cst_77 {dimension_numbers = #tpu.dot_dimension_numbers<[1], [0], [0], [1], [0, 0, 1, 1], [], []>} : vector<10x16xbf16>, vector<16x64xbf16>, vector<10x64xf32> -> vector<10x64xf32>
    %212 = arith.addf %189, %211 : vector<10x64xf32>
    %213 = vector.extract_strided_slice %159 {offsets = [0, 32], sizes = [10, 16], strides = [1, 1]} : vector<10x64xf32> to vector<10x16xf32>
    %214 = arith.truncf %213 : vector<10x16xf32> to vector<10x16xbf16>
    %215 = vector.extract_strided_slice %164 {offsets = [0, 32], sizes = [10, 16], strides = [1, 1]} : vector<10x64xf32> to vector<10x16xf32>
    %216 = arith.truncf %215 : vector<10x16xf32> to vector<10x16xbf16>
    %217 = vector.extract_strided_slice %165 {offsets = [0, 32], sizes = [10, 16], strides = [1, 1]} : vector<10x64xf32> to vector<10x16xf32>
    %218 = arith.truncf %217 : vector<10x16xf32> to vector<10x16xbf16>
    %cst_78 = arith.constant dense<0.000000e+00> : vector<10x10xf32>
    %219 = tpu.matmul %214, %216, %cst_78 {dimension_numbers = #tpu.dot_dimension_numbers<[1], [1], [0], [0], [0, 0, 1, 0], [], []>} : vector<10x16xbf16>, vector<10x16xbf16>, vector<10x10xf32> -> vector<10x10xf32>
    %cst_79 = arith.constant dense<0xFF800000> : vector<10xf32>
    %220 = vector.multi_reduction <maximumf>, %219, %cst_79 [1] : vector<10x10xf32> to vector<10xf32>
    %221 = vector.shape_cast %220 : vector<10xf32> to vector<10x1xf32>
    %222 = vector.broadcast %221 : vector<10x1xf32> to vector<10x10xf32>
    %223 = arith.subf %219, %222 : vector<10x10xf32>
    %224 = math.exp %223 : vector<10x10xf32>
    %cst_80 = arith.constant dense<0.000000e+00> : vector<10xf32>
    %225 = vector.multi_reduction <add>, %224, %cst_80 [1] : vector<10x10xf32> to vector<10xf32>
    %226 = vector.shape_cast %225 : vector<10xf32> to vector<10x1xf32>
    %227 = tpu.reciprocal %226 {approx = true} : vector<10x1xf32> -> vector<10x1xf32>
    %228 = vector.broadcast %227 : vector<10x1xf32> to vector<10x10xf32>
    %229 = arith.mulf %224, %228 : vector<10x10xf32>
    %230 = arith.truncf %229 : vector<10x10xf32> to vector<10x10xbf16>
    %cst_81 = arith.constant dense<0.000000e+00> : vector<10x16xf32>
    %231 = tpu.matmul %230, %218, %cst_81 {dimension_numbers = #tpu.dot_dimension_numbers<[1], [0], [0], [1], [0, 0, 1, 1], [], []>} : vector<10x10xbf16>, vector<10x16xbf16>, vector<10x16xf32> -> vector<10x16xf32>
    %232 = arith.truncf %231 : vector<10x16xf32> to vector<10x16xbf16>
    %233 = vector.extract_strided_slice %150 {offsets = [32, 0], sizes = [16, 64], strides = [1, 1]} : vector<64x64xbf16> to vector<16x64xbf16>
    %cst_82 = arith.constant dense<0.000000e+00> : vector<10x64xf32>
    %234 = tpu.matmul %232, %233, %cst_82 {dimension_numbers = #tpu.dot_dimension_numbers<[1], [0], [0], [1], [0, 0, 1, 1], [], []>} : vector<10x16xbf16>, vector<16x64xbf16>, vector<10x64xf32> -> vector<10x64xf32>
    %235 = arith.addf %212, %234 : vector<10x64xf32>
    %236 = vector.extract_strided_slice %159 {offsets = [0, 48], sizes = [10, 16], strides = [1, 1]} : vector<10x64xf32> to vector<10x16xf32>
    %237 = arith.truncf %236 : vector<10x16xf32> to vector<10x16xbf16>
    %238 = vector.extract_strided_slice %164 {offsets = [0, 48], sizes = [10, 16], strides = [1, 1]} : vector<10x64xf32> to vector<10x16xf32>
    %239 = arith.truncf %238 : vector<10x16xf32> to vector<10x16xbf16>
    %240 = vector.extract_strided_slice %165 {offsets = [0, 48], sizes = [10, 16], strides = [1, 1]} : vector<10x64xf32> to vector<10x16xf32>
    %241 = arith.truncf %240 : vector<10x16xf32> to vector<10x16xbf16>
    %cst_83 = arith.constant dense<0.000000e+00> : vector<10x10xf32>
    %242 = tpu.matmul %237, %239, %cst_83 {dimension_numbers = #tpu.dot_dimension_numbers<[1], [1], [0], [0], [0, 0, 1, 0], [], []>} : vector<10x16xbf16>, vector<10x16xbf16>, vector<10x10xf32> -> vector<10x10xf32>
    %cst_84 = arith.constant dense<0xFF800000> : vector<10xf32>
    %243 = vector.multi_reduction <maximumf>, %242, %cst_84 [1] : vector<10x10xf32> to vector<10xf32>
    %244 = vector.shape_cast %243 : vector<10xf32> to vector<10x1xf32>
    %245 = vector.broadcast %244 : vector<10x1xf32> to vector<10x10xf32>
    %246 = arith.subf %242, %245 : vector<10x10xf32>
    %247 = math.exp %246 : vector<10x10xf32>
    %cst_85 = arith.constant dense<0.000000e+00> : vector<10xf32>
    %248 = vector.multi_reduction <add>, %247, %cst_85 [1] : vector<10x10xf32> to vector<10xf32>
    %249 = vector.shape_cast %248 : vector<10xf32> to vector<10x1xf32>
    %250 = tpu.reciprocal %249 {approx = true} : vector<10x1xf32> -> vector<10x1xf32>
    %251 = vector.broadcast %250 : vector<10x1xf32> to vector<10x10xf32>
    %252 = arith.mulf %247, %251 : vector<10x10xf32>
    %253 = arith.truncf %252 : vector<10x10xf32> to vector<10x10xbf16>
    %cst_86 = arith.constant dense<0.000000e+00> : vector<10x16xf32>
    %254 = tpu.matmul %253, %241, %cst_86 {dimension_numbers = #tpu.dot_dimension_numbers<[1], [0], [0], [1], [0, 0, 1, 1], [], []>} : vector<10x10xbf16>, vector<10x16xbf16>, vector<10x16xf32> -> vector<10x16xf32>
    %255 = arith.truncf %254 : vector<10x16xf32> to vector<10x16xbf16>
    %256 = vector.extract_strided_slice %150 {offsets = [48, 0], sizes = [16, 64], strides = [1, 1]} : vector<64x64xbf16> to vector<16x64xbf16>
    %cst_87 = arith.constant dense<0.000000e+00> : vector<10x64xf32>
    %257 = tpu.matmul %255, %256, %cst_87 {dimension_numbers = #tpu.dot_dimension_numbers<[1], [0], [0], [1], [0, 0, 1, 1], [], []>} : vector<10x16xbf16>, vector<16x64xbf16>, vector<10x64xf32> -> vector<10x64xf32>
    %258 = arith.addf %235, %257 : vector<10x64xf32>
    %259 = vector.broadcast %151 : vector<1x64xf32> to vector<10x64xf32>
    %260 = arith.addf %258, %259 : vector<10x64xf32>
    %261 = arith.addf %145, %260 : vector<10x64xf32>
    %cst_88 = arith.constant dense<0.000000e+00> : vector<10xf32>
    %262 = vector.multi_reduction <add>, %261, %cst_88 [1] : vector<10x64xf32> to vector<10xf32>
    %263 = vector.shape_cast %262 : vector<10xf32> to vector<10x1xf32>
    %cst_89 = arith.constant 6.400000e+01 : f32
    %264 = vector.broadcast %cst_89 : f32 to vector<10x1xf32>
    %265 = arith.divf %263, %264 : vector<10x1xf32>
    %266 = vector.broadcast %265 : vector<10x1xf32> to vector<10x64xf32>
    %267 = arith.subf %261, %266 : vector<10x64xf32>
    %268 = arith.mulf %267, %267 : vector<10x64xf32>
    %cst_90 = arith.constant dense<0.000000e+00> : vector<10xf32>
    %269 = vector.multi_reduction <add>, %268, %cst_90 [1] : vector<10x64xf32> to vector<10xf32>
    %270 = vector.shape_cast %269 : vector<10xf32> to vector<10x1xf32>
    %cst_91 = arith.constant 6.400000e+01 : f32
    %271 = vector.broadcast %cst_91 : f32 to vector<10x1xf32>
    %272 = arith.divf %270, %271 : vector<10x1xf32>
    %cst_92 = arith.constant 9.99999974E-6 : f32
    %273 = vector.broadcast %cst_92 : f32 to vector<10x1xf32>
    %274 = arith.addf %272, %273 : vector<10x1xf32>
    %275 = math.rsqrt %274 : vector<10x1xf32>
    %276 = vector.broadcast %275 : vector<10x1xf32> to vector<10x64xf32>
    %277 = arith.mulf %267, %276 : vector<10x64xf32>
    %278 = vector.broadcast %152 : vector<1x64xf32> to vector<10x64xf32>
    %279 = arith.mulf %277, %278 : vector<10x64xf32>
    %280 = vector.broadcast %153 : vector<1x64xf32> to vector<10x64xf32>
    %281 = arith.addf %279, %280 : vector<10x64xf32>
    %c0_93 = arith.constant 0 : index
    %c0_94 = arith.constant 0 : index
    %282 = vector.load %arg17[%c0_93, %c0_94] : memref<64x32xbf16, #tpu.memory_space<vmem>>, vector<64x32xbf16>
    %c0_95 = arith.constant 0 : index
    %c0_96 = arith.constant 0 : index
    %283 = vector.load %arg18[%c0_95, %c0_96] : memref<1x32xf32, #tpu.memory_space<vmem>>, vector<1x32xf32>
    %c0_97 = arith.constant 0 : index
    %c0_98 = arith.constant 0 : index
    %284 = vector.load %arg19[%c0_97, %c0_98] : memref<32x64xbf16, #tpu.memory_space<vmem>>, vector<32x64xbf16>
    %c0_99 = arith.constant 0 : index
    %c0_100 = arith.constant 0 : index
    %285 = vector.load %arg20[%c0_99, %c0_100] : memref<1x64xf32, #tpu.memory_space<vmem>>, vector<1x64xf32>
    %c0_101 = arith.constant 0 : index
    %c0_102 = arith.constant 0 : index
    %286 = vector.load %arg21[%c0_101, %c0_102] : memref<1x64xf32, #tpu.memory_space<vmem>>, vector<1x64xf32>
    %c0_103 = arith.constant 0 : index
    %c0_104 = arith.constant 0 : index
    %287 = vector.load %arg22[%c0_103, %c0_104] : memref<1x64xf32, #tpu.memory_space<vmem>>, vector<1x64xf32>
    %288 = arith.truncf %281 : vector<10x64xf32> to vector<10x64xbf16>
    %cst_105 = arith.constant dense<0.000000e+00> : vector<10x32xf32>
    %289 = tpu.matmul %288, %282, %cst_105 {dimension_numbers = #tpu.dot_dimension_numbers<[1], [0], [0], [1], [0, 0, 1, 1], [], []>} : vector<10x64xbf16>, vector<64x32xbf16>, vector<10x32xf32> -> vector<10x32xf32>
    %290 = vector.broadcast %283 : vector<1x32xf32> to vector<10x32xf32>
    %291 = arith.addf %289, %290 : vector<10x32xf32>
    %cst_106 = arith.constant 0.000000e+00 : f32
    %292 = vector.broadcast %cst_106 : f32 to vector<10x32xf32>
    %293 = arith.maximumf %291, %292 : vector<10x32xf32>
    %294 = arith.truncf %293 : vector<10x32xf32> to vector<10x32xbf16>
    %cst_107 = arith.constant dense<0.000000e+00> : vector<10x64xf32>
    %295 = tpu.matmul %294, %284, %cst_107 {dimension_numbers = #tpu.dot_dimension_numbers<[1], [0], [0], [1], [0, 0, 1, 1], [], []>} : vector<10x32xbf16>, vector<32x64xbf16>, vector<10x64xf32> -> vector<10x64xf32>
    %296 = vector.broadcast %285 : vector<1x64xf32> to vector<10x64xf32>
    %297 = arith.addf %295, %296 : vector<10x64xf32>
    %298 = arith.addf %281, %297 : vector<10x64xf32>
    %cst_108 = arith.constant dense<0.000000e+00> : vector<10xf32>
    %299 = vector.multi_reduction <add>, %298, %cst_108 [1] : vector<10x64xf32> to vector<10xf32>
    %300 = vector.shape_cast %299 : vector<10xf32> to vector<10x1xf32>
    %cst_109 = arith.constant 6.400000e+01 : f32
    %301 = vector.broadcast %cst_109 : f32 to vector<10x1xf32>
    %302 = arith.divf %300, %301 : vector<10x1xf32>
    %303 = vector.broadcast %302 : vector<10x1xf32> to vector<10x64xf32>
    %304 = arith.subf %298, %303 : vector<10x64xf32>
    %305 = arith.mulf %304, %304 : vector<10x64xf32>
    %cst_110 = arith.constant dense<0.000000e+00> : vector<10xf32>
    %306 = vector.multi_reduction <add>, %305, %cst_110 [1] : vector<10x64xf32> to vector<10xf32>
    %307 = vector.shape_cast %306 : vector<10xf32> to vector<10x1xf32>
    %cst_111 = arith.constant 6.400000e+01 : f32
    %308 = vector.broadcast %cst_111 : f32 to vector<10x1xf32>
    %309 = arith.divf %307, %308 : vector<10x1xf32>
    %cst_112 = arith.constant 9.99999974E-6 : f32
    %310 = vector.broadcast %cst_112 : f32 to vector<10x1xf32>
    %311 = arith.addf %309, %310 : vector<10x1xf32>
    %312 = math.rsqrt %311 : vector<10x1xf32>
    %313 = vector.broadcast %312 : vector<10x1xf32> to vector<10x64xf32>
    %314 = arith.mulf %304, %313 : vector<10x64xf32>
    %315 = vector.broadcast %286 : vector<1x64xf32> to vector<10x64xf32>
    %316 = arith.mulf %314, %315 : vector<10x64xf32>
    %317 = vector.broadcast %287 : vector<1x64xf32> to vector<10x64xf32>
    %318 = arith.addf %316, %317 : vector<10x64xf32>
    %c0_113 = arith.constant 0 : index
    %c0_114 = arith.constant 0 : index
    %319 = vector.load %arg23[%c0_113, %c0_114] : memref<1x64xf32, #tpu.memory_space<vmem>>, vector<1x64xf32>
    %c0_115 = arith.constant 0 : index
    %c0_116 = arith.constant 0 : index
    %320 = vector.load %arg24[%c0_115, %c0_116] : memref<1x64xf32, #tpu.memory_space<vmem>>, vector<1x64xf32>
    %cst_117 = arith.constant dense<0.000000e+00> : vector<10xf32>
    %321 = vector.multi_reduction <add>, %318, %cst_117 [1] : vector<10x64xf32> to vector<10xf32>
    %322 = vector.shape_cast %321 : vector<10xf32> to vector<10x1xf32>
    %cst_118 = arith.constant 6.400000e+01 : f32
    %323 = vector.broadcast %cst_118 : f32 to vector<10x1xf32>
    %324 = arith.divf %322, %323 : vector<10x1xf32>
    %325 = vector.broadcast %324 : vector<10x1xf32> to vector<10x64xf32>
    %326 = arith.subf %318, %325 : vector<10x64xf32>
    %327 = arith.mulf %326, %326 : vector<10x64xf32>
    %cst_119 = arith.constant dense<0.000000e+00> : vector<10xf32>
    %328 = vector.multi_reduction <add>, %327, %cst_119 [1] : vector<10x64xf32> to vector<10xf32>
    %329 = vector.shape_cast %328 : vector<10xf32> to vector<10x1xf32>
    %cst_120 = arith.constant 6.400000e+01 : f32
    %330 = vector.broadcast %cst_120 : f32 to vector<10x1xf32>
    %331 = arith.divf %329, %330 : vector<10x1xf32>
    %cst_121 = arith.constant 9.99999974E-6 : f32
    %332 = vector.broadcast %cst_121 : f32 to vector<10x1xf32>
    %333 = arith.addf %331, %332 : vector<10x1xf32>
    %334 = math.rsqrt %333 : vector<10x1xf32>
    %335 = vector.broadcast %334 : vector<10x1xf32> to vector<10x64xf32>
    %336 = arith.mulf %326, %335 : vector<10x64xf32>
    %337 = vector.broadcast %319 : vector<1x64xf32> to vector<10x64xf32>
    %338 = arith.mulf %336, %337 : vector<10x64xf32>
    %339 = vector.broadcast %320 : vector<1x64xf32> to vector<10x64xf32>
    %340 = arith.addf %338, %339 : vector<10x64xf32>
    %341 = arith.truncf %340 : vector<10x64xf32> to vector<10x64xbf16>
    %c0_122 = arith.constant 0 : index
    %c0_123 = arith.constant 0 : index
    %342 = vector.load %arg25[%c0_122, %c0_123] : memref<64x64xbf16, #tpu.memory_space<vmem>>, vector<64x64xbf16>
    %cst_124 = arith.constant dense<0.000000e+00> : vector<10x64xf32>
    %343 = tpu.matmul %341, %342, %cst_124 {dimension_numbers = #tpu.dot_dimension_numbers<[1], [0], [0], [1], [0, 0, 1, 1], [], []>} : vector<10x64xbf16>, vector<64x64xbf16>, vector<10x64xf32> -> vector<10x64xf32>
    %c0_125 = arith.constant 0 : index
    %c0_126 = arith.constant 0 : index
    %344 = vector.load %arg26[%c0_125, %c0_126] : memref<1x64xf32, #tpu.memory_space<vmem>>, vector<1x64xf32>
    %345 = vector.broadcast %344 : vector<1x64xf32> to vector<10x64xf32>
    %346 = arith.addf %343, %345 : vector<10x64xf32>
    %c0_127 = arith.constant 0 : index
    %c0_128 = arith.constant 0 : index
    %c0_129 = arith.constant 0 : index
    %347 = vector.load %arg27[%c0_127, %c0_128, %c0_129] : memref<1x10x64xf32, #tpu.memory_space<vmem>>, vector<1x10x64xf32>
    %348 = vector.shape_cast %347 : vector<1x10x64xf32> to vector<10x64xf32>
    %349 = vector.shape_cast %346 : vector<10x64xf32> to vector<1x10x64xf32>
    tpu.vector_store %arg27[%c0_127, %c0_128, %c0_129], %349 {strides = array<i32>} : memref<1x10x64xf32, #tpu.memory_space<vmem>>, vector<1x10x64xf32>,
    return
  }
  func.func @transform_0(%arg0: i32) -> (i32, i32, i32) {
    %c0_i32 = arith.constant 0 : i32
    %c0_i32_0 = arith.constant 0 : i32
    %c0_i32_1 = arith.constant 0 : i32
    return %arg0, %c0_i32, %c0_i32_0 : i32, i32, i32
  }
  func.func @transform_1(%arg0: i32) -> (i32, i32, i32) {
    %c0_i32 = arith.constant 0 : i32
    %c0_i32_0 = arith.constant 0 : i32
    %c0_i32_1 = arith.constant 0 : i32
    return %arg0, %c0_i32, %c0_i32_0 : i32, i32, i32
  }
  func.func @transform_2(%arg0: i32) -> (i32, i32) {
    %c0_i32 = arith.constant 0 : i32
    %c0_i32_0 = arith.constant 0 : i32
    %c0_i32_1 = arith.constant 0 : i32
    return %c0_i32, %c0_i32_0 : i32, i32
  }
  func.func @transform_3(%arg0: i32) -> (i32, i32) {
    %c0_i32 = arith.constant 0 : i32
    %c0_i32_0 = arith.constant 0 : i32
    %c0_i32_1 = arith.constant 0 : i32
    return %c0_i32, %c0_i32_0 : i32, i32
  }
  func.func @transform_4(%arg0: i32) -> (i32, i32) {
    %c0_i32 = arith.constant 0 : i32
    %c0_i32_0 = arith.constant 0 : i32
    %c0_i32_1 = arith.constant 0 : i32
    return %c0_i32, %c0_i32_0 : i32, i32
  }
  func.func @transform_5(%arg0: i32) -> (i32, i32) {
    %c0_i32 = arith.constant 0 : i32
    %c0_i32_0 = arith.constant 0 : i32
    %c0_i32_1 = arith.constant 0 : i32
    return %c0_i32, %c0_i32_0 : i32, i32
  }
  func.func @transform_6(%arg0: i32) -> (i32, i32) {
    %c0_i32 = arith.constant 0 : i32
    %c0_i32_0 = arith.constant 0 : i32
    %c0_i32_1 = arith.constant 0 : i32
    return %c0_i32, %c0_i32_0 : i32, i32
  }
  func.func @transform_7(%arg0: i32) -> (i32, i32) {
    %c0_i32 = arith.constant 0 : i32
    %c0_i32_0 = arith.constant 0 : i32
    %c0_i32_1 = arith.constant 0 : i32
    return %c0_i32, %c0_i32_0 : i32, i32
  }
  func.func @transform_8(%arg0: i32) -> (i32, i32) {
    %c0_i32 = arith.constant 0 : i32
    %c0_i32_0 = arith.constant 0 : i32
    %c0_i32_1 = arith.constant 0 : i32
    return %c0_i32, %c0_i32_0 : i32, i32
  }
  func.func @transform_9(%arg0: i32) -> (i32, i32) {
    %c0_i32 = arith.constant 0 : i32
    %c0_i32_0 = arith.constant 0 : i32
    %c0_i32_1 = arith.constant 0 : i32
    return %c0_i32, %c0_i32_0 : i32, i32
  }
  func.func @transform_10(%arg0: i32) -> (i32, i32) {
    %c0_i32 = arith.constant 0 : i32
    %c0_i32_0 = arith.constant 0 : i32
    %c0_i32_1 = arith.constant 0 : i32
    return %c0_i32, %c0_i32_0 : i32, i32
  }
  func.func @transform_11(%arg0: i32) -> (i32, i32) {
    %c0_i32 = arith.constant 0 : i32
    %c0_i32_0 = arith.constant 0 : i32
    %c0_i32_1 = arith.constant 0 : i32
    return %c0_i32, %c0_i32_0 : i32, i32
  }
  func.func @transform_12(%arg0: i32) -> (i32, i32) {
    %c0_i32 = arith.constant 0 : i32
    %c0_i32_0 = arith.constant 0 : i32
    %c0_i32_1 = arith.constant 0 : i32
    return %c0_i32, %c0_i32_0 : i32, i32
  }
  func.func @transform_13(%arg0: i32) -> (i32, i32) {
    %c0_i32 = arith.constant 0 : i32
    %c0_i32_0 = arith.constant 0 : i32
    %c0_i32_1 = arith.constant 0 : i32
    return %c0_i32, %c0_i32_0 : i32, i32
  }
  func.func @transform_14(%arg0: i32) -> (i32, i32) {
    %c0_i32 = arith.constant 0 : i32
    %c0_i32_0 = arith.constant 0 : i32
    %c0_i32_1 = arith.constant 0 : i32
    return %c0_i32, %c0_i32_0 : i32, i32
  }
  func.func @transform_15(%arg0: i32) -> (i32, i32) {
    %c0_i32 = arith.constant 0 : i32
    %c0_i32_0 = arith.constant 0 : i32
    %c0_i32_1 = arith.constant 0 : i32
    return %c0_i32, %c0_i32_0 : i32, i32
  }
  func.func @transform_16(%arg0: i32) -> (i32, i32) {
    %c0_i32 = arith.constant 0 : i32
    %c0_i32_0 = arith.constant 0 : i32
    %c0_i32_1 = arith.constant 0 : i32
    return %c0_i32, %c0_i32_0 : i32, i32
  }
  func.func @transform_17(%arg0: i32) -> (i32, i32) {
    %c0_i32 = arith.constant 0 : i32
    %c0_i32_0 = arith.constant 0 : i32
    %c0_i32_1 = arith.constant 0 : i32
    return %c0_i32, %c0_i32_0 : i32, i32
  }
  func.func @transform_18(%arg0: i32) -> (i32, i32) {
    %c0_i32 = arith.constant 0 : i32
    %c0_i32_0 = arith.constant 0 : i32
    %c0_i32_1 = arith.constant 0 : i32
    return %c0_i32, %c0_i32_0 : i32, i32
  }
  func.func @transform_19(%arg0: i32) -> (i32, i32) {
    %c0_i32 = arith.constant 0 : i32
    %c0_i32_0 = arith.constant 0 : i32
    %c0_i32_1 = arith.constant 0 : i32
    return %c0_i32, %c0_i32_0 : i32, i32
  }
  func.func @transform_20(%arg0: i32) -> (i32, i32) {
    %c0_i32 = arith.constant 0 : i32
    %c0_i32_0 = arith.constant 0 : i32
    %c0_i32_1 = arith.constant 0 : i32
    return %c0_i32, %c0_i32_0 : i32, i32
  }
  func.func @transform_21(%arg0: i32) -> (i32, i32) {
    %c0_i32 = arith.constant 0 : i32
    %c0_i32_0 = arith.constant 0 : i32
    %c0_i32_1 = arith.constant 0 : i32
    return %c0_i32, %c0_i32_0 : i32, i32
  }
  func.func @transform_22(%arg0: i32) -> (i32, i32) {
    %c0_i32 = arith.constant 0 : i32
    %c0_i32_0 = arith.constant 0 : i32
    %c0_i32_1 = arith.constant 0 : i32
    return %c0_i32, %c0_i32_0 : i32, i32
  }
  func.func @transform_23(%arg0: i32) -> (i32, i32) {
    %c0_i32 = arith.constant 0 : i32
    %c0_i32_0 = arith.constant 0 : i32
    %c0_i32_1 = arith.constant 0 : i32
    return %c0_i32, %c0_i32_0 : i32, i32
  }
  func.func @transform_24(%arg0: i32) -> (i32, i32) {
    %c0_i32 = arith.constant 0 : i32
    %c0_i32_0 = arith.constant 0 : i32
    %c0_i32_1 = arith.constant 0 : i32
    return %c0_i32, %c0_i32_0 : i32, i32
  }
  func.func @transform_25(%arg0: i32) -> (i32, i32) {
    %c0_i32 = arith.constant 0 : i32
    %c0_i32_0 = arith.constant 0 : i32
    %c0_i32_1 = arith.constant 0 : i32
    return %c0_i32, %c0_i32_0 : i32, i32
  }
  func.func @transform_26(%arg0: i32) -> (i32, i32, i32) {
    %c0_i32 = arith.constant 0 : i32
    %c0_i32_0 = arith.constant 0 : i32
    %c0_i32_1 = arith.constant 0 : i32
    return %arg0, %c0_i32, %c0_i32_0 : i32, i32, i32
  }
}

</mosaic_0001>

<llo_original>
// kernel: _lambda_.2
$region0: #{_lambda_.2}
  #allocation0 [shape = 'u32[]', space=smem, size = 0x4, offset = 0x4, fixed_abs, tag = 'smem constant byte address 0x4 - core index']
  #allocation1 [shape = 'u32[144,128]{1,0:T(1,128)}', space=vmem, size = 0x12000, scoped, tag = 'internal scratch']
  %s0 = inlined_call_operand.vmem [shape: f32[2,10,64], index: 0, kind: input, shape index: {}]
  %s1 = inlined_call_operand.vmem [shape: bf16[64,192], index: 1, kind: input, shape index: {}]
  %s2 = inlined_call_operand.vmem [shape: f32[1,192], index: 2, kind: input, shape index: {}]
  %s3 = inlined_call_operand.vmem [shape: bf16[64,64], index: 3, kind: input, shape index: {}]
  %s4 = inlined_call_operand.vmem [shape: f32[1,64], index: 4, kind: input, shape index: {}]
  %s5 = inlined_call_operand.vmem [shape: f32[1,64], index: 5, kind: input, shape index: {}]
  %s6 = inlined_call_operand.vmem [shape: f32[1,64], index: 6, kind: input, shape index: {}]
  %s7 = inlined_call_operand.vmem [shape: bf16[64,32], index: 7, kind: input, shape index: {}]
  %s8 = inlined_call_operand.vmem [shape: f32[1,32], index: 8, kind: input, shape index: {}]
  %s9 = inlined_call_operand.vmem [shape: bf16[32,64], index: 9, kind: input, shape index: {}]
  %s10 = inlined_call_operand.vmem [shape: f32[1,64], index: 10, kind: input, shape index: {}]
  %s11 = inlined_call_operand.vmem [shape: f32[1,64], index: 11, kind: input, shape index: {}]
  %s12 = inlined_call_operand.vmem [shape: f32[1,64], index: 12, kind: input, shape index: {}]
  %s13 = inlined_call_operand.vmem [shape: f32[1,64], index: 13, kind: input, shape index: {}]
  %s14 = inlined_call_operand.vmem [shape: f32[1,64], index: 14, kind: input, shape index: {}]
  %s15 = inlined_call_operand.vmem [shape: f32[2,10,64], index: 15, kind: output, shape index: {}]
  %s16 = sld [smem:[#allocation0]]
  $region93: #{_lambda_.2} parent=0
    _
  %s18 = ssub.s32 1, %s16
  %s19 = scalar_select 0, %s18, %s16
  loop: start=0, step=1, limit=4
  $region2: #{_lambda_.2} parent=0 // loop_pre_header
    _
  $region3: #{_lambda_.2} parent=0 // loop_header
    %s21 = sphi 0, %s25
    %p22 = scmp.ge.s32.totalorder %s21, 4
    %s31 = sphi 0, %s33
    %s34 = sphi 0, %s31
    %s35 = sphi 0, %s34
    %s51 = sphi 0, %s35
    %s55 = sphi 0, %s55
    %s57 = sphi 0, %s55
    %s58 = sphi 0, %s57
    %s72 = sphi 0, %s58
    %s76 = sphi 0, %s76
    %s78 = sphi 0, %s76
    %s79 = sphi 0, %s78
    %s93 = sphi 0, %s79
    %s97 = sphi 0, %s97
    %s99 = sphi 0, %s97
    %s100 = sphi 0, %s99
    %s114 = sphi 0, %s100
    %s118 = sphi 0, %s118
    %s120 = sphi 0, %s118
    %s121 = sphi 0, %s120
    %s135 = sphi 0, %s121
    %s139 = sphi 0, %s139
    %s141 = sphi 0, %s139
    %s142 = sphi 0, %s141
    %s156 = sphi 0, %s142
    %s160 = sphi 0, %s160
    %s162 = sphi 0, %s160
    %s163 = sphi 0, %s162
    %s177 = sphi 0, %s163
    %s181 = sphi 0, %s181
    %s183 = sphi 0, %s181
    %s184 = sphi 0, %s183
    %s198 = sphi 0, %s184
    %s202 = sphi 0, %s202
    %s204 = sphi 0, %s202
    %s205 = sphi 0, %s204
    %s219 = sphi 0, %s205
    %s223 = sphi 0, %s223
    %s225 = sphi 0, %s223
    %s226 = sphi 0, %s225
    %s240 = sphi 0, %s226
    %s244 = sphi 0, %s244
    %s246 = sphi 0, %s244
    %s247 = sphi 0, %s246
    %s261 = sphi 0, %s247
    %s265 = sphi 0, %s265
    %s267 = sphi 0, %s265
    %s268 = sphi 0, %s267
    %s282 = sphi 0, %s268
    %s286 = sphi 0, %s286
    %s288 = sphi 0, %s286
    %s289 = sphi 0, %s288
    %s303 = sphi 0, %s289
    %s307 = sphi 0, %s307
    %s309 = sphi 0, %s307
    %s310 = sphi 0, %s309
    %s324 = sphi 0, %s310
    %s328 = sphi 0, %s328
    %s330 = sphi 0, %s328
    %s331 = sphi 0, %s330
    %s345 = sphi 0, %s331
    %s351 = sphi 0, %s353
    %s354 = sphi 0, %s351
    %s355 = sphi 0, %s354
    %s371 = sphi 0, %s355
  $region4: #{_lambda_.2} parent=0 // loop_header_branch
    %24 = sbr.rel (%p22) target = $region8
  $region5: #{_lambda_.2} parent=0 // loop_body
    %s26 = ssub.s32 %s21, 1
    %s27 = ssub.s32 %s21, 2
    %s28 = sadd.s32 %s21, 1
    %s29 = ssub.s32 %s21, %s28
    %p30 = scmp.eq.s32.totalorder %s29, 0
    %s32 = sadd.s32 %s31, 1
    %s33 = scalar_select %p30, %s31, %s32
    %p36 = pneg %p30
    %p37 = scmp.eq.s32.totalorder %s21, 1
    %p38 = por %p36, %p37
    %p39 = scmp.ne.s32.totalorder %s31, %s34
    %p40 = scmp.eq.s32.totalorder %s21, 0
    %p41 = por %p39, %p40
    %p42 = scmp.ne.s32.totalorder %s31, %s34
    %p43 = scmp.eq.s32.totalorder %s26, 1
    %p44 = por %p42, %p43
    %p45 = scmp.ne.s32.totalorder %s34, %s35
    %p46 = scmp.eq.s32.totalorder %s26, 0
    %p47 = por %p45, %p46
    %p48 = scmp.ne.s32.totalorder %s34, %s35
    %p49 = scmp.eq.s32.totalorder %s27, 1
    %p50 = por %p48, %p49
    %p52 = scmp.ne.s32.totalorder %s35, %s51
    %p53 = scmp.eq.s32.totalorder %s27, 0
    %p54 = por %p52, %p53
    %s56 = sadd.s32 %s55, 1
    %p59 = scmp.eq.s32.totalorder %s21, 1
    %p60 = scmp.ne.s32.totalorder %s55, %s57
    %p61 = scmp.eq.s32.totalorder %s21, 0
    %p62 = por %p60, %p61
    %p63 = scmp.ne.s32.totalorder %s55, %s57
    %p64 = scmp.eq.s32.totalorder %s26, 1
    %p65 = por %p63, %p64
    %p66 = scmp.ne.s32.totalorder %s57, %s58
    %p67 = scmp.eq.s32.totalorder %s26, 0
    %p68 = por %p66, %p67
    %p69 = scmp.ne.s32.totalorder %s57, %s58
    %p70 = scmp.eq.s32.totalorder %s27, 1
    %p71 = por %p69, %p70
    %p73 = scmp.ne.s32.totalorder %s58, %s72
    %p74 = scmp.eq.s32.totalorder %s27, 0
    %p75 = por %p73, %p74
    %s77 = sadd.s32 %s76, 1
    %p80 = scmp.eq.s32.totalorder %s21, 1
    %p81 = scmp.ne.s32.totalorder %s76, %s78
    %p82 = scmp.eq.s32.totalorder %s21, 0
    %p83 = por %p81, %p82
    %p84 = scmp.ne.s32.totalorder %s76, %s78
    %p85 = scmp.eq.s32.totalorder %s26, 1
    %p86 = por %p84, %p85
    %p87 = scmp.ne.s32.totalorder %s78, %s79
    %p88 = scmp.eq.s32.totalorder %s26, 0
    %p89 = por %p87, %p88
    %p90 = scmp.ne.s32.totalorder %s78, %s79
    %p91 = scmp.eq.s32.totalorder %s27, 1
    %p92 = por %p90, %p91
    %p94 = scmp.ne.s32.totalorder %s79, %s93
    %p95 = scmp.eq.s32.totalorder %s27, 0
    %p96 = por %p94, %p95
    %s98 = sadd.s32 %s97, 1
    %p101 = scmp.eq.s32.totalorder %s21, 1
    %p102 = scmp.ne.s32.totalorder %s97, %s99
    %p103 = scmp.eq.s32.totalorder %s21, 0
    %p104 = por %p102, %p103
    %p105 = scmp.ne.s32.totalorder %s97, %s99
    %p106 = scmp.eq.s32.totalorder %s26, 1
    %p107 = por %p105, %p106
    %p108 = scmp.ne.s32.totalorder %s99, %s100
    %p109 = scmp.eq.s32.totalorder %s26, 0
    %p110 = por %p108, %p109
    %p111 = scmp.ne.s32.totalorder %s99, %s100
    %p112 = scmp.eq.s32.totalorder %s27, 1
    %p113 = por %p111, %p112
    %p115 = scmp.ne.s32.totalorder %s100, %s114
    %p116 = scmp.eq.s32.totalorder %s27, 0
    %p117 = por %p115, %p116
    %s119 = sadd.s32 %s118, 1
    %p122 = scmp.eq.s32.totalorder %s21, 1
    %p123 = scmp.ne.s32.totalorder %s118, %s120
    %p124 = scmp.eq.s32.totalorder %s21, 0
    %p125 = por %p123, %p124
    %p126 = scmp.ne.s32.totalorder %s118, %s120
    %p127 = scmp.eq.s32.totalorder %s26, 1
    %p128 = por %p126, %p127
    %p129 = scmp.ne.s32.totalorder %s120, %s121
    %p130 = scmp.eq.s32.totalorder %s26, 0
    %p131 = por %p129, %p130
    %p132 = scmp.ne.s32.totalorder %s120, %s121
    %p133 = scmp.eq.s32.totalorder %s27, 1
    %p134 = por %p132, %p133
    %p136 = scmp.ne.s32.totalorder %s121, %s135
    %p137 = scmp.eq.s32.totalorder %s27, 0
    %p138 = por %p136, %p137
    %s140 = sadd.s32 %s139, 1
    %p143 = scmp.eq.s32.totalorder %s21, 1
    %p144 = scmp.ne.s32.totalorder %s139, %s141
    %p145 = scmp.eq.s32.totalorder %s21, 0
    %p146 = por %p144, %p145
    %p147 = scmp.ne.s32.totalorder %s139, %s141
    %p148 = scmp.eq.s32.totalorder %s26, 1
    %p149 = por %p147, %p148
    %p150 = scmp.ne.s32.totalorder %s141, %s142
    %p151 = scmp.eq.s32.totalorder %s26, 0
    %p152 = por %p150, %p151
    %p153 = scmp.ne.s32.totalorder %s141, %s142
    %p154 = scmp.eq.s32.totalorder %s27, 1
    %p155 = por %p153, %p154
    %p157 = scmp.ne.s32.totalorder %s142, %s156
    %p158 = scmp.eq.s32.totalorder %s27, 0
    %p159 = por %p157, %p158
    %s161 = sadd.s32 %s160, 1
    %p164 = scmp.eq.s32.totalorder %s21, 1
    %p165 = scmp.ne.s32.totalorder %s160, %s162
    %p166 = scmp.eq.s32.totalorder %s21, 0
    %p167 = por %p165, %p166
    %p168 = scmp.ne.s32.totalorder %s160, %s162
    %p169 = scmp.eq.s32.totalorder %s26, 1
    %p170 = por %p168, %p169
    %p171 = scmp.ne.s32.totalorder %s162, %s163
    %p172 = scmp.eq.s32.totalorder %s26, 0
    %p173 = por %p171, %p172
    %p174 = scmp.ne.s32.totalorder %s162, %s163
    %p175 = scmp.eq.s32.totalorder %s27, 1
    %p176 = por %p174, %p175
    %p178 = scmp.ne.s32.totalorder %s163, %s177
    %p179 = scmp.eq.s32.totalorder %s27, 0
    %p180 = por %p178, %p179
    %s182 = sadd.s32 %s181, 1
    %p185 = scmp.eq.s32.totalorder %s21, 1
    %p186 = scmp.ne.s32.totalorder %s181, %s183
    %p187 = scmp.eq.s32.totalorder %s21, 0
    %p188 = por %p186, %p187
    %p189 = scmp.ne.s32.totalorder %s181, %s183
    %p190 = scmp.eq.s32.totalorder %s26, 1
    %p191 = por %p189, %p190
    %p192 = scmp.ne.s32.totalorder %s183, %s184
    %p193 = scmp.eq.s32.totalorder %s26, 0
    %p194 = por %p192, %p193
    %p195 = scmp.ne.s32.totalorder %s183, %s184
    %p196 = scmp.eq.s32.totalorder %s27, 1
    %p197 = por %p195, %p196
    %p199 = scmp.ne.s32.totalorder %s184, %s198
    %p200 = scmp.eq.s32.totalorder %s27, 0
    %p201 = por %p199, %p200
    %s203 = sadd.s32 %s202, 1
    %p206 = scmp.eq.s32.totalorder %s21, 1
    %p207 = scmp.ne.s32.totalorder %s202, %s204
    %p208 = scmp.eq.s32.totalorder %s21, 0
    %p209 = por %p207, %p208
    %p210 = scmp.ne.s32.totalorder %s202, %s204
    %p211 = scmp.eq.s32.totalorder %s26, 1
    %p212 = por %p210, %p211
    %p213 = scmp.ne.s32.totalorder %s204, %s205
    %p214 = scmp.eq.s32.totalorder %s26, 0
    %p215 = por %p213, %p214
    %p216 = scmp.ne.s32.totalorder %s204, %s205
    %p217 = scmp.eq.s32.totalorder %s27, 1
    %p218 = por %p216, %p217
    %p220 = scmp.ne.s32.totalorder %s205, %s219
    %p221 = scmp.eq.s32.totalorder %s27, 0
    %p222 = por %p220, %p221
    %s224 = sadd.s32 %s223, 1
    %p227 = scmp.eq.s32.totalorder %s21, 1
    %p228 = scmp.ne.s32.totalorder %s223, %s225
    %p229 = scmp.eq.s32.totalorder %s21, 0
    %p230 = por %p228, %p229
    %p231 = scmp.ne.s32.totalorder %s223, %s225
    %p232 = scmp.eq.s32.totalorder %s26, 1
    %p233 = por %p231, %p232
    %p234 = scmp.ne.s32.totalorder %s225, %s226
    %p235 = scmp.eq.s32.totalorder %s26, 0
    %p236 = por %p234, %p235
    %p237 = scmp.ne.s32.totalorder %s225, %s226
    %p238 = scmp.eq.s32.totalorder %s27, 1
    %p239 = por %p237, %p238
    %p241 = scmp.ne.s32.totalorder %s226, %s240
    %p242 = scmp.eq.s32.totalorder %s27, 0
    %p243 = por %p241, %p242
    %s245 = sadd.s32 %s244, 1
    %p248 = scmp.eq.s32.totalorder %s21, 1
    %p249 = scmp.ne.s32.totalorder %s244, %s246
    %p250 = scmp.eq.s32.totalorder %s21, 0
    %p251 = por %p249, %p250
    %p252 = scmp.ne.s32.totalorder %s244, %s246
    %p253 = scmp.eq.s32.totalorder %s26, 1
    %p254 = por %p252, %p253
    %p255 = scmp.ne.s32.totalorder %s246, %s247
    %p256 = scmp.eq.s32.totalorder %s26, 0
    %p257 = por %p255, %p256
    %p258 = scmp.ne.s32.totalorder %s246, %s247
    %p259 = scmp.eq.s32.totalorder %s27, 1
    %p260 = por %p258, %p259
    %p262 = scmp.ne.s32.totalorder %s247, %s261
    %p263 = scmp.eq.s32.totalorder %s27, 0
    %p264 = por %p262, %p263
    %s266 = sadd.s32 %s265, 1
    %p269 = scmp.eq.s32.totalorder %s21, 1
    %p270 = scmp.ne.s32.totalorder %s265, %s267
    %p271 = scmp.eq.s32.totalorder %s21, 0
    %p272 = por %p270, %p271
    %p273 = scmp.ne.s32.totalorder %s265, %s267
    %p274 = scmp.eq.s32.totalorder %s26, 1
    %p275 = por %p273, %p274
    %p276 = scmp.ne.s32.totalorder %s267, %s268
    %p277 = scmp.eq.s32.totalorder %s26, 0
    %p278 = por %p276, %p277
    %p279 = scmp.ne.s32.totalorder %s267, %s268
    %p280 = scmp.eq.s32.totalorder %s27, 1
    %p281 = por %p279, %p280
    %p283 = scmp.ne.s32.totalorder %s268, %s282
    %p284 = scmp.eq.s32.totalorder %s27, 0
    %p285 = por %p283, %p284
    %s287 = sadd.s32 %s286, 1
    %p290 = scmp.eq.s32.totalorder %s21, 1
    %p291 = scmp.ne.s32.totalorder %s286, %s288
    %p292 = scmp.eq.s32.totalorder %s21, 0
    %p293 = por %p291, %p292
    %p294 = scmp.ne.s32.totalorder %s286, %s288
    %p295 = scmp.eq.s32.totalorder %s26, 1
    %p296 = por %p294, %p295
    %p297 = scmp.ne.s32.totalorder %s288, %s289
    %p298 = scmp.eq.s32.totalorder %s26, 0
    %p299 = por %p297, %p298
    %p300 = scmp.ne.s32.totalorder %s288, %s289
    %p301 = scmp.eq.s32.totalorder %s27, 1
    %p302 = por %p300, %p301
    %p304 = scmp.ne.s32.totalorder %s289, %s303
    %p305 = scmp.eq.s32.totalorder %s27, 0
    %p306 = por %p304, %p305
    %s308 = sadd.s32 %s307, 1
    %p311 = scmp.eq.s32.totalorder %s21, 1
    %p312 = scmp.ne.s32.totalorder %s307, %s309
    %p313 = scmp.eq.s32.totalorder %s21, 0
    %p314 = por %p312, %p313
    %p315 = scmp.ne.s32.totalorder %s307, %s309
    %p316 = scmp.eq.s32.totalorder %s26, 1
    %p317 = por %p315, %p316
    %p318 = scmp.ne.s32.totalorder %s309, %s310
    %p319 = scmp.eq.s32.totalorder %s26, 0
    %p320 = por %p318, %p319
    %p321 = scmp.ne.s32.totalorder %s309, %s310
    %p322 = scmp.eq.s32.totalorder %s27, 1
    %p323 = por %p321, %p322
    %p325 = scmp.ne.s32.totalorder %s310, %s324
    %p326 = scmp.eq.s32.totalorder %s27, 0
    %p327 = por %p325, %p326
    %s329 = sadd.s32 %s328, 1
    %p332 = scmp.eq.s32.totalorder %s21, 1
    %p333 = scmp.ne.s32.totalorder %s328, %s330
    %p334 = scmp.eq.s32.totalorder %s21, 0
    %p335 = por %p333, %p334
    %p336 = scmp.ne.s32.totalorder %s328, %s330
    %p337 = scmp.eq.s32.totalorder %s26, 1
    %p338 = por %p336, %p337
    %p339 = scmp.ne.s32.totalorder %s330, %s331
    %p340 = scmp.eq.s32.totalorder %s26, 0
    %p341 = por %p339, %p340
    %p342 = scmp.ne.s32.totalorder %s330, %s331
    %p343 = scmp.eq.s32.totalorder %s27, 1
    %p344 = por %p342, %p343
    %p346 = scmp.ne.s32.totalorder %s331, %s345
    %p347 = scmp.eq.s32.totalorder %s27, 0
    %p348 = por %p346, %p347
    %s349 = ssub.s32 %s21, %s28
    %p350 = scmp.eq.s32.totalorder %s349, 0
    %s352 = sadd.s32 %s351, 1
    %s353 = scalar_select %p350, %s351, %s352
    %p356 = pneg %p350
    %p357 = scmp.eq.s32.totalorder %s21, 1
    %p358 = por %p356, %p357
    %p359 = scmp.ne.s32.totalorder %s351, %s354
    %p360 = scmp.eq.s32.totalorder %s21, 0
    %p361 = por %p359, %p360
    %p362 = scmp.ne.s32.totalorder %s351, %s354
    %p363 = scmp.eq.s32.totalorder %s26, 1
    %p364 = por %p362, %p363
    %p365 = scmp.ne.s32.totalorder %s354, %s355
    %p366 = scmp.eq.s32.totalorder %s26, 0
    %p367 = por %p365, %p366
    %p368 = scmp.ne.s32.totalorder %s354, %s355
    %p369 = scmp.eq.s32.totalorder %s27, 1
    %p370 = por %p368, %p369
    %p372 = scmp.ne.s32.totalorder %s355, %s371
    %p373 = scmp.eq.s32.totalorder %s27, 0
    %p374 = por %p372, %p373
    %p375 = scmp.le.s32.totalorder 1, %s21
    %p376 = scmp.lt.s32.totalorder %s21, 3
    %p377 = pnand %p375, %p376
    %p378 = pneg %p377
    // Predicated region
    $region9: #{_lambda_.2} parent=5 // pred_check
      _
    $region10: #{_lambda_.2} parent=5 // pred_check_branch
      %380 = sbr.rel (%p377) target = $region12
    $region11: #{_lambda_.2} parent=5 // pred_region
      %s381 = ssub.s32 %s21, 1
      // Predicated region
      $region13: #{_lambda_.2} parent=11 // pred_check
        %p382 = pneg %p68
      $region14: #{_lambda_.2} parent=11 // pred_check_branch
        %384 = sbr.rel (%p382) target = $region16
      $region15: #{_lambda_.2} parent=11 // pred_region
        _
      $region16: #{_lambda_.2} parent=11 // pred_fallthru
        _
      // Predicated region
      $region17: #{_lambda_.2} parent=11 // pred_check
        %p385 = pneg %p89
      $region18: #{_lambda_.2} parent=11 // pred_check_branch
        %387 = sbr.rel (%p385) target = $region20
      $region19: #{_lambda_.2} parent=11 // pred_region
        _
      $region20: #{_lambda_.2} parent=11 // pred_fallthru
        _
      // Predicated region
      $region21: #{_lambda_.2} parent=11 // pred_check
        %p388 = pneg %p110
      $region22: #{_lambda_.2} parent=11 // pred_check_branch
        %390 = sbr.rel (%p388) target = $region24
      $region23: #{_lambda_.2} parent=11 // pred_region
        _
      $region24: #{_lambda_.2} parent=11 // pred_fallthru
        _
      // Predicated region
      $region25: #{_lambda_.2} parent=11 // pred_check
        %p391 = pneg %p131
      $region26: #{_lambda_.2} parent=11 // pred_check_branch
        %393 = sbr.rel (%p391) target = $region28
      $region27: #{_lambda_.2} parent=11 // pred_region
        _
      $region28: #{_lambda_.2} parent=11 // pred_fallthru
        _
      // Predicated region
      $region29: #{_lambda_.2} parent=11 // pred_check
        %p394 = pneg %p152
      $region30: #{_lambda_.2} parent=11 // pred_check_branch
        %396 = sbr.rel (%p394) target = $region32
      $region31: #{_lambda_.2} parent=11 // pred_region
        _
      $region32: #{_lambda_.2} parent=11 // pred_fallthru
        _
      // Predicated region
      $region33: #{_lambda_.2} parent=11 // pred_check
        %p397 = pneg %p173
      $region34: #{_lambda_.2} parent=11 // pred_check_branch
        %399 = sbr.rel (%p397) target = $region36
      $region35: #{_lambda_.2} parent=11 // pred_region
        _
      $region36: #{_lambda_.2} parent=11 // pred_fallthru
        _
      // Predicated region
      $region37: #{_lambda_.2} parent=11 // pred_check
        %p400 = pneg %p194
      $region38: #{_lambda_.2} parent=11 // pred_check_branch
        %402 = sbr.rel (%p400) target = $region40
      $region39: #{_lambda_.2} parent=11 // pred_region
        _
      $region40: #{_lambda_.2} parent=11 // pred_fallthru
        _
      // Predicated region
      $region41: #{_lambda_.2} parent=11 // pred_check
        %p403 = pneg %p215
      $region42: #{_lambda_.2} parent=11 // pred_check_branch
        %405 = sbr.rel (%p403) target = $region44
      $region43: #{_lambda_.2} parent=11 // pred_region
        _
      $region44: #{_lambda_.2} parent=11 // pred_fallthru
        _
      // Predicated region
      $region45: #{_lambda_.2} parent=11 // pred_check
        %p406 = pneg %p236
      $region46: #{_lambda_.2} parent=11 // pred_check_branch
        %408 = sbr.rel (%p406) target = $region48
      $region47: #{_lambda_.2} parent=11 // pred_region
        _
      $region48: #{_lambda_.2} parent=11 // pred_fallthru
        _
      // Predicated region
      $region49: #{_lambda_.2} parent=11 // pred_check
        %p409 = pneg %p257
      $region50: #{_lambda_.2} parent=11 // pred_check_branch
        %411 = sbr.rel (%p409) target = $region52
      $region51: #{_lambda_.2} parent=11 // pred_region
        _
      $region52: #{_lambda_.2} parent=11 // pred_fallthru
        _
      // Predicated region
      $region53: #{_lambda_.2} parent=11 // pred_check
        %p412 = pneg %p278
      $region54: #{_lambda_.2} parent=11 // pred_check_branch
        %414 = sbr.rel (%p412) target = $region56
      $region55: #{_lambda_.2} parent=11 // pred_region
        _
      $region56: #{_lambda_.2} parent=11 // pred_fallthru
        _
      // Predicated region
      $region57: #{_lambda_.2} parent=11 // pred_check
        %p415 = pneg %p299
      $region58: #{_lambda_.2} parent=11 // pred_check_branch
        %417 = sbr.rel (%p415) target = $region60
      $region59: #{_lambda_.2} parent=11 // pred_region
        _
      $region60: #{_lambda_.2} parent=11 // pred_fallthru
        _
      // Predicated region
      $region61: #{_lambda_.2} parent=11 // pred_check
        %p418 = pneg %p320
      $region62: #{_lambda_.2} parent=11 // pred_check_branch
        %420 = sbr.rel (%p418) target = $region64
      $region63: #{_lambda_.2} parent=11 // pred_region
        _
      $region64: #{_lambda_.2} parent=11 // pred_fallthru
        _
      // Predicated region
      $region65: #{_lambda_.2} parent=11 // pred_check
        %p421 = pneg %p341
      $region66: #{_lambda_.2} parent=11 // pred_check_branch
        %423 = sbr.rel (%p421) target = $region68
      $region67: #{_lambda_.2} parent=11 // pred_region
        _
      $region68: #{_lambda_.2} parent=11 // pred_fallthru
        _
    $region12: #{_lambda_.2} parent=5 // pred_fallthru
      _
    %p424 = scmp.lt.s32.totalorder %s21, 2
    // Predicated region
    $region69: #{_lambda_.2} parent=5 // pred_check
      %p425 = pneg %p424
    $region70: #{_lambda_.2} parent=5 // pred_check_branch
      %427 = sbr.rel (%p425) target = $region72
    $region71: #{_lambda_.2} parent=5 // pred_region
      // Predicated region
      $region73: #{_lambda_.2} parent=71 // pred_check
        %p428 = pneg %p41
      $region74: #{_lambda_.2} parent=71 // pred_check_branch
        %430 = sbr.rel (%p428) target = $region76
      $region75: #{_lambda_.2} parent=71 // pred_region
        %p431 = scmp.lt.s32.totalorder %s21, 1
        %s432 = scalar_select %p431, %s21, 1
        %s433 = smul.addr %s432, 2
        %s434 = smul.addr %s433, 8
        %s435 = scalar_lea.vmem %s0, %s434
      $region76: #{_lambda_.2} parent=71 // pred_fallthru
        _
    $region72: #{_lambda_.2} parent=5 // pred_fallthru
      _
    %p436 = scmp.le.s32.totalorder 1, %s21
    %p437 = scmp.lt.s32.totalorder %s21, 3
    %p438 = pnand %p436, %p437
    %p439 = pneg %p438
    // Predicated region
    $region77: #{_lambda_.2} parent=5 // pred_check
      _
    $region78: #{_lambda_.2} parent=5 // pred_check_branch
      %441 = sbr.rel (%p438) target = $region80
    $region79: #{_lambda_.2} parent=5 // pred_region
      %s442 = ssub.s32 %s21, 1
      %p443 = scmp.lt.s32.totalorder %s26, 1
      %s444 = scalar_select %p443, %s26, 1
      %s445 = smul.addr %s444, 2
      %s446 = smul.addr %s445, 8
      %s447 = scalar_lea.vmem %s0, %s446
      %p448 = pneg %p47
      %p449 = pneg %p44
      %p450 = pneg %p68
      %p451 = pneg %p65
      %p452 = pneg %p89
      %p453 = pneg %p86
      %p454 = pneg %p110
      %p455 = pneg %p107
      %p456 = pneg %p131
      %p457 = pneg %p128
      %p458 = pneg %p152
      %p459 = pneg %p149
      %p460 = pneg %p173
      %p461 = pneg %p170
      %p462 = pneg %p194
      %p463 = pneg %p191
      %p464 = pneg %p215
      %p465 = pneg %p212
      %p466 = pneg %p236
      %p467 = pneg %p233
      %p468 = pneg %p257
      %p469 = pneg %p254
      %p470 = pneg %p278
      %p471 = pneg %p275
      %p472 = pneg %p299
      %p473 = pneg %p296
      %p474 = pneg %p320
      %p475 = pneg %p317
      %p476 = pneg %p341
      %p477 = pneg %p338
      %p478 = pneg %p367
      %p479 = pneg %p364
      %p480 = scmp.lt.s32.totalorder %s26, 1
      %s481 = scalar_select %p480, %s26, 1
      %s482 = smul.addr %s481, 2
      %s483 = smul.addr %s482, 8
      %s484 = scalar_lea.vmem %s15, %s483
      %p485 = scmp.lt.s32.totalorder %s26, 1
      %s486 = scalar_select %p485, %s26, 1
      %s487 = smul.addr %s486, 2
      %s488 = smul.addr %s487, 8
      %s489 = scalar_lea.vmem %s0, %s488
      %p490 = scmp.lt.s32.totalorder %s26, 1
      %s491 = scalar_select %p490, %s26, 1
      %s492 = smul.addr %s491, 2
      %s493 = smul.addr %s492, 8
      %s494 = scalar_lea.vmem %s15, %s493
      %v496 = vld [vmem:[%s489] sm:$0xff]
      %v497 = vld [vmem:[%s489 + $0x8] sm:$0x3]
      %v498 = vld [vmem:[%s1] sm:$0xff]
      %v499 = vld [vmem:[%s1 + $0x8] sm:$0xff]
      %v500 = vld [vmem:[%s1 + $0x10] sm:$0xff]
      %v501 = vld [vmem:[%s1 + $0x18] sm:$0xff]
      %v502 = vld [vmem:[%s1 + $0x20] sm:$0xff]
      %v503 = vld [vmem:[%s1 + $0x28] sm:$0xff]
      %v504 = vld [vmem:[%s1 + $0x30] sm:$0xff]
      %v505 = vld [vmem:[%s1 + $0x38] sm:$0xff]
      %v506 = vld [vmem:[%s2] sm:$0x3]
      %v507 = vld [vmem:[%s3] sm:$0xf]
      %v508 = vld [vmem:[%s3 + $0x4] sm:$0xf]
      %v509 = vld [vmem:[%s3 + $0x8] sm:$0xf]
      %v510 = vld [vmem:[%s3 + $0xc] sm:$0xf]
      %v511 = vld [vmem:[%s3 + $0x10] sm:$0xf]
      %v512 = vld [vmem:[%s3 + $0x14] sm:$0xf]
      %v513 = vld [vmem:[%s3 + $0x18] sm:$0xf]
      %v514 = vld [vmem:[%s3 + $0x1c] sm:$0xf]
      %v515 = vld [vmem:[%s4] sm:$0x1]
      %v516 = vld [vmem:[%s5] sm:$0x1]
      %v517 = vld [vmem:[%s6] sm:$0x1]
      %v518 = vpack.c.bf16 %v497, %v496
      %v520 = vlaneseq
      %v521 = vshrl.u32 %v520, 7
      %v522 = vsub.s32 0, %v521
      %v523 = vrot.slane %v506, %v522
      %v524 = vlaneseq
      %v525 = vshrl.u32 %v524, 7
      %v526 = vsub.s32 1, %v525
      %v527 = vrot.slane %v506, %v526
      %v538 = vunpack.c.l.b16 %v498
      %v539 = vunpack.c.h.b16 %v498
      %v540 = vunpack.c.l.b16 %v499
      %v541 = vunpack.c.h.b16 %v499
      %v542 = vunpack.c.l.b16 %v500
      %v543 = vunpack.c.h.b16 %v500
      %v544 = vunpack.c.l.b16 %v501
      %v545 = vunpack.c.h.b16 %v501
      %v546 = vunpack.c.l.b16 %v502
      %v547 = vunpack.c.h.b16 %v502
      %v548 = vunpack.c.l.b16 %v503
      %v549 = vunpack.c.h.b16 %v503
      %v550 = vunpack.c.l.b16 %v504
      %v551 = vunpack.c.h.b16 %v504
      %v552 = vunpack.c.l.b16 %v505
      %v553 = vunpack.c.h.b16 %v505
      %v554 = vpack.c.b16 %v540, %v538
      %v555 = vpack.c.b16 %v541, %v539
      %v556 = vpack.c.b16 %v544, %v542
      %v557 = vpack.c.b16 %v545, %v543
      %v558 = vpack.c.b16 %v548, %v546
      %v559 = vpack.c.b16 %v549, %v547
      %v560 = vpack.c.b16 %v552, %v550
      %v561 = vpack.c.b16 %v553, %v551
      %vm570 = vcmask 523264
      %v572 = vsel %vm570, %v518, 0
      %574 = vmatprep.subr.bf16.mxu0 0
      %575 = vmatpush1.bf16.msra.mxu0 0
      %576 = vmatprep.subr.bf16.mxu0 0
      %577 = vmatpush1.bf16.msra.mxu0 0
      %578 = vmatprep.subr.bf16.mxu0 0
      %579 = vmatpush1.bf16.msra.mxu0 0
      %580 = vmatprep.subr.bf16.mxu0 0
      %581 = vmatpush1.bf16.msra.mxu0 0
      %582 = vmatprep.subr.bf16.mxu0 %v561
      %583 = vmatpush1.bf16.msra.mxu0 %v560
      %584 = vmatprep.subr.bf16.mxu0 %v559
      %585 = vmatpush1.bf16.msra.mxu0 %v558
      %586 = vmatprep.subr.bf16.mxu0 %v557
      %587 = vmatpush1.bf16.msra.mxu0 %v556
      %588 = vmatprep.subr.bf16.mxu0 %v555
      %589 = vmatpush1.bf16.msra.mxu0 %v554
      %590 = vmatprep.subr.bf16.mxu0 0
      %591 = vmatpush2.bf16.msra.mxu0 0
      %592 = vmatprep.subr.bf16.mxu0 0
      %593 = vmatpush2.bf16.msra.mxu0 0
      %594 = vmatprep.subr.bf16.mxu0 0
      %595 = vmatpush2.bf16.msra.mxu0 0
      %596 = vmatprep.subr.bf16.mxu0 0
      %597 = vmatpush2.bf16.msra.mxu0 0
      %598 = vmatprep.subr.bf16.mxu0 0
      %599 = vmatpush2.bf16.msra.mxu0 0
      %600 = vmatprep.subr.bf16.mxu0 0
      %601 = vmatpush2.bf16.msra.mxu0 0
      %602 = vmatprep.subr.bf16.mxu0 0
      %603 = vmatpush2.bf16.msra.mxu0 0
      %604 = vmatprep.subr.bf16.mxu0 0
      %605 = vmatpush2.bf16.msra.mxu0 0
      %606 = vmatprep.mubr.bf16.mxu0 0
      %607 = vmatmul.mubr.bf16.gmra.mxu0 %v572
      %v608 = vpop.f32.mrf.mxu0
      %v609 = vadd.f32 %v523, %v608
      %v610 = vpop.f32.mrf.mxu0
      %v611 = vadd.f32 %v527, %v610
      %v612 = vpop.f32.mrf.mxu0
      %v613 = vadd.f32 %v523, %v612
      %v614 = vpop.f32.mrf.mxu0
      %v615 = vadd.f32 %v527, %v614
      %616 = vdwg.mxu0
      %v617 = vmul.f32 %v609, 0.25
      %v618 = vmul.f32 %v613, 0.25
      %v619 = vpack.c.bf16 %v618, %v617
      %v620 = vpack.c.bf16 %v613, %v609
      %v621 = vpack.c.bf16 %v615, %v611
      %623 = vrot.lane.b32.xlu0 %v620, 64
      %v624 = vpop.permute.xlu0 %623
      %vm625 = vcmask 130048
      %v627 = vsel %vm625, %v619, 0
      %v630 = vsel %vm625, %v624, 0
      %632 = vmatprep.subr.bf16.mxu0 0
      %633 = vmatpush1.bf16.xpose.msra.mxu0 0
      %634 = vmatprep.subr.bf16.mxu0 0
      %635 = vmatpush1.bf16.xpose.msra.mxu0 0
      %636 = vmatprep.subr.bf16.mxu0 0
      %637 = vmatpush1.bf16.xpose.msra.mxu0 0
      %638 = vmatprep.subr.bf16.mxu0 0
      %639 = vmatpush1.bf16.xpose.msra.mxu0 0
      %640 = vmatprep.subr.bf16.mxu0 0
      %641 = vmatpush1.bf16.xpose.msra.mxu0 0
      %642 = vmatprep.subr.bf16.mxu0 0
      %643 = vmatpush1.bf16.xpose.msra.mxu0 0
      %644 = vmatprep.subr.bf16.mxu0 0
      %645 = vmatpush1.bf16.xpose.msra.mxu0 0
      %646 = vmatprep.subr.bf16.mxu0 0
      %647 = vmatpush1.bf16.xpose.msra.mxu0 %v630
      %648 = vmatprep.subr.bf16.mxu0 0
      %649 = vmatpush2.bf16.xpose.msra.mxu0 0
      %650 = vmatprep.subr.bf16.mxu0 0
      %651 = vmatpush2.bf16.xpose.msra.mxu0 0
      %652 = vmatprep.subr.bf16.mxu0 0
      %653 = vmatpush2.bf16.xpose.msra.mxu0 0
      %654 = vmatprep.subr.bf16.mxu0 0
      %655 = vmatpush2.bf16.xpose.msra.mxu0 0
      %656 = vmatprep.subr.bf16.mxu0 0
      %657 = vmatpush2.bf16.xpose.msra.mxu0 0
      %658 = vmatprep.subr.bf16.mxu0 0
      %659 = vmatpush2.bf16.xpose.msra.mxu0 0
      %660 = vmatprep.subr.bf16.mxu0 0
      %661 = vmatpush2.bf16.xpose.msra.mxu0 0
      %662 = vmatprep.subr.bf16.mxu0 0
      %663 = vmatpush2.bf16.xpose.msra.mxu0 0
      %664 = vmatprep.mubr.bf16.mxu0 0
      %665 = vmatmul.mubr.bf16.gmra.mxu0 %v627
      %v666 = vpop.f32.mrf.mxu0
      %v667 = vadd.f32 0.0, %v666
      %v668 = vpop.f32.mrf.mxu0
      %v669 = vpop.f32.mrf.mxu0
      %v670 = vadd.f32 0.0, %v669
      %v671 = vpop.f32.mrf.mxu0
      %672 = vdwg.mxu0
      %vm673 = vcmask 80896
      %v674 = vsel %vm673, %v667, -inf
      %675 = vmax.xlane.f32.xlu0 %v674
      %v676 = vpop.xlane.xlu0 %675
      %vm677 = vcmask 74752
      %v678 = vsel %vm677, %v670, -inf
      %679 = vmax.xlane.f32.xlu0 %v678
      %v680 = vpop.xlane.xlu0 %679
      %v681 = vsub.f32 %v667, %v676
      %v682 = vsub.f32 %v670, %v680
      %v683 = vmul.f32 %v681, 1.442695
      %v684 = vpow.pop %v683
      %v685 = vmul.f32 %v682, 1.442695
      %v686 = vpow.pop %v685
      %v687 = vsel %vm673, %v684, 0.0
      %688 = vadd.xlane.f32.xlu0 %v687
      %v689 = vpop.xlane.xlu0 %688
      %v690 = vsel %vm677, %v686, 0.0
      %691 = vadd.xlane.f32.xlu0 %v690
      %v692 = vpop.xlane.xlu0 %691
      %v693 = vrcp.pop %v689
      %v694 = vrcp.pop %v692
      %v695 = vmul.f32 %v684, %v693
      %v696 = vmul.f32 %v686, %v694
      %v697 = vpack.c.bf16 %v696, %v695
      %v699 = vsel %vm673, %v697, 0
      %vm701 = vcmask 1044480
      %v703 = vsel %vm701, %v621, 0
      %705 = vmatprep.subr.bf16.mxu0 0
      %706 = vmatpush1.bf16.msra.mxu0 0
      %707 = vmatprep.subr.bf16.mxu0 0
      %708 = vmatpush1.bf16.msra.mxu0 0
      %709 = vmatprep.subr.bf16.mxu0 0
      %710 = vmatpush1.bf16.msra.mxu0 0
      %711 = vmatprep.subr.bf16.mxu0 0
      %712 = vmatpush1.bf16.msra.mxu0 0
      %713 = vmatprep.subr.bf16.mxu0 0
      %714 = vmatpush1.bf16.msra.mxu0 0
      %715 = vmatprep.subr.bf16.mxu0 0
      %716 = vmatpush1.bf16.msra.mxu0 0
      %717 = vmatprep.subr.bf16.mxu0 0
      %718 = vmatpush1.bf16.msra.mxu0 0
      %719 = vmatprep.subr.bf16.mxu0 0
      %720 = vmatpush1.bf16.msra.mxu0 %v703
      %721 = vmatprep.subr.bf16.mxu0 0
      %722 = vmatpush2.bf16.msra.mxu0 0
      %723 = vmatprep.subr.bf16.mxu0 0
      %724 = vmatpush2.bf16.msra.mxu0 0
      %725 = vmatprep.subr.bf16.mxu0 0
      %726 = vmatpush2.bf16.msra.mxu0 0
      %727 = vmatprep.subr.bf16.mxu0 0
      %728 = vmatpush2.bf16.msra.mxu0 0
      %729 = vmatprep.subr.bf16.mxu0 0
      %730 = vmatpush2.bf16.msra.mxu0 0
      %731 = vmatprep.subr.bf16.mxu0 0
      %732 = vmatpush2.bf16.msra.mxu0 0
      %733 = vmatprep.subr.bf16.mxu0 0
      %734 = vmatpush2.bf16.msra.mxu0 0
      %735 = vmatprep.subr.bf16.mxu0 0
      %736 = vmatpush2.bf16.msra.mxu0 0
      %737 = vmatprep.mubr.bf16.mxu0 0
      %738 = vmatmul.mubr.bf16.gmra.mxu0 %v699
      %v739 = vpop.f32.mrf.mxu0
      %v740 = vadd.f32 0.0, %v739
      %v741 = vpop.f32.mrf.mxu0
      %v742 = vpop.f32.mrf.mxu0
      %v743 = vadd.f32 0.0, %v742
      %v744 = vpop.f32.mrf.mxu0
      %745 = vdwg.mxu0
      %v746 = vpack.c.bf16 %v743, %v740
      %748 = vrot.lane.b32.xlu0 %v619, 112
      %v749 = vpop.permute.xlu0 %748
      %750 = vrot.lane.b32.xlu0 %v620, 48
      %v751 = vpop.permute.xlu0 %750
      %v753 = vsel %vm625, %v749, 0
      %v756 = vsel %vm625, %v751, 0
      %758 = vmatprep.subr.bf16.mxu0 0
      %759 = vmatpush1.bf16.xpose.msra.mxu0 0
      %760 = vmatprep.subr.bf16.mxu0 0
      %761 = vmatpush1.bf16.xpose.msra.mxu0 0
      %762 = vmatprep.subr.bf16.mxu0 0
      %763 = vmatpush1.bf16.xpose.msra.mxu0 0
      %764 = vmatprep.subr.bf16.mxu0 0
      %765 = vmatpush1.bf16.xpose.msra.mxu0 0
      %766 = vmatprep.subr.bf16.mxu0 0
      %767 = vmatpush1.bf16.xpose.msra.mxu0 0
      %768 = vmatprep.subr.bf16.mxu0 0
      %769 = vmatpush1.bf16.xpose.msra.mxu0 0
      %770 = vmatprep.subr.bf16.mxu0 0
      %771 = vmatpush1.bf16.xpose.msra.mxu0 0
      %772 = vmatprep.subr.bf16.mxu0 0
      %773 = vmatpush1.bf16.xpose.msra.mxu0 %v756
      %774 = vmatprep.subr.bf16.mxu0 0
      %775 = vmatpush2.bf16.xpose.msra.mxu0 0
      %776 = vmatprep.subr.bf16.mxu0 0
      %777 = vmatpush2.bf16.xpose.msra.mxu0 0
      %778 = vmatprep.subr.bf16.mxu0 0
      %779 = vmatpush2.bf16.xpose.msra.mxu0 0
      %780 = vmatprep.subr.bf16.mxu0 0
      %781 = vmatpush2.bf16.xpose.msra.mxu0 0
      %782 = vmatprep.subr.bf16.mxu0 0
      %783 = vmatpush2.bf16.xpose.msra.mxu0 0
      %784 = vmatprep.subr.bf16.mxu0 0
      %785 = vmatpush2.bf16.xpose.msra.mxu0 0
      %786 = vmatprep.subr.bf16.mxu0 0
      %787 = vmatpush2.bf16.xpose.msra.mxu0 0
      %788 = vmatprep.subr.bf16.mxu0 0
      %789 = vmatpush2.bf16.xpose.msra.mxu0 0
      %790 = vmatprep.mubr.bf16.mxu0 0
      %791 = vmatmul.mubr.bf16.gmra.mxu0 %v753
      %v792 = vpop.f32.mrf.mxu0
      %v793 = vadd.f32 0.0, %v792
      %v794 = vpop.f32.mrf.mxu0
      %v795 = vpop.f32.mrf.mxu0
      %v796 = vadd.f32 0.0, %v795
      %v797 = vpop.f32.mrf.mxu0
      %798 = vdwg.mxu0
      %v799 = vsel %vm673, %v793, -inf
      %800 = vmax.xlane.f32.xlu0 %v799
      %v801 = vpop.xlane.xlu0 %800
      %v802 = vsel %vm677, %v796, -inf
      %803 = vmax.xlane.f32.xlu0 %v802
      %v804 = vpop.xlane.xlu0 %803
      %v805 = vsub.f32 %v793, %v801
      %v806 = vsub.f32 %v796, %v804
      %v807 = vmul.f32 %v805, 1.442695
      %v808 = vpow.pop %v807
      %v809 = vmul.f32 %v806, 1.442695
      %v810 = vpow.pop %v809
      %v811 = vsel %vm673, %v808, 0.0
      %812 = vadd.xlane.f32.xlu0 %v811
      %v813 = vpop.xlane.xlu0 %812
      %v814 = vsel %vm677, %v810, 0.0
      %815 = vadd.xlane.f32.xlu0 %v814
      %v816 = vpop.xlane.xlu0 %815
      %v817 = vrcp.pop %v813
      %v818 = vrcp.pop %v816
      %v819 = vmul.f32 %v808, %v817
      %v820 = vmul.f32 %v810, %v818
      %v821 = vpack.c.bf16 %v820, %v819
      %823 = vrot.lane.b32.xlu0 %v621, 112
      %v824 = vpop.permute.xlu0 %823
      %v826 = vsel %vm673, %v821, 0
      %v829 = vsel %vm701, %v824, 0
      %831 = vmatprep.subr.bf16.mxu0 0
      %832 = vmatpush1.bf16.msra.mxu0 0
      %833 = vmatprep.subr.bf16.mxu0 0
      %834 = vmatpush1.bf16.msra.mxu0 0
      %835 = vmatprep.subr.bf16.mxu0 0
      %836 = vmatpush1.bf16.msra.mxu0 0
      %837 = vmatprep.subr.bf16.mxu0 0
      %838 = vmatpush1.bf16.msra.mxu0 0
      %839 = vmatprep.subr.bf16.mxu0 0
      %840 = vmatpush1.bf16.msra.mxu0 0
      %841 = vmatprep.subr.bf16.mxu0 0
      %842 = vmatpush1.bf16.msra.mxu0 0
      %843 = vmatprep.subr.bf16.mxu0 0
      %844 = vmatpush1.bf16.msra.mxu0 0
      %845 = vmatprep.subr.bf16.mxu0 0
      %846 = vmatpush1.bf16.msra.mxu0 %v829
      %847 = vmatprep.subr.bf16.mxu0 0
      %848 = vmatpush2.bf16.msra.mxu0 0
      %849 = vmatprep.subr.bf16.mxu0 0
      %850 = vmatpush2.bf16.msra.mxu0 0
      %851 = vmatprep.subr.bf16.mxu0 0
      %852 = vmatpush2.bf16.msra.mxu0 0
      %853 = vmatprep.subr.bf16.mxu0 0
      %854 = vmatpush2.bf16.msra.mxu0 0
      %855 = vmatprep.subr.bf16.mxu0 0
      %856 = vmatpush2.bf16.msra.mxu0 0
      %857 = vmatprep.subr.bf16.mxu0 0
      %858 = vmatpush2.bf16.msra.mxu0 0
      %859 = vmatprep.subr.bf16.mxu0 0
      %860 = vmatpush2.bf16.msra.mxu0 0
      %861 = vmatprep.subr.bf16.mxu0 0
      %862 = vmatpush2.bf16.msra.mxu0 0
      %863 = vmatprep.mubr.bf16.mxu0 0
      %864 = vmatmul.mubr.bf16.gmra.mxu0 %v826
      %v865 = vpop.f32.mrf.mxu0
      %v866 = vadd.f32 0.0, %v865
      %v867 = vpop.f32.mrf.mxu0
      %v868 = vpop.f32.mrf.mxu0
      %v869 = vadd.f32 0.0, %v868
      %v870 = vpop.f32.mrf.mxu0
      %871 = vdwg.mxu0
      %v872 = vpack.c.bf16 %v869, %v866
      %v875 = vunpack.c.l.b16 %v509
      %v876 = vunpack.c.l.b16 %v510
      %v877 = vpack.c.b16 %v876, %v875
      %v880 = vsel %vm625, %v872, 0
      %882 = vmatprep.subr.bf16.mxu0 0
      %883 = vmatpush1.bf16.msra.mxu0 0
      %884 = vmatprep.subr.bf16.mxu0 0
      %885 = vmatpush1.bf16.msra.mxu0 0
      %886 = vmatprep.subr.bf16.mxu0 0
      %887 = vmatpush1.bf16.msra.mxu0 0
      %888 = vmatprep.subr.bf16.mxu0 0
      %889 = vmatpush1.bf16.msra.mxu0 0
      %890 = vmatprep.subr.bf16.mxu0 0
      %891 = vmatpush1.bf16.msra.mxu0 0
      %892 = vmatprep.subr.bf16.mxu0 0
      %893 = vmatpush1.bf16.msra.mxu0 0
      %894 = vmatprep.subr.bf16.mxu0 0
      %895 = vmatpush1.bf16.msra.mxu0 0
      %896 = vmatprep.subr.bf16.mxu0 0
      %897 = vmatpush1.bf16.msra.mxu0 %v877
      %898 = vmatprep.subr.bf16.mxu0 0
      %899 = vmatpush2.bf16.msra.mxu0 0
      %900 = vmatprep.subr.bf16.mxu0 0
      %901 = vmatpush2.bf16.msra.mxu0 0
      %902 = vmatprep.subr.bf16.mxu0 0
      %903 = vmatpush2.bf16.msra.mxu0 0
      %904 = vmatprep.subr.bf16.mxu0 0
      %905 = vmatpush2.bf16.msra.mxu0 0
      %906 = vmatprep.subr.bf16.mxu0 0
      %907 = vmatpush2.bf16.msra.mxu0 0
      %908 = vmatprep.subr.bf16.mxu0 0
      %909 = vmatpush2.bf16.msra.mxu0 0
      %910 = vmatprep.subr.bf16.mxu0 0
      %911 = vmatpush2.bf16.msra.mxu0 0
      %912 = vmatprep.subr.bf16.mxu0 0
      %913 = vmatpush2.bf16.msra.mxu0 0
      %914 = vmatprep.mubr.bf16.mxu0 0
      %915 = vmatmul.mubr.bf16.gmra.mxu0 %v880
      %v916 = vpop.f32.mrf.mxu0
      %v917 = vadd.f32 0.0, %v916
      %v918 = vpop.f32.mrf.mxu0
      %v919 = vpop.f32.mrf.mxu0
      %v920 = vadd.f32 0.0, %v919
      %v921 = vpop.f32.mrf.mxu0
      %922 = vdwg.mxu0
      %v925 = vunpack.c.l.b16 %v507
      %v926 = vunpack.c.l.b16 %v508
      %v927 = vpack.c.b16 %v926, %v925
      %v930 = vsel %vm625, %v746, 0
      %932 = vmatprep.subr.bf16.mxu0 0
      %933 = vmatpush1.bf16.msra.mxu0 0
      %934 = vmatprep.subr.bf16.mxu0 0
      %935 = vmatpush1.bf16.msra.mxu0 0
      %936 = vmatprep.subr.bf16.mxu0 0
      %937 = vmatpush1.bf16.msra.mxu0 0
      %938 = vmatprep.subr.bf16.mxu0 0
      %939 = vmatpush1.bf16.msra.mxu0 0
      %940 = vmatprep.subr.bf16.mxu0 0
      %941 = vmatpush1.bf16.msra.mxu0 0
      %942 = vmatprep.subr.bf16.mxu0 0
      %943 = vmatpush1.bf16.msra.mxu0 0
      %944 = vmatprep.subr.bf16.mxu0 0
      %945 = vmatpush1.bf16.msra.mxu0 0
      %946 = vmatprep.subr.bf16.mxu0 0
      %947 = vmatpush1.bf16.msra.mxu0 %v927
      %948 = vmatprep.subr.bf16.mxu0 0
      %949 = vmatpush2.bf16.msra.mxu0 0
      %950 = vmatprep.subr.bf16.mxu0 0
      %951 = vmatpush2.bf16.msra.mxu0 0
      %952 = vmatprep.subr.bf16.mxu0 0
      %953 = vmatpush2.bf16.msra.mxu0 0
      %954 = vmatprep.subr.bf16.mxu0 0
      %955 = vmatpush2.bf16.msra.mxu0 0
      %956 = vmatprep.subr.bf16.mxu0 0
      %957 = vmatpush2.bf16.msra.mxu0 0
      %958 = vmatprep.subr.bf16.mxu0 0
      %959 = vmatpush2.bf16.msra.mxu0 0
      %960 = vmatprep.subr.bf16.mxu0 0
      %961 = vmatpush2.bf16.msra.mxu0 0
      %962 = vmatprep.subr.bf16.mxu0 0
      %963 = vmatpush2.bf16.msra.mxu0 0
      %964 = vmatprep.mubr.bf16.mxu0 0
      %965 = vmatmul.mubr.bf16.gmra.mxu0 %v930
      %v966 = vpop.f32.mrf.mxu0
      %v967 = vadd.f32 %v917, %v966
      %v968 = vpop.f32.mrf.mxu0
      %v969 = vpop.f32.mrf.mxu0
      %v970 = vadd.f32 %v920, %v969
      %v971 = vpop.f32.mrf.mxu0
      %972 = vdwg.mxu0
      %973 = vrot.lane.b32.xlu0 %v619, 96
      %v974 = vpop.permute.xlu0 %973
      %975 = vrot.lane.b32.xlu0 %v620, 32
      %v976 = vpop.permute.xlu0 %975
      %v978 = vsel %vm625, %v974, 0
      %v981 = vsel %vm625, %v976, 0
      %983 = vmatprep.subr.bf16.mxu0 0
      %984 = vmatpush1.bf16.xpose.msra.mxu0 0
      %985 = vmatprep.subr.bf16.mxu0 0
      %986 = vmatpush1.bf16.xpose.msra.mxu0 0
      %987 = vmatprep.subr.bf16.mxu0 0
      %988 = vmatpush1.bf16.xpose.msra.mxu0 0
      %989 = vmatprep.subr.bf16.mxu0 0
      %990 = vmatpush1.bf16.xpose.msra.mxu0 0
      %991 = vmatprep.subr.bf16.mxu0 0
      %992 = vmatpush1.bf16.xpose.msra.mxu0 0
      %993 = vmatprep.subr.bf16.mxu0 0
      %994 = vmatpush1.bf16.xpose.msra.mxu0 0
      %995 = vmatprep.subr.bf16.mxu0 0
      %996 = vmatpush1.bf16.xpose.msra.mxu0 0
      %997 = vmatprep.subr.bf16.mxu0 0
      %998 = vmatpush1.bf16.xpose.msra.mxu0 %v981
      %999 = vmatprep.subr.bf16.mxu0 0
      %1000 = vmatpush2.bf16.xpose.msra.mxu0 0
      %1001 = vmatprep.subr.bf16.mxu0 0
      %1002 = vmatpush2.bf16.xpose.msra.mxu0 0
      %1003 = vmatprep.subr.bf16.mxu0 0
      %1004 = vmatpush2.bf16.xpose.msra.mxu0 0
      %1005 = vmatprep.subr.bf16.mxu0 0
      %1006 = vmatpush2.bf16.xpose.msra.mxu0 0
      %1007 = vmatprep.subr.bf16.mxu0 0
      %1008 = vmatpush2.bf16.xpose.msra.mxu0 0
      %1009 = vmatprep.subr.bf16.mxu0 0
      %1010 = vmatpush2.bf16.xpose.msra.mxu0 0
      %1011 = vmatprep.subr.bf16.mxu0 0
      %1012 = vmatpush2.bf16.xpose.msra.mxu0 0
      %1013 = vmatprep.subr.bf16.mxu0 0
      %1014 = vmatpush2.bf16.xpose.msra.mxu0 0
      %1015 = vmatprep.mubr.bf16.mxu0 0
      %1016 = vmatmul.mubr.bf16.gmra.mxu0 %v978
      %v1017 = vpop.f32.mrf.mxu0
      %v1018 = vadd.f32 0.0, %v1017
      %v1019 = vpop.f32.mrf.mxu0
      %v1020 = vpop.f32.mrf.mxu0
      %v1021 = vadd.f32 0.0, %v1020
      %v1022 = vpop.f32.mrf.mxu0
      %1023 = vdwg.mxu0
      %v1024 = vsel %vm673, %v1018, -inf
      %1025 = vmax.xlane.f32.xlu0 %v1024
      %v1026 = vpop.xlane.xlu0 %1025
      %v1027 = vsel %vm677, %v1021, -inf
      %1028 = vmax.xlane.f32.xlu0 %v1027
      %v1029 = vpop.xlane.xlu0 %1028
      %v1030 = vsub.f32 %v1018, %v1026
      %v1031 = vsub.f32 %v1021, %v1029
      %v1032 = vmul.f32 %v1030, 1.442695
      %v1033 = vpow.pop %v1032
      %v1034 = vmul.f32 %v1031, 1.442695
      %v1035 = vpow.pop %v1034
      %v1036 = vsel %vm673, %v1033, 0.0
      %1037 = vadd.xlane.f32.xlu0 %v1036
      %v1038 = vpop.xlane.xlu0 %1037
      %v1039 = vsel %vm677, %v1035, 0.0
      %1040 = vadd.xlane.f32.xlu0 %v1039
      %v1041 = vpop.xlane.xlu0 %1040
      %v1042 = vrcp.pop %v1038
      %v1043 = vrcp.pop %v1041
      %v1044 = vmul.f32 %v1033, %v1042
      %v1045 = vmul.f32 %v1035, %v1043
      %v1046 = vpack.c.bf16 %v1045, %v1044
      %1047 = vrot.lane.b32.xlu0 %v621, 96
      %v1048 = vpop.permute.xlu0 %1047
      %v1050 = vsel %vm673, %v1046, 0
      %v1053 = vsel %vm701, %v1048, 0
      %1055 = vmatprep.subr.bf16.mxu0 0
      %1056 = vmatpush1.bf16.msra.mxu0 0
      %1057 = vmatprep.subr.bf16.mxu0 0
      %1058 = vmatpush1.bf16.msra.mxu0 0
      %1059 = vmatprep.subr.bf16.mxu0 0
      %1060 = vmatpush1.bf16.msra.mxu0 0
      %1061 = vmatprep.subr.bf16.mxu0 0
      %1062 = vmatpush1.bf16.msra.mxu0 0
      %1063 = vmatprep.subr.bf16.mxu0 0
      %1064 = vmatpush1.bf16.msra.mxu0 0
      %1065 = vmatprep.subr.bf16.mxu0 0
      %1066 = vmatpush1.bf16.msra.mxu0 0
      %1067 = vmatprep.subr.bf16.mxu0 0
      %1068 = vmatpush1.bf16.msra.mxu0 0
      %1069 = vmatprep.subr.bf16.mxu0 0
      %1070 = vmatpush1.bf16.msra.mxu0 %v1053
      %1071 = vmatprep.subr.bf16.mxu0 0
      %1072 = vmatpush2.bf16.msra.mxu0 0
      %1073 = vmatprep.subr.bf16.mxu0 0
      %1074 = vmatpush2.bf16.msra.mxu0 0
      %1075 = vmatprep.subr.bf16.mxu0 0
      %1076 = vmatpush2.bf16.msra.mxu0 0
      %1077 = vmatprep.subr.bf16.mxu0 0
      %1078 = vmatpush2.bf16.msra.mxu0 0
      %1079 = vmatprep.subr.bf16.mxu0 0
      %1080 = vmatpush2.bf16.msra.mxu0 0
      %1081 = vmatprep.subr.bf16.mxu0 0
      %1082 = vmatpush2.bf16.msra.mxu0 0
      %1083 = vmatprep.subr.bf16.mxu0 0
      %1084 = vmatpush2.bf16.msra.mxu0 0
      %1085 = vmatprep.subr.bf16.mxu0 0
      %1086 = vmatpush2.bf16.msra.mxu0 0
      %1087 = vmatprep.mubr.bf16.mxu0 0
      %1088 = vmatmul.mubr.bf16.gmra.mxu0 %v1050
      %v1089 = vpop.f32.mrf.mxu0
      %v1090 = vadd.f32 0.0, %v1089
      %v1091 = vpop.f32.mrf.mxu0
      %v1092 = vpop.f32.mrf.mxu0
      %v1093 = vadd.f32 0.0, %v1092
      %v1094 = vpop.f32.mrf.mxu0
      %1095 = vdwg.mxu0
      %v1096 = vpack.c.bf16 %v1093, %v1090
      %v1099 = vunpack.c.l.b16 %v511
      %v1100 = vunpack.c.l.b16 %v512
      %v1101 = vpack.c.b16 %v1100, %v1099
      %v1104 = vsel %vm625, %v1096, 0
      %1106 = vmatprep.subr.bf16.mxu0 0
      %1107 = vmatpush1.bf16.msra.mxu0 0
      %1108 = vmatprep.subr.bf16.mxu0 0
      %1109 = vmatpush1.bf16.msra.mxu0 0
      %1110 = vmatprep.subr.bf16.mxu0 0
      %1111 = vmatpush1.bf16.msra.mxu0 0
      %1112 = vmatprep.subr.bf16.mxu0 0
      %1113 = vmatpush1.bf16.msra.mxu0 0
      %1114 = vmatprep.subr.bf16.mxu0 0
      %1115 = vmatpush1.bf16.msra.mxu0 0
      %1116 = vmatprep.subr.bf16.mxu0 0
      %1117 = vmatpush1.bf16.msra.mxu0 0
      %1118 = vmatprep.subr.bf16.mxu0 0
      %1119 = vmatpush1.bf16.msra.mxu0 0
      %1120 = vmatprep.subr.bf16.mxu0 0
      %1121 = vmatpush1.bf16.msra.mxu0 %v1101
      %1122 = vmatprep.subr.bf16.mxu0 0
      %1123 = vmatpush2.bf16.msra.mxu0 0
      %1124 = vmatprep.subr.bf16.mxu0 0
      %1125 = vmatpush2.bf16.msra.mxu0 0
      %1126 = vmatprep.subr.bf16.mxu0 0
      %1127 = vmatpush2.bf16.msra.mxu0 0
      %1128 = vmatprep.subr.bf16.mxu0 0
      %1129 = vmatpush2.bf16.msra.mxu0 0
      %1130 = vmatprep.subr.bf16.mxu0 0
      %1131 = vmatpush2.bf16.msra.mxu0 0
      %1132 = vmatprep.subr.bf16.mxu0 0
      %1133 = vmatpush2.bf16.msra.mxu0 0
      %1134 = vmatprep.subr.bf16.mxu0 0
      %1135 = vmatpush2.bf16.msra.mxu0 0
      %1136 = vmatprep.subr.bf16.mxu0 0
      %1137 = vmatpush2.bf16.msra.mxu0 0
      %1138 = vmatprep.mubr.bf16.mxu0 0
      %1139 = vmatmul.mubr.bf16.gmra.mxu0 %v1104
      %v1140 = vpop.f32.mrf.mxu0
      %v1141 = vadd.f32 0.0, %v1140
      %v1142 = vpop.f32.mrf.mxu0
      %v1143 = vpop.f32.mrf.mxu0
      %v1144 = vadd.f32 0.0, %v1143
      %v1145 = vpop.f32.mrf.mxu0
      %1146 = vdwg.mxu0
      %v1147 = vadd.f32 %v967, %v1141
      %v1148 = vadd.f32 %v970, %v1144
      %1149 = vrot.lane.b32.xlu0 %v619, 80
      %v1150 = vpop.permute.xlu0 %1149
      %1151 = vrot.lane.b32.xlu0 %v620, 16
      %v1152 = vpop.permute.xlu0 %1151
      %v1154 = vsel %vm625, %v1150, 0
      %v1157 = vsel %vm625, %v1152, 0
      %1159 = vmatprep.subr.bf16.mxu0 0
      %1160 = vmatpush1.bf16.xpose.msra.mxu0 0
      %1161 = vmatprep.subr.bf16.mxu0 0
      %1162 = vmatpush1.bf16.xpose.msra.mxu0 0
      %1163 = vmatprep.subr.bf16.mxu0 0
      %1164 = vmatpush1.bf16.xpose.msra.mxu0 0
      %1165 = vmatprep.subr.bf16.mxu0 0
      %1166 = vmatpush1.bf16.xpose.msra.mxu0 0
      %1167 = vmatprep.subr.bf16.mxu0 0
      %1168 = vmatpush1.bf16.xpose.msra.mxu0 0
      %1169 = vmatprep.subr.bf16.mxu0 0
      %1170 = vmatpush1.bf16.xpose.msra.mxu0 0
      %1171 = vmatprep.subr.bf16.mxu0 0
      %1172 = vmatpush1.bf16.xpose.msra.mxu0 0
      %1173 = vmatprep.subr.bf16.mxu0 0
      %1174 = vmatpush1.bf16.xpose.msra.mxu0 %v1157
      %1175 = vmatprep.subr.bf16.mxu0 0
      %1176 = vmatpush2.bf16.xpose.msra.mxu0 0
      %1177 = vmatprep.subr.bf16.mxu0 0
      %1178 = vmatpush2.bf16.xpose.msra.mxu0 0
      %1179 = vmatprep.subr.bf16.mxu0 0
      %1180 = vmatpush2.bf16.xpose.msra.mxu0 0
      %1181 = vmatprep.subr.bf16.mxu0 0
      %1182 = vmatpush2.bf16.xpose.msra.mxu0 0
      %1183 = vmatprep.subr.bf16.mxu0 0
      %1184 = vmatpush2.bf16.xpose.msra.mxu0 0
      %1185 = vmatprep.subr.bf16.mxu0 0
      %1186 = vmatpush2.bf16.xpose.msra.mxu0 0
      %1187 = vmatprep.subr.bf16.mxu0 0
      %1188 = vmatpush2.bf16.xpose.msra.mxu0 0
      %1189 = vmatprep.subr.bf16.mxu0 0
      %1190 = vmatpush2.bf16.xpose.msra.mxu0 0
      %1191 = vmatprep.mubr.bf16.mxu0 0
      %1192 = vmatmul.mubr.bf16.gmra.mxu0 %v1154
      %v1193 = vpop.f32.mrf.mxu0
      %v1194 = vadd.f32 0.0, %v1193
      %v1195 = vpop.f32.mrf.mxu0
      %v1196 = vpop.f32.mrf.mxu0
      %v1197 = vadd.f32 0.0, %v1196
      %v1198 = vpop.f32.mrf.mxu0
      %1199 = vdwg.mxu0
      %v1200 = vsel %vm673, %v1194, -inf
      %1201 = vmax.xlane.f32.xlu0 %v1200
      %v1202 = vpop.xlane.xlu0 %1201
      %v1203 = vsel %vm677, %v1197, -inf
      %1204 = vmax.xlane.f32.xlu0 %v1203
      %v1205 = vpop.xlane.xlu0 %1204
      %v1206 = vsub.f32 %v1194, %v1202
      %v1207 = vsub.f32 %v1197, %v1205
      %v1208 = vmul.f32 %v1206, 1.442695
      %v1209 = vpow.pop %v1208
      %v1210 = vmul.f32 %v1207, 1.442695
      %v1211 = vpow.pop %v1210
      %v1212 = vsel %vm673, %v1209, 0.0
      %1213 = vadd.xlane.f32.xlu0 %v1212
      %v1214 = vpop.xlane.xlu0 %1213
      %v1215 = vsel %vm677, %v1211, 0.0
      %1216 = vadd.xlane.f32.xlu0 %v1215
      %v1217 = vpop.xlane.xlu0 %1216
      %v1218 = vrcp.pop %v1214
      %v1219 = vrcp.pop %v1217
      %v1220 = vmul.f32 %v1209, %v1218
      %v1221 = vmul.f32 %v1211, %v1219
      %v1222 = vpack.c.bf16 %v1221, %v1220
      %1223 = vrot.lane.b32.xlu0 %v621, 80
      %v1224 = vpop.permute.xlu0 %1223
      %v1226 = vsel %vm673, %v1222, 0
      %v1229 = vsel %vm701, %v1224, 0
      %1231 = vmatprep.subr.bf16.mxu0 0
      %1232 = vmatpush1.bf16.msra.mxu0 0
      %1233 = vmatprep.subr.bf16.mxu0 0
      %1234 = vmatpush1.bf16.msra.mxu0 0
      %1235 = vmatprep.subr.bf16.mxu0 0
      %1236 = vmatpush1.bf16.msra.mxu0 0
      %1237 = vmatprep.subr.bf16.mxu0 0
      %1238 = vmatpush1.bf16.msra.mxu0 0
      %1239 = vmatprep.subr.bf16.mxu0 0
      %1240 = vmatpush1.bf16.msra.mxu0 0
      %1241 = vmatprep.subr.bf16.mxu0 0
      %1242 = vmatpush1.bf16.msra.mxu0 0
      %1243 = vmatprep.subr.bf16.mxu0 0
      %1244 = vmatpush1.bf16.msra.mxu0 0
      %1245 = vmatprep.subr.bf16.mxu0 0
      %1246 = vmatpush1.bf16.msra.mxu0 %v1229
      %1247 = vmatprep.subr.bf16.mxu0 0
      %1248 = vmatpush2.bf16.msra.mxu0 0
      %1249 = vmatprep.subr.bf16.mxu0 0
      %1250 = vmatpush2.bf16.msra.mxu0 0
      %1251 = vmatprep.subr.bf16.mxu0 0
      %1252 = vmatpush2.bf16.msra.mxu0 0
      %1253 = vmatprep.subr.bf16.mxu0 0
      %1254 = vmatpush2.bf16.msra.mxu0 0
      %1255 = vmatprep.subr.bf16.mxu0 0
      %1256 = vmatpush2.bf16.msra.mxu0 0
      %1257 = vmatprep.subr.bf16.mxu0 0
      %1258 = vmatpush2.bf16.msra.mxu0 0
      %1259 = vmatprep.subr.bf16.mxu0 0
      %1260 = vmatpush2.bf16.msra.mxu0 0
      %1261 = vmatprep.subr.bf16.mxu0 0
      %1262 = vmatpush2.bf16.msra.mxu0 0
      %1263 = vmatprep.mubr.bf16.mxu0 0
      %1264 = vmatmul.mubr.bf16.gmra.mxu0 %v1226
      %v1265 = vpop.f32.mrf.mxu0
      %v1266 = vadd.f32 0.0, %v1265
      %v1267 = vpop.f32.mrf.mxu0
      %v1268 = vpop.f32.mrf.mxu0
      %v1269 = vadd.f32 0.0, %v1268
      %v1270 = vpop.f32.mrf.mxu0
      %1271 = vdwg.mxu0
      %v1272 = vpack.c.bf16 %v1269, %v1266
      %v1275 = vunpack.c.l.b16 %v513
      %v1276 = vunpack.c.l.b16 %v514
      %v1277 = vpack.c.b16 %v1276, %v1275
      %v1280 = vsel %vm625, %v1272, 0
      %1282 = vmatprep.subr.bf16.mxu0 0
      %1283 = vmatpush1.bf16.msra.mxu0 0
      %1284 = vmatprep.subr.bf16.mxu0 0
      %1285 = vmatpush1.bf16.msra.mxu0 0
      %1286 = vmatprep.subr.bf16.mxu0 0
      %1287 = vmatpush1.bf16.msra.mxu0 0
      %1288 = vmatprep.subr.bf16.mxu0 0
      %1289 = vmatpush1.bf16.msra.mxu0 0
      %1290 = vmatprep.subr.bf16.mxu0 0
      %1291 = vmatpush1.bf16.msra.mxu0 0
      %1292 = vmatprep.subr.bf16.mxu0 0
      %1293 = vmatpush1.bf16.msra.mxu0 0
      %1294 = vmatprep.subr.bf16.mxu0 0
      %1295 = vmatpush1.bf16.msra.mxu0 0
      %1296 = vmatprep.subr.bf16.mxu0 0
      %1297 = vmatpush1.bf16.msra.mxu0 %v1277
      %1298 = vmatprep.subr.bf16.mxu0 0
      %1299 = vmatpush2.bf16.msra.mxu0 0
      %1300 = vmatprep.subr.bf16.mxu0 0
      %1301 = vmatpush2.bf16.msra.mxu0 0
      %1302 = vmatprep.subr.bf16.mxu0 0
      %1303 = vmatpush2.bf16.msra.mxu0 0
      %1304 = vmatprep.subr.bf16.mxu0 0
      %1305 = vmatpush2.bf16.msra.mxu0 0
      %1306 = vmatprep.subr.bf16.mxu0 0
      %1307 = vmatpush2.bf16.msra.mxu0 0
      %1308 = vmatprep.subr.bf16.mxu0 0
      %1309 = vmatpush2.bf16.msra.mxu0 0
      %1310 = vmatprep.subr.bf16.mxu0 0
      %1311 = vmatpush2.bf16.msra.mxu0 0
      %1312 = vmatprep.subr.bf16.mxu0 0
      %1313 = vmatpush2.bf16.msra.mxu0 0
      %1314 = vmatprep.mubr.bf16.mxu0 0
      %1315 = vmatmul.mubr.bf16.gmra.mxu0 %v1280
      %v1316 = vpop.f32.mrf.mxu0
      %v1317 = vadd.f32 0.0, %v1316
      %v1318 = vpop.f32.mrf.mxu0
      %v1319 = vpop.f32.mrf.mxu0
      %v1320 = vadd.f32 0.0, %v1319
      %v1321 = vpop.f32.mrf.mxu0
      %1322 = vdwg.mxu0
      %v1323 = vadd.f32 %v1147, %v1317
      %v1324 = vadd.f32 %v1148, %v1320
      %v1326 = vlaneseq
      %v1327 = vshrl.u32 %v1326, 7
      %v1328 = vsub.s32 0, %v1327
      %v1329 = vrot.slane %v515, %v1328
      %v1331 = vadd.f32 %v1323, %v1329
      %v1332 = vadd.f32 %v1324, %v1329
      %v1333 = vadd.f32 %v496, %v1331
      %v1334 = vadd.f32 %v497, %v1332
      %v1335 = vsel %vm570, %v1333, 0.0
      %1336 = vadd.xlane.f32.xlu0 %v1335
      %v1337 = vpop.xlane.xlu0 %1336
      %vm1338 = vcmask 517120
      %v1339 = vsel %vm1338, %v1334, 0.0
      %1340 = vadd.xlane.f32.xlu0 %v1339
      %v1341 = vpop.xlane.xlu0 %1340
      %v1342 = vrcp.pop 64.0
      %v1343 = vmul.f32 %v1337, %v1342
      %v1344 = vmul.f32 %v1341, %v1342
      %v1345 = vsub.f32 %v1333, %v1343
      %v1346 = vsub.f32 %v1334, %v1344
      %v1347 = vmul.f32 %v1345, %v1345
      %v1348 = vmul.f32 %v1346, %v1346
      %v1349 = vsel %vm570, %v1347, 0.0
      %1350 = vadd.xlane.f32.xlu0 %v1349
      %v1351 = vpop.xlane.xlu0 %1350
      %v1352 = vsel %vm1338, %v1348, 0.0
      %1353 = vadd.xlane.f32.xlu0 %v1352
      %v1354 = vpop.xlane.xlu0 %1353
      %v1355 = vmul.f32 %v1351, %v1342
      %v1356 = vmul.f32 %v1354, %v1342
      %v1357 = vadd.f32 %v1355, 1e-05
      %v1358 = vadd.f32 %v1356, 1e-05
      %v1359 = vrsqrt.pop %v1357
      %v1360 = vrsqrt.pop %v1358
      %v1361 = vmul.f32 %v1345, %v1359
      %v1362 = vmul.f32 %v1346, %v1360
      %v1364 = vlaneseq
      %v1365 = vshrl.u32 %v1364, 7
      %v1366 = vsub.s32 0, %v1365
      %v1367 = vrot.slane %v516, %v1366
      %v1369 = vmul.f32 %v1361, %v1367
      %v1370 = vmul.f32 %v1362, %v1367
      %v1372 = vlaneseq
      %v1373 = vshrl.u32 %v1372, 7
      %v1374 = vsub.s32 0, %v1373
      %v1375 = vrot.slane %v517, %v1374
      %v1377 = vadd.f32 %v1369, %v1375
      %v1378 = vadd.f32 %v1370, %v1375
      %v1379 = vld [vmem:[%s7] sm:$0xf]
      %v1380 = vld [vmem:[%s7 + $0x4] sm:$0xf]
      %v1381 = vld [vmem:[%s7 + $0x8] sm:$0xf]
      %v1382 = vld [vmem:[%s7 + $0xc] sm:$0xf]
      %v1383 = vld [vmem:[%s7 + $0x10] sm:$0xf]
      %v1384 = vld [vmem:[%s7 + $0x14] sm:$0xf]
      %v1385 = vld [vmem:[%s7 + $0x18] sm:$0xf]
      %v1386 = vld [vmem:[%s7 + $0x1c] sm:$0xf]
      %v1387 = vld [vmem:[%s8] sm:$0x1]
      %v1388 = vld [vmem:[%s9] sm:$0xf]
      %v1389 = vld [vmem:[%s9 + $0x4] sm:$0xf]
      %v1390 = vld [vmem:[%s9 + $0x8] sm:$0xf]
      %v1391 = vld [vmem:[%s9 + $0xc] sm:$0xf]
      %v1392 = vld [vmem:[%s10] sm:$0x1]
      %v1393 = vld [vmem:[%s11] sm:$0x1]
      %v1394 = vld [vmem:[%s12] sm:$0x1]
      %v1395 = vpack.c.bf16 %v1378, %v1377
      %v1397 = vlaneseq
      %v1398 = vshrl.u32 %v1397, 7
      %v1399 = vsub.s32 0, %v1398
      %v1400 = vrot.slane %v1387, %v1399
      %v1410 = vunpack.c.l.b16 %v1379
      %v1411 = vunpack.c.l.b16 %v1380
      %v1412 = vunpack.c.l.b16 %v1381
      %v1413 = vunpack.c.l.b16 %v1382
      %v1414 = vunpack.c.l.b16 %v1383
      %v1415 = vunpack.c.l.b16 %v1384
      %v1416 = vunpack.c.l.b16 %v1385
      %v1417 = vunpack.c.l.b16 %v1386
      %v1418 = vpack.c.b16 %v1411, %v1410
      %v1419 = vpack.c.b16 %v1413, %v1412
      %v1420 = vpack.c.b16 %v1415, %v1414
      %v1421 = vpack.c.b16 %v1417, %v1416
      %v1427 = vsel %vm570, %v1395, 0
      %1429 = vmatprep.subr.bf16.mxu0 0
      %1430 = vmatpush1.bf16.msra.mxu0 0
      %1431 = vmatprep.subr.bf16.mxu0 0
      %1432 = vmatpush1.bf16.msra.mxu0 0
      %1433 = vmatprep.subr.bf16.mxu0 0
      %1434 = vmatpush1.bf16.msra.mxu0 0
      %1435 = vmatprep.subr.bf16.mxu0 0
      %1436 = vmatpush1.bf16.msra.mxu0 0
      %1437 = vmatprep.subr.bf16.mxu0 0
      %1438 = vmatpush1.bf16.msra.mxu0 %v1421
      %1439 = vmatprep.subr.bf16.mxu0 0
      %1440 = vmatpush1.bf16.msra.mxu0 %v1420
      %1441 = vmatprep.subr.bf16.mxu0 0
      %1442 = vmatpush1.bf16.msra.mxu0 %v1419
      %1443 = vmatprep.subr.bf16.mxu0 0
      %1444 = vmatpush1.bf16.msra.mxu0 %v1418
      %1445 = vmatprep.subr.bf16.mxu0 0
      %1446 = vmatpush2.bf16.msra.mxu0 0
      %1447 = vmatprep.subr.bf16.mxu0 0
      %1448 = vmatpush2.bf16.msra.mxu0 0
      %1449 = vmatprep.subr.bf16.mxu0 0
      %1450 = vmatpush2.bf16.msra.mxu0 0
      %1451 = vmatprep.subr.bf16.mxu0 0
      %1452 = vmatpush2.bf16.msra.mxu0 0
      %1453 = vmatprep.subr.bf16.mxu0 0
      %1454 = vmatpush2.bf16.msra.mxu0 0
      %1455 = vmatprep.subr.bf16.mxu0 0
      %1456 = vmatpush2.bf16.msra.mxu0 0
      %1457 = vmatprep.subr.bf16.mxu0 0
      %1458 = vmatpush2.bf16.msra.mxu0 0
      %1459 = vmatprep.subr.bf16.mxu0 0
      %1460 = vmatpush2.bf16.msra.mxu0 0
      %1461 = vmatprep.mubr.bf16.mxu0 0
      %1462 = vmatmul.mubr.bf16.gmra.mxu0 %v1427
      %v1463 = vpop.f32.mrf.mxu0
      %v1464 = vadd.f32 %v1400, %v1463
      %v1465 = vpop.f32.mrf.mxu0
      %v1466 = vpop.f32.mrf.mxu0
      %v1467 = vadd.f32 %v1400, %v1466
      %v1468 = vpop.f32.mrf.mxu0
      %1469 = vdwg.mxu0
      %v1470 = vmax.f32 %v1464, 0.0
      %v1471 = vmax.f32 %v1467, 0.0
      %v1472 = vpack.c.bf16 %v1471, %v1470
      %v1474 = vlaneseq
      %v1475 = vshrl.u32 %v1474, 7
      %v1476 = vsub.s32 0, %v1475
      %v1477 = vrot.slane %v1392, %v1476
      %v1483 = vunpack.c.l.b16 %v1388
      %v1484 = vunpack.c.l.b16 %v1389
      %v1485 = vunpack.c.l.b16 %v1390
      %v1486 = vunpack.c.l.b16 %v1391
      %v1487 = vpack.c.b16 %v1484, %v1483
      %v1488 = vpack.c.b16 %v1486, %v1485
      %vm1491 = vcmask 261120
      %v1493 = vsel %vm1491, %v1472, 0
      %1495 = vmatprep.subr.bf16.mxu0 0
      %1496 = vmatpush1.bf16.msra.mxu0 0
      %1497 = vmatprep.subr.bf16.mxu0 0
      %1498 = vmatpush1.bf16.msra.mxu0 0
      %1499 = vmatprep.subr.bf16.mxu0 0
      %1500 = vmatpush1.bf16.msra.mxu0 0
      %1501 = vmatprep.subr.bf16.mxu0 0
      %1502 = vmatpush1.bf16.msra.mxu0 0
      %1503 = vmatprep.subr.bf16.mxu0 0
      %1504 = vmatpush1.bf16.msra.mxu0 0
      %1505 = vmatprep.subr.bf16.mxu0 0
      %1506 = vmatpush1.bf16.msra.mxu0 0
      %1507 = vmatprep.subr.bf16.mxu0 0
      %1508 = vmatpush1.bf16.msra.mxu0 %v1488
      %1509 = vmatprep.subr.bf16.mxu0 0
      %1510 = vmatpush1.bf16.msra.mxu0 %v1487
      %1511 = vmatprep.subr.bf16.mxu0 0
      %1512 = vmatpush2.bf16.msra.mxu0 0
      %1513 = vmatprep.subr.bf16.mxu0 0
      %1514 = vmatpush2.bf16.msra.mxu0 0
      %1515 = vmatprep.subr.bf16.mxu0 0
      %1516 = vmatpush2.bf16.msra.mxu0 0
      %1517 = vmatprep.subr.bf16.mxu0 0
      %1518 = vmatpush2.bf16.msra.mxu0 0
      %1519 = vmatprep.subr.bf16.mxu0 0
      %1520 = vmatpush2.bf16.msra.mxu0 0
      %1521 = vmatprep.subr.bf16.mxu0 0
      %1522 = vmatpush2.bf16.msra.mxu0 0
      %1523 = vmatprep.subr.bf16.mxu0 0
      %1524 = vmatpush2.bf16.msra.mxu0 0
      %1525 = vmatprep.subr.bf16.mxu0 0
      %1526 = vmatpush2.bf16.msra.mxu0 0
      %1527 = vmatprep.mubr.bf16.mxu0 0
      %1528 = vmatmul.mubr.bf16.gmra.mxu0 %v1493
      %v1529 = vpop.f32.mrf.mxu0
      %v1530 = vadd.f32 %v1477, %v1529
      %v1531 = vpop.f32.mrf.mxu0
      %v1532 = vpop.f32.mrf.mxu0
      %v1533 = vadd.f32 %v1477, %v1532
      %v1534 = vpop.f32.mrf.mxu0
      %1535 = vdwg.mxu0
      %v1536 = vadd.f32 %v1377, %v1530
      %v1537 = vadd.f32 %v1378, %v1533
      %v1538 = vsel %vm570, %v1536, 0.0
      %1539 = vadd.xlane.f32.xlu0 %v1538
      %v1540 = vpop.xlane.xlu0 %1539
      %v1541 = vsel %vm1338, %v1537, 0.0
      %1542 = vadd.xlane.f32.xlu0 %v1541
      %v1543 = vpop.xlane.xlu0 %1542
      %v1544 = vmul.f32 %v1540, %v1342
      %v1545 = vmul.f32 %v1543, %v1342
      %v1546 = vsub.f32 %v1536, %v1544
      %v1547 = vsub.f32 %v1537, %v1545
      %v1548 = vmul.f32 %v1546, %v1546
      %v1549 = vmul.f32 %v1547, %v1547
      %v1550 = vsel %vm570, %v1548, 0.0
      %1551 = vadd.xlane.f32.xlu0 %v1550
      %v1552 = vpop.xlane.xlu0 %1551
      %v1553 = vsel %vm1338, %v1549, 0.0
      %1554 = vadd.xlane.f32.xlu0 %v1553
      %v1555 = vpop.xlane.xlu0 %1554
      %v1556 = vmul.f32 %v1552, %v1342
      %v1557 = vmul.f32 %v1555, %v1342
      %v1558 = vadd.f32 %v1556, 1e-05
      %v1559 = vadd.f32 %v1557, 1e-05
      %v1560 = vrsqrt.pop %v1558
      %v1561 = vrsqrt.pop %v1559
      %v1562 = vmul.f32 %v1546, %v1560
      %v1563 = vmul.f32 %v1547, %v1561
      %v1565 = vlaneseq
      %v1566 = vshrl.u32 %v1565, 7
      %v1567 = vsub.s32 0, %v1566
      %v1568 = vrot.slane %v1393, %v1567
      %v1570 = vmul.f32 %v1562, %v1568
      %v1571 = vmul.f32 %v1563, %v1568
      %v1573 = vlaneseq
      %v1574 = vshrl.u32 %v1573, 7
      %v1575 = vsub.s32 0, %v1574
      %v1576 = vrot.slane %v1394, %v1575
      %v1578 = vadd.f32 %v1570, %v1576
      %v1579 = vadd.f32 %v1571, %v1576
      %v1580 = vld [vmem:[%s13] sm:$0x1]
      %v1581 = vld [vmem:[%s14] sm:$0x1]
      %v1582 = vsel %vm570, %v1578, 0.0
      %1583 = vadd.xlane.f32.xlu0 %v1582
      %v1584 = vpop.xlane.xlu0 %1583
      %v1585 = vsel %vm1338, %v1579, 0.0
      %1586 = vadd.xlane.f32.xlu0 %v1585
      %v1587 = vpop.xlane.xlu0 %1586
      %v1588 = vmul.f32 %v1584, %v1342
      %v1589 = vmul.f32 %v1587, %v1342
      %v1590 = vsub.f32 %v1578, %v1588
      %v1591 = vsub.f32 %v1579, %v1589
      %v1592 = vmul.f32 %v1590, %v1590
      %v1593 = vmul.f32 %v1591, %v1591
      %v1594 = vsel %vm570, %v1592, 0.0
      %1595 = vadd.xlane.f32.xlu0 %v1594
      %v1596 = vpop.xlane.xlu0 %1595
      %v1597 = vsel %vm1338, %v1593, 0.0
      %1598 = vadd.xlane.f32.xlu0 %v1597
      %v1599 = vpop.xlane.xlu0 %1598
      %v1600 = vmul.f32 %v1596, %v1342
      %v1601 = vmul.f32 %v1599, %v1342
      %v1602 = vadd.f32 %v1600, 1e-05
      %v1603 = vadd.f32 %v1601, 1e-05
      %v1604 = vrsqrt.pop %v1602
      %v1605 = vrsqrt.pop %v1603
      %v1606 = vmul.f32 %v1590, %v1604
      %v1607 = vmul.f32 %v1591, %v1605
      %v1609 = vlaneseq
      %v1610 = vshrl.u32 %v1609, 7
      %v1611 = vsub.s32 0, %v1610
      %v1612 = vrot.slane %v1580, %v1611
      %v1614 = vmul.f32 %v1606, %v1612
      %v1615 = vmul.f32 %v1607, %v1612
      %v1617 = vlaneseq
      %v1618 = vshrl.u32 %v1617, 7
      %v1619 = vsub.s32 0, %v1618
      %v1620 = vrot.slane %v1581, %v1619
      %v1622 = vadd.f32 %v1614, %v1620
      %v1623 = vadd.f32 %v1615, %v1620
      %1624 = vst.msk [vmem:[%s494] sm:$0xff] %vm570, %v1622
      %1625 = vst.msk [vmem:[%s494 + $0x8] sm:$0x3] %vm1338, %v1623
      %p1626 = scmp.lt.s32.totalorder %s26, 1
      %s1627 = scalar_select %p1626, %s26, 1
      %s1628 = smul.addr %s1627, 2
      %s1629 = smul.addr %s1628, 8
      %s1630 = scalar_lea.vmem %s15, %s1629
      // Predicated region
      $region81: #{_lambda_.2} parent=79 // pred_check
        %p1631 = pneg %p364
      $region82: #{_lambda_.2} parent=79 // pred_check_branch
        %1633 = sbr.rel (%p1631) target = $region84
      $region83: #{_lambda_.2} parent=79 // pred_region
        _
      $region84: #{_lambda_.2} parent=79 // pred_fallthru
        _
    $region80: #{_lambda_.2} parent=5 // pred_fallthru
      _
    %p1634 = scmp.le.s32.totalorder 2, %s21
    // Predicated region
    $region85: #{_lambda_.2} parent=5 // pred_check
      %p1635 = pneg %p1634
    $region86: #{_lambda_.2} parent=5 // pred_check_branch
      %1637 = sbr.rel (%p1635) target = $region88
    $region87: #{_lambda_.2} parent=5 // pred_region
      %s1638 = ssub.s32 %s21, 2
      // Predicated region
      $region89: #{_lambda_.2} parent=87 // pred_check
        %p1639 = pneg %p370
      $region90: #{_lambda_.2} parent=87 // pred_check_branch
        %1641 = sbr.rel (%p1639) target = $region92
      $region91: #{_lambda_.2} parent=87 // pred_region
        %p1642 = scmp.lt.s32.totalorder %s27, 1
        %s1643 = scalar_select %p1642, %s27, 1
        %s1644 = smul.addr %s1643, 2
        %s1645 = smul.addr %s1644, 8
        %s1646 = scalar_lea.vmem %s15, %s1645
      $region92: #{_lambda_.2} parent=87 // pred_fallthru
        _
    $region88: #{_lambda_.2} parent=5 // pred_fallthru
      _
  $region6: #{_lambda_.2} parent=0 // loop_footer
    %s25 = sadd.s32 1, %s21
  $region7: #{_lambda_.2} parent=0 // loop_footer_branch
    %20 = sbr.rel target = $region3
  $region8: #{_lambda_.2} parent=0 // loop_exit
    _

// kernel: _lambda_.3
$region0: #{_lambda_.3}
  #allocation0 [shape = 'u32[]', space=smem, size = 0x4, offset = 0x4, fixed_abs, tag = 'smem constant byte address 0x4 - core index']
  #allocation1 [shape = 'u32[144,128]{1,0:T(1,128)}', space=vmem, size = 0x12000, scoped, tag = 'internal scratch']
  %s0 = inlined_call_operand.vmem [shape: f32[2,10,64], index: 0, kind: input, shape index: {}]
  %s1 = inlined_call_operand.vmem [shape: f32[2,10,64], index: 1, kind: input, shape index: {}]
  %s2 = inlined_call_operand.vmem [shape: bf16[64,192], index: 2, kind: input, shape index: {}]
  %s3 = inlined_call_operand.vmem [shape: f32[1,192], index: 3, kind: input, shape index: {}]
  %s4 = inlined_call_operand.vmem [shape: bf16[64,64], index: 4, kind: input, shape index: {}]
  %s5 = inlined_call_operand.vmem [shape: f32[1,64], index: 5, kind: input, shape index: {}]
  %s6 = inlined_call_operand.vmem [shape: f32[1,64], index: 6, kind: input, shape index: {}]
  %s7 = inlined_call_operand.vmem [shape: f32[1,64], index: 7, kind: input, shape index: {}]
  %s8 = inlined_call_operand.vmem [shape: bf16[64,64], index: 8, kind: input, shape index: {}]
  %s9 = inlined_call_operand.vmem [shape: f32[1,64], index: 9, kind: input, shape index: {}]
  %s10 = inlined_call_operand.vmem [shape: bf16[64,128], index: 10, kind: input, shape index: {}]
  %s11 = inlined_call_operand.vmem [shape: f32[1,128], index: 11, kind: input, shape index: {}]
  %s12 = inlined_call_operand.vmem [shape: bf16[64,64], index: 12, kind: input, shape index: {}]
  %s13 = inlined_call_operand.vmem [shape: f32[1,64], index: 13, kind: input, shape index: {}]
  %s14 = inlined_call_operand.vmem [shape: f32[1,64], index: 14, kind: input, shape index: {}]
  %s15 = inlined_call_operand.vmem [shape: f32[1,64], index: 15, kind: input, shape index: {}]
  %s16 = inlined_call_operand.vmem [shape: bf16[64,32], index: 16, kind: input, shape index: {}]
  %s17 = inlined_call_operand.vmem [shape: f32[1,32], index: 17, kind: input, shape index: {}]
  %s18 = inlined_call_operand.vmem [shape: bf16[32,64], index: 18, kind: input, shape index: {}]
  %s19 = inlined_call_operand.vmem [shape: f32[1,64], index: 19, kind: input, shape index: {}]
  %s20 = inlined_call_operand.vmem [shape: f32[1,64], index: 20, kind: input, shape index: {}]
  %s21 = inlined_call_operand.vmem [shape: f32[1,64], index: 21, kind: input, shape index: {}]
  %s22 = inlined_call_operand.vmem [shape: f32[1,64], index: 22, kind: input, shape index: {}]
  %s23 = inlined_call_operand.vmem [shape: f32[1,64], index: 23, kind: input, shape index: {}]
  %s24 = inlined_call_operand.vmem [shape: bf16[64,64], index: 24, kind: input, shape index: {}]
  %s25 = inlined_call_operand.vmem [shape: f32[1,64], index: 25, kind: input, shape index: {}]
  %s26 = inlined_call_operand.vmem [shape: f32[2,10,64], index: 26, kind: output, shape index: {}]
  %s27 = sld [smem:[#allocation0]]
  $region137: #{_lambda_.3} parent=0
    _
  %s29 = ssub.s32 1, %s27
  %s30 = scalar_select 0, %s29, %s27
  loop: start=0, step=1, limit=4
  $region2: #{_lambda_.3} parent=0 // loop_pre_header
    _
  $region3: #{_lambda_.3} parent=0 // loop_header
    %s32 = sphi 0, %s36
    %p33 = scmp.ge.s32.totalorder %s32, 4
    %s42 = sphi 0, %s44
    %s45 = sphi 0, %s42
    %s46 = sphi 0, %s45
    %s62 = sphi 0, %s46
    %s68 = sphi 0, %s70
    %s71 = sphi 0, %s68
    %s72 = sphi 0, %s71
    %s88 = sphi 0, %s72
    %s92 = sphi 0, %s92
    %s94 = sphi 0, %s92
    %s95 = sphi 0, %s94
    %s109 = sphi 0, %s95
    %s113 = sphi 0, %s113
    %s115 = sphi 0, %s113
    %s116 = sphi 0, %s115
    %s130 = sphi 0, %s116
    %s134 = sphi 0, %s134
    %s136 = sphi 0, %s134
    %s137 = sphi 0, %s136
    %s151 = sphi 0, %s137
    %s155 = sphi 0, %s155
    %s157 = sphi 0, %s155
    %s158 = sphi 0, %s157
    %s172 = sphi 0, %s158
    %s176 = sphi 0, %s176
    %s178 = sphi 0, %s176
    %s179 = sphi 0, %s178
    %s193 = sphi 0, %s179
    %s197 = sphi 0, %s197
    %s199 = sphi 0, %s197
    %s200 = sphi 0, %s199
    %s214 = sphi 0, %s200
    %s218 = sphi 0, %s218
    %s220 = sphi 0, %s218
    %s221 = sphi 0, %s220
    %s235 = sphi 0, %s221
    %s239 = sphi 0, %s239
    %s241 = sphi 0, %s239
    %s242 = sphi 0, %s241
    %s256 = sphi 0, %s242
    %s260 = sphi 0, %s260
    %s262 = sphi 0, %s260
    %s263 = sphi 0, %s262
    %s277 = sphi 0, %s263
    %s281 = sphi 0, %s281
    %s283 = sphi 0, %s281
    %s284 = sphi 0, %s283
    %s298 = sphi 0, %s284
    %s302 = sphi 0, %s302
    %s304 = sphi 0, %s302
    %s305 = sphi 0, %s304
    %s319 = sphi 0, %s305
    %s323 = sphi 0, %s323
    %s325 = sphi 0, %s323
    %s326 = sphi 0, %s325
    %s340 = sphi 0, %s326
    %s344 = sphi 0, %s344
    %s346 = sphi 0, %s344
    %s347 = sphi 0, %s346
    %s361 = sphi 0, %s347
    %s365 = sphi 0, %s365
    %s367 = sphi 0, %s365
    %s368 = sphi 0, %s367
    %s382 = sphi 0, %s368
    %s386 = sphi 0, %s386
    %s388 = sphi 0, %s386
    %s389 = sphi 0, %s388
    %s403 = sphi 0, %s389
    %s407 = sphi 0, %s407
    %s409 = sphi 0, %s407
    %s410 = sphi 0, %s409
    %s424 = sphi 0, %s410
    %s428 = sphi 0, %s428
    %s430 = sphi 0, %s428
    %s431 = sphi 0, %s430
    %s445 = sphi 0, %s431
    %s449 = sphi 0, %s449
    %s451 = sphi 0, %s449
    %s452 = sphi 0, %s451
    %s466 = sphi 0, %s452
    %s470 = sphi 0, %s470
    %s472 = sphi 0, %s470
    %s473 = sphi 0, %s472
    %s487 = sphi 0, %s473
    %s491 = sphi 0, %s491
    %s493 = sphi 0, %s491
    %s494 = sphi 0, %s493
    %s508 = sphi 0, %s494
    %s512 = sphi 0, %s512
    %s514 = sphi 0, %s512
    %s515 = sphi 0, %s514
    %s529 = sphi 0, %s515
    %s533 = sphi 0, %s533
    %s535 = sphi 0, %s533
    %s536 = sphi 0, %s535
    %s550 = sphi 0, %s536
    %s554 = sphi 0, %s554
    %s556 = sphi 0, %s554
    %s557 = sphi 0, %s556
    %s571 = sphi 0, %s557
    %s575 = sphi 0, %s575
    %s577 = sphi 0, %s575
    %s578 = sphi 0, %s577
    %s592 = sphi 0, %s578
    %s598 = sphi 0, %s600
    %s601 = sphi 0, %s598
    %s602 = sphi 0, %s601
    %s618 = sphi 0, %s602
  $region4: #{_lambda_.3} parent=0 // loop_header_branch
    %35 = sbr.rel (%p33) target = $region8
  $region5: #{_lambda_.3} parent=0 // loop_body
    %s37 = ssub.s32 %s32, 1
    %s38 = ssub.s32 %s32, 2
    %s39 = sadd.s32 %s32, 1
    %s40 = ssub.s32 %s32, %s39
    %p41 = scmp.eq.s32.totalorder %s40, 0
    %s43 = sadd.s32 %s42, 1
    %s44 = scalar_select %p41, %s42, %s43
    %p47 = pneg %p41
    %p48 = scmp.eq.s32.totalorder %s32, 1
    %p49 = por %p47, %p48
    %p50 = scmp.ne.s32.totalorder %s42, %s45
    %p51 = scmp.eq.s32.totalorder %s32, 0
    %p52 = por %p50, %p51
    %p53 = scmp.ne.s32.totalorder %s42, %s45
    %p54 = scmp.eq.s32.totalorder %s37, 1
    %p55 = por %p53, %p54
    %p56 = scmp.ne.s32.totalorder %s45, %s46
    %p57 = scmp.eq.s32.totalorder %s37, 0
    %p58 = por %p56, %p57
    %p59 = scmp.ne.s32.totalorder %s45, %s46
    %p60 = scmp.eq.s32.totalorder %s38, 1
    %p61 = por %p59, %p60
    %p63 = scmp.ne.s32.totalorder %s46, %s62
    %p64 = scmp.eq.s32.totalorder %s38, 0
    %p65 = por %p63, %p64
    %s66 = ssub.s32 %s32, %s39
    %p67 = scmp.eq.s32.totalorder %s66, 0
    %s69 = sadd.s32 %s68, 1
    %s70 = scalar_select %p67, %s68, %s69
    %p73 = pneg %p67
    %p74 = scmp.eq.s32.totalorder %s32, 1
    %p75 = por %p73, %p74
    %p76 = scmp.ne.s32.totalorder %s68, %s71
    %p77 = scmp.eq.s32.totalorder %s32, 0
    %p78 = por %p76, %p77
    %p79 = scmp.ne.s32.totalorder %s68, %s71
    %p80 = scmp.eq.s32.totalorder %s37, 1
    %p81 = por %p79, %p80
    %p82 = scmp.ne.s32.totalorder %s71, %s72
    %p83 = scmp.eq.s32.totalorder %s37, 0
    %p84 = por %p82, %p83
    %p85 = scmp.ne.s32.totalorder %s71, %s72
    %p86 = scmp.eq.s32.totalorder %s38, 1
    %p87 = por %p85, %p86
    %p89 = scmp.ne.s32.totalorder %s72, %s88
    %p90 = scmp.eq.s32.totalorder %s38, 0
    %p91 = por %p89, %p90
    %s93 = sadd.s32 %s92, 1
    %p96 = scmp.eq.s32.totalorder %s32, 1
    %p97 = scmp.ne.s32.totalorder %s92, %s94
    %p98 = scmp.eq.s32.totalorder %s32, 0
    %p99 = por %p97, %p98
    %p100 = scmp.ne.s32.totalorder %s92, %s94
    %p101 = scmp.eq.s32.totalorder %s37, 1
    %p102 = por %p100, %p101
    %p103 = scmp.ne.s32.totalorder %s94, %s95
    %p104 = scmp.eq.s32.totalorder %s37, 0
    %p105 = por %p103, %p104
    %p106 = scmp.ne.s32.totalorder %s94, %s95
    %p107 = scmp.eq.s32.totalorder %s38, 1
    %p108 = por %p106, %p107
    %p110 = scmp.ne.s32.totalorder %s95, %s109
    %p111 = scmp.eq.s32.totalorder %s38, 0
    %p112 = por %p110, %p111
    %s114 = sadd.s32 %s113, 1
    %p117 = scmp.eq.s32.totalorder %s32, 1
    %p118 = scmp.ne.s32.totalorder %s113, %s115
    %p119 = scmp.eq.s32.totalorder %s32, 0
    %p120 = por %p118, %p119
    %p121 = scmp.ne.s32.totalorder %s113, %s115
    %p122 = scmp.eq.s32.totalorder %s37, 1
    %p123 = por %p121, %p122
    %p124 = scmp.ne.s32.totalorder %s115, %s116
    %p125 = scmp.eq.s32.totalorder %s37, 0
    %p126 = por %p124, %p125
    %p127 = scmp.ne.s32.totalorder %s115, %s116
    %p128 = scmp.eq.s32.totalorder %s38, 1
    %p129 = por %p127, %p128
    %p131 = scmp.ne.s32.totalorder %s116, %s130
    %p132 = scmp.eq.s32.totalorder %s38, 0
    %p133 = por %p131, %p132
    %s135 = sadd.s32 %s134, 1
    %p138 = scmp.eq.s32.totalorder %s32, 1
    %p139 = scmp.ne.s32.totalorder %s134, %s136
    %p140 = scmp.eq.s32.totalorder %s32, 0
    %p141 = por %p139, %p140
    %p142 = scmp.ne.s32.totalorder %s134, %s136
    %p143 = scmp.eq.s32.totalorder %s37, 1
    %p144 = por %p142, %p143
    %p145 = scmp.ne.s32.totalorder %s136, %s137
    %p146 = scmp.eq.s32.totalorder %s37, 0
    %p147 = por %p145, %p146
    %p148 = scmp.ne.s32.totalorder %s136, %s137
    %p149 = scmp.eq.s32.totalorder %s38, 1
    %p150 = por %p148, %p149
    %p152 = scmp.ne.s32.totalorder %s137, %s151
    %p153 = scmp.eq.s32.totalorder %s38, 0
    %p154 = por %p152, %p153
    %s156 = sadd.s32 %s155, 1
    %p159 = scmp.eq.s32.totalorder %s32, 1
    %p160 = scmp.ne.s32.totalorder %s155, %s157
    %p161 = scmp.eq.s32.totalorder %s32, 0
    %p162 = por %p160, %p161
    %p163 = scmp.ne.s32.totalorder %s155, %s157
    %p164 = scmp.eq.s32.totalorder %s37, 1
    %p165 = por %p163, %p164
    %p166 = scmp.ne.s32.totalorder %s157, %s158
    %p167 = scmp.eq.s32.totalorder %s37, 0
    %p168 = por %p166, %p167
    %p169 = scmp.ne.s32.totalorder %s157, %s158
    %p170 = scmp.eq.s32.totalorder %s38, 1
    %p171 = por %p169, %p170
    %p173 = scmp.ne.s32.totalorder %s158, %s172
    %p174 = scmp.eq.s32.totalorder %s38, 0
    %p175 = por %p173, %p174
    %s177 = sadd.s32 %s176, 1
    %p180 = scmp.eq.s32.totalorder %s32, 1
    %p181 = scmp.ne.s32.totalorder %s176, %s178
    %p182 = scmp.eq.s32.totalorder %s32, 0
    %p183 = por %p181, %p182
    %p184 = scmp.ne.s32.totalorder %s176, %s178
    %p185 = scmp.eq.s32.totalorder %s37, 1
    %p186 = por %p184, %p185
    %p187 = scmp.ne.s32.totalorder %s178, %s179
    %p188 = scmp.eq.s32.totalorder %s37, 0
    %p189 = por %p187, %p188
    %p190 = scmp.ne.s32.totalorder %s178, %s179
    %p191 = scmp.eq.s32.totalorder %s38, 1
    %p192 = por %p190, %p191
    %p194 = scmp.ne.s32.totalorder %s179, %s193
    %p195 = scmp.eq.s32.totalorder %s38, 0
    %p196 = por %p194, %p195
    %s198 = sadd.s32 %s197, 1
    %p201 = scmp.eq.s32.totalorder %s32, 1
    %p202 = scmp.ne.s32.totalorder %s197, %s199
    %p203 = scmp.eq.s32.totalorder %s32, 0
    %p204 = por %p202, %p203
    %p205 = scmp.ne.s32.totalorder %s197, %s199
    %p206 = scmp.eq.s32.totalorder %s37, 1
    %p207 = por %p205, %p206
    %p208 = scmp.ne.s32.totalorder %s199, %s200
    %p209 = scmp.eq.s32.totalorder %s37, 0
    %p210 = por %p208, %p209
    %p211 = scmp.ne.s32.totalorder %s199, %s200
    %p212 = scmp.eq.s32.totalorder %s38, 1
    %p213 = por %p211, %p212
    %p215 = scmp.ne.s32.totalorder %s200, %s214
    %p216 = scmp.eq.s32.totalorder %s38, 0
    %p217 = por %p215, %p216
    %s219 = sadd.s32 %s218, 1
    %p222 = scmp.eq.s32.totalorder %s32, 1
    %p223 = scmp.ne.s32.totalorder %s218, %s220
    %p224 = scmp.eq.s32.totalorder %s32, 0
    %p225 = por %p223, %p224
    %p226 = scmp.ne.s32.totalorder %s218, %s220
    %p227 = scmp.eq.s32.totalorder %s37, 1
    %p228 = por %p226, %p227
    %p229 = scmp.ne.s32.totalorder %s220, %s221
    %p230 = scmp.eq.s32.totalorder %s37, 0
    %p231 = por %p229, %p230
    %p232 = scmp.ne.s32.totalorder %s220, %s221
    %p233 = scmp.eq.s32.totalorder %s38, 1
    %p234 = por %p232, %p233
    %p236 = scmp.ne.s32.totalorder %s221, %s235
    %p237 = scmp.eq.s32.totalorder %s38, 0
    %p238 = por %p236, %p237
    %s240 = sadd.s32 %s239, 1
    %p243 = scmp.eq.s32.totalorder %s32, 1
    %p244 = scmp.ne.s32.totalorder %s239, %s241
    %p245 = scmp.eq.s32.totalorder %s32, 0
    %p246 = por %p244, %p245
    %p247 = scmp.ne.s32.totalorder %s239, %s241
    %p248 = scmp.eq.s32.totalorder %s37, 1
    %p249 = por %p247, %p248
    %p250 = scmp.ne.s32.totalorder %s241, %s242
    %p251 = scmp.eq.s32.totalorder %s37, 0
    %p252 = por %p250, %p251
    %p253 = scmp.ne.s32.totalorder %s241, %s242
    %p254 = scmp.eq.s32.totalorder %s38, 1
    %p255 = por %p253, %p254
    %p257 = scmp.ne.s32.totalorder %s242, %s256
    %p258 = scmp.eq.s32.totalorder %s38, 0
    %p259 = por %p257, %p258
    %s261 = sadd.s32 %s260, 1
    %p264 = scmp.eq.s32.totalorder %s32, 1
    %p265 = scmp.ne.s32.totalorder %s260, %s262
    %p266 = scmp.eq.s32.totalorder %s32, 0
    %p267 = por %p265, %p266
    %p268 = scmp.ne.s32.totalorder %s260, %s262
    %p269 = scmp.eq.s32.totalorder %s37, 1
    %p270 = por %p268, %p269
    %p271 = scmp.ne.s32.totalorder %s262, %s263
    %p272 = scmp.eq.s32.totalorder %s37, 0
    %p273 = por %p271, %p272
    %p274 = scmp.ne.s32.totalorder %s262, %s263
    %p275 = scmp.eq.s32.totalorder %s38, 1
    %p276 = por %p274, %p275
    %p278 = scmp.ne.s32.totalorder %s263, %s277
    %p279 = scmp.eq.s32.totalorder %s38, 0
    %p280 = por %p278, %p279
    %s282 = sadd.s32 %s281, 1
    %p285 = scmp.eq.s32.totalorder %s32, 1
    %p286 = scmp.ne.s32.totalorder %s281, %s283
    %p287 = scmp.eq.s32.totalorder %s32, 0
    %p288 = por %p286, %p287
    %p289 = scmp.ne.s32.totalorder %s281, %s283
    %p290 = scmp.eq.s32.totalorder %s37, 1
    %p291 = por %p289, %p290
    %p292 = scmp.ne.s32.totalorder %s283, %s284
    %p293 = scmp.eq.s32.totalorder %s37, 0
    %p294 = por %p292, %p293
    %p295 = scmp.ne.s32.totalorder %s283, %s284
    %p296 = scmp.eq.s32.totalorder %s38, 1
    %p297 = por %p295, %p296
    %p299 = scmp.ne.s32.totalorder %s284, %s298
    %p300 = scmp.eq.s32.totalorder %s38, 0
    %p301 = por %p299, %p300
    %s303 = sadd.s32 %s302, 1
    %p306 = scmp.eq.s32.totalorder %s32, 1
    %p307 = scmp.ne.s32.totalorder %s302, %s304
    %p308 = scmp.eq.s32.totalorder %s32, 0
    %p309 = por %p307, %p308
    %p310 = scmp.ne.s32.totalorder %s302, %s304
    %p311 = scmp.eq.s32.totalorder %s37, 1
    %p312 = por %p310, %p311
    %p313 = scmp.ne.s32.totalorder %s304, %s305
    %p314 = scmp.eq.s32.totalorder %s37, 0
    %p315 = por %p313, %p314
    %p316 = scmp.ne.s32.totalorder %s304, %s305
    %p317 = scmp.eq.s32.totalorder %s38, 1
    %p318 = por %p316, %p317
    %p320 = scmp.ne.s32.totalorder %s305, %s319
    %p321 = scmp.eq.s32.totalorder %s38, 0
    %p322 = por %p320, %p321
    %s324 = sadd.s32 %s323, 1
    %p327 = scmp.eq.s32.totalorder %s32, 1
    %p328 = scmp.ne.s32.totalorder %s323, %s325
    %p329 = scmp.eq.s32.totalorder %s32, 0
    %p330 = por %p328, %p329
    %p331 = scmp.ne.s32.totalorder %s323, %s325
    %p332 = scmp.eq.s32.totalorder %s37, 1
    %p333 = por %p331, %p332
    %p334 = scmp.ne.s32.totalorder %s325, %s326
    %p335 = scmp.eq.s32.totalorder %s37, 0
    %p336 = por %p334, %p335
    %p337 = scmp.ne.s32.totalorder %s325, %s326
    %p338 = scmp.eq.s32.totalorder %s38, 1
    %p339 = por %p337, %p338
    %p341 = scmp.ne.s32.totalorder %s326, %s340
    %p342 = scmp.eq.s32.totalorder %s38, 0
    %p343 = por %p341, %p342
    %s345 = sadd.s32 %s344, 1
    %p348 = scmp.eq.s32.totalorder %s32, 1
    %p349 = scmp.ne.s32.totalorder %s344, %s346
    %p350 = scmp.eq.s32.totalorder %s32, 0
    %p351 = por %p349, %p350
    %p352 = scmp.ne.s32.totalorder %s344, %s346
    %p353 = scmp.eq.s32.totalorder %s37, 1
    %p354 = por %p352, %p353
    %p355 = scmp.ne.s32.totalorder %s346, %s347
    %p356 = scmp.eq.s32.totalorder %s37, 0
    %p357 = por %p355, %p356
    %p358 = scmp.ne.s32.totalorder %s346, %s347
    %p359 = scmp.eq.s32.totalorder %s38, 1
    %p360 = por %p358, %p359
    %p362 = scmp.ne.s32.totalorder %s347, %s361
    %p363 = scmp.eq.s32.totalorder %s38, 0
    %p364 = por %p362, %p363
    %s366 = sadd.s32 %s365, 1
    %p369 = scmp.eq.s32.totalorder %s32, 1
    %p370 = scmp.ne.s32.totalorder %s365, %s367
    %p371 = scmp.eq.s32.totalorder %s32, 0
    %p372 = por %p370, %p371
    %p373 = scmp.ne.s32.totalorder %s365, %s367
    %p374 = scmp.eq.s32.totalorder %s37, 1
    %p375 = por %p373, %p374
    %p376 = scmp.ne.s32.totalorder %s367, %s368
    %p377 = scmp.eq.s32.totalorder %s37, 0
    %p378 = por %p376, %p377
    %p379 = scmp.ne.s32.totalorder %s367, %s368
    %p380 = scmp.eq.s32.totalorder %s38, 1
    %p381 = por %p379, %p380
    %p383 = scmp.ne.s32.totalorder %s368, %s382
    %p384 = scmp.eq.s32.totalorder %s38, 0
    %p385 = por %p383, %p384
    %s387 = sadd.s32 %s386, 1
    %p390 = scmp.eq.s32.totalorder %s32, 1
    %p391 = scmp.ne.s32.totalorder %s386, %s388
    %p392 = scmp.eq.s32.totalorder %s32, 0
    %p393 = por %p391, %p392
    %p394 = scmp.ne.s32.totalorder %s386, %s388
    %p395 = scmp.eq.s32.totalorder %s37, 1
    %p396 = por %p394, %p395
    %p397 = scmp.ne.s32.totalorder %s388, %s389
    %p398 = scmp.eq.s32.totalorder %s37, 0
    %p399 = por %p397, %p398
    %p400 = scmp.ne.s32.totalorder %s388, %s389
    %p401 = scmp.eq.s32.totalorder %s38, 1
    %p402 = por %p400, %p401
    %p404 = scmp.ne.s32.totalorder %s389, %s403
    %p405 = scmp.eq.s32.totalorder %s38, 0
    %p406 = por %p404, %p405
    %s408 = sadd.s32 %s407, 1
    %p411 = scmp.eq.s32.totalorder %s32, 1
    %p412 = scmp.ne.s32.totalorder %s407, %s409
    %p413 = scmp.eq.s32.totalorder %s32, 0
    %p414 = por %p412, %p413
    %p415 = scmp.ne.s32.totalorder %s407, %s409
    %p416 = scmp.eq.s32.totalorder %s37, 1
    %p417 = por %p415, %p416
    %p418 = scmp.ne.s32.totalorder %s409, %s410
    %p419 = scmp.eq.s32.totalorder %s37, 0
    %p420 = por %p418, %p419
    %p421 = scmp.ne.s32.totalorder %s409, %s410
    %p422 = scmp.eq.s32.totalorder %s38, 1
    %p423 = por %p421, %p422
    %p425 = scmp.ne.s32.totalorder %s410, %s424
    %p426 = scmp.eq.s32.totalorder %s38, 0
    %p427 = por %p425, %p426
    %s429 = sadd.s32 %s428, 1
    %p432 = scmp.eq.s32.totalorder %s32, 1
    %p433 = scmp.ne.s32.totalorder %s428, %s430
    %p434 = scmp.eq.s32.totalorder %s32, 0
    %p435 = por %p433, %p434
    %p436 = scmp.ne.s32.totalorder %s428, %s430
    %p437 = scmp.eq.s32.totalorder %s37, 1
    %p438 = por %p436, %p437
    %p439 = scmp.ne.s32.totalorder %s430, %s431
    %p440 = scmp.eq.s32.totalorder %s37, 0
    %p441 = por %p439, %p440
    %p442 = scmp.ne.s32.totalorder %s430, %s431
    %p443 = scmp.eq.s32.totalorder %s38, 1
    %p444 = por %p442, %p443
    %p446 = scmp.ne.s32.totalorder %s431, %s445
    %p447 = scmp.eq.s32.totalorder %s38, 0
    %p448 = por %p446, %p447
    %s450 = sadd.s32 %s449, 1
    %p453 = scmp.eq.s32.totalorder %s32, 1
    %p454 = scmp.ne.s32.totalorder %s449, %s451
    %p455 = scmp.eq.s32.totalorder %s32, 0
    %p456 = por %p454, %p455
    %p457 = scmp.ne.s32.totalorder %s449, %s451
    %p458 = scmp.eq.s32.totalorder %s37, 1
    %p459 = por %p457, %p458
    %p460 = scmp.ne.s32.totalorder %s451, %s452
    %p461 = scmp.eq.s32.totalorder %s37, 0
    %p462 = por %p460, %p461
    %p463 = scmp.ne.s32.totalorder %s451, %s452
    %p464 = scmp.eq.s32.totalorder %s38, 1
    %p465 = por %p463, %p464
    %p467 = scmp.ne.s32.totalorder %s452, %s466
    %p468 = scmp.eq.s32.totalorder %s38, 0
    %p469 = por %p467, %p468
    %s471 = sadd.s32 %s470, 1
    %p474 = scmp.eq.s32.totalorder %s32, 1
    %p475 = scmp.ne.s32.totalorder %s470, %s472
    %p476 = scmp.eq.s32.totalorder %s32, 0
    %p477 = por %p475, %p476
    %p478 = scmp.ne.s32.totalorder %s470, %s472
    %p479 = scmp.eq.s32.totalorder %s37, 1
    %p480 = por %p478, %p479
    %p481 = scmp.ne.s32.totalorder %s472, %s473
    %p482 = scmp.eq.s32.totalorder %s37, 0
    %p483 = por %p481, %p482
    %p484 = scmp.ne.s32.totalorder %s472, %s473
    %p485 = scmp.eq.s32.totalorder %s38, 1
    %p486 = por %p484, %p485
    %p488 = scmp.ne.s32.totalorder %s473, %s487
    %p489 = scmp.eq.s32.totalorder %s38, 0
    %p490 = por %p488, %p489
    %s492 = sadd.s32 %s491, 1
    %p495 = scmp.eq.s32.totalorder %s32, 1
    %p496 = scmp.ne.s32.totalorder %s491, %s493
    %p497 = scmp.eq.s32.totalorder %s32, 0
    %p498 = por %p496, %p497
    %p499 = scmp.ne.s32.totalorder %s491, %s493
    %p500 = scmp.eq.s32.totalorder %s37, 1
    %p501 = por %p499, %p500
    %p502 = scmp.ne.s32.totalorder %s493, %s494
    %p503 = scmp.eq.s32.totalorder %s37, 0
    %p504 = por %p502, %p503
    %p505 = scmp.ne.s32.totalorder %s493, %s494
    %p506 = scmp.eq.s32.totalorder %s38, 1
    %p507 = por %p505, %p506
    %p509 = scmp.ne.s32.totalorder %s494, %s508
    %p510 = scmp.eq.s32.totalorder %s38, 0
    %p511 = por %p509, %p510
    %s513 = sadd.s32 %s512, 1
    %p516 = scmp.eq.s32.totalorder %s32, 1
    %p517 = scmp.ne.s32.totalorder %s512, %s514
    %p518 = scmp.eq.s32.totalorder %s32, 0
    %p519 = por %p517, %p518
    %p520 = scmp.ne.s32.totalorder %s512, %s514
    %p521 = scmp.eq.s32.totalorder %s37, 1
    %p522 = por %p520, %p521
    %p523 = scmp.ne.s32.totalorder %s514, %s515
    %p524 = scmp.eq.s32.totalorder %s37, 0
    %p525 = por %p523, %p524
    %p526 = scmp.ne.s32.totalorder %s514, %s515
    %p527 = scmp.eq.s32.totalorder %s38, 1
    %p528 = por %p526, %p527
    %p530 = scmp.ne.s32.totalorder %s515, %s529
    %p531 = scmp.eq.s32.totalorder %s38, 0
    %p532 = por %p530, %p531
    %s534 = sadd.s32 %s533, 1
    %p537 = scmp.eq.s32.totalorder %s32, 1
    %p538 = scmp.ne.s32.totalorder %s533, %s535
    %p539 = scmp.eq.s32.totalorder %s32, 0
    %p540 = por %p538, %p539
    %p541 = scmp.ne.s32.totalorder %s533, %s535
    %p542 = scmp.eq.s32.totalorder %s37, 1
    %p543 = por %p541, %p542
    %p544 = scmp.ne.s32.totalorder %s535, %s536
    %p545 = scmp.eq.s32.totalorder %s37, 0
    %p546 = por %p544, %p545
    %p547 = scmp.ne.s32.totalorder %s535, %s536
    %p548 = scmp.eq.s32.totalorder %s38, 1
    %p549 = por %p547, %p548
    %p551 = scmp.ne.s32.totalorder %s536, %s550
    %p552 = scmp.eq.s32.totalorder %s38, 0
    %p553 = por %p551, %p552
    %s555 = sadd.s32 %s554, 1
    %p558 = scmp.eq.s32.totalorder %s32, 1
    %p559 = scmp.ne.s32.totalorder %s554, %s556
    %p560 = scmp.eq.s32.totalorder %s32, 0
    %p561 = por %p559, %p560
    %p562 = scmp.ne.s32.totalorder %s554, %s556
    %p563 = scmp.eq.s32.totalorder %s37, 1
    %p564 = por %p562, %p563
    %p565 = scmp.ne.s32.totalorder %s556, %s557
    %p566 = scmp.eq.s32.totalorder %s37, 0
    %p567 = por %p565, %p566
    %p568 = scmp.ne.s32.totalorder %s556, %s557
    %p569 = scmp.eq.s32.totalorder %s38, 1
    %p570 = por %p568, %p569
    %p572 = scmp.ne.s32.totalorder %s557, %s571
    %p573 = scmp.eq.s32.totalorder %s38, 0
    %p574 = por %p572, %p573
    %s576 = sadd.s32 %s575, 1
    %p579 = scmp.eq.s32.totalorder %s32, 1
    %p580 = scmp.ne.s32.totalorder %s575, %s577
    %p581 = scmp.eq.s32.totalorder %s32, 0
    %p582 = por %p580, %p581
    %p583 = scmp.ne.s32.totalorder %s575, %s577
    %p584 = scmp.eq.s32.totalorder %s37, 1
    %p585 = por %p583, %p584
    %p586 = scmp.ne.s32.totalorder %s577, %s578
    %p587 = scmp.eq.s32.totalorder %s37, 0
    %p588 = por %p586, %p587
    %p589 = scmp.ne.s32.totalorder %s577, %s578
    %p590 = scmp.eq.s32.totalorder %s38, 1
    %p591 = por %p589, %p590
    %p593 = scmp.ne.s32.totalorder %s578, %s592
    %p594 = scmp.eq.s32.totalorder %s38, 0
    %p595 = por %p593, %p594
    %s596 = ssub.s32 %s32, %s39
    %p597 = scmp.eq.s32.totalorder %s596, 0
    %s599 = sadd.s32 %s598, 1
    %s600 = scalar_select %p597, %s598, %s599
    %p603 = pneg %p597
    %p604 = scmp.eq.s32.totalorder %s32, 1
    %p605 = por %p603, %p604
    %p606 = scmp.ne.s32.totalorder %s598, %s601
    %p607 = scmp.eq.s32.totalorder %s32, 0
    %p608 = por %p606, %p607
    %p609 = scmp.ne.s32.totalorder %s598, %s601
    %p610 = scmp.eq.s32.totalorder %s37, 1
    %p611 = por %p609, %p610
    %p612 = scmp.ne.s32.totalorder %s601, %s602
    %p613 = scmp.eq.s32.totalorder %s37, 0
    %p614 = por %p612, %p613
    %p615 = scmp.ne.s32.totalorder %s601, %s602
    %p616 = scmp.eq.s32.totalorder %s38, 1
    %p617 = por %p615, %p616
    %p619 = scmp.ne.s32.totalorder %s602, %s618
    %p620 = scmp.eq.s32.totalorder %s38, 0
    %p621 = por %p619, %p620
    %p622 = scmp.le.s32.totalorder 1, %s32
    %p623 = scmp.lt.s32.totalorder %s32, 3
    %p624 = pnand %p622, %p623
    %p625 = pneg %p624
    // Predicated region
    $region9: #{_lambda_.3} parent=5 // pred_check
      _
    $region10: #{_lambda_.3} parent=5 // pred_check_branch
      %627 = sbr.rel (%p624) target = $region12
    $region11: #{_lambda_.3} parent=5 // pred_region
      %s628 = ssub.s32 %s32, 1
      // Predicated region
      $region13: #{_lambda_.3} parent=11 // pred_check
        %p629 = pneg %p105
      $region14: #{_lambda_.3} parent=11 // pred_check_branch
        %631 = sbr.rel (%p629) target = $region16
      $region15: #{_lambda_.3} parent=11 // pred_region
        _
      $region16: #{_lambda_.3} parent=11 // pred_fallthru
        _
      // Predicated region
      $region17: #{_lambda_.3} parent=11 // pred_check
        %p632 = pneg %p126
      $region18: #{_lambda_.3} parent=11 // pred_check_branch
        %634 = sbr.rel (%p632) target = $region20
      $region19: #{_lambda_.3} parent=11 // pred_region
        _
      $region20: #{_lambda_.3} parent=11 // pred_fallthru
        _
      // Predicated region
      $region21: #{_lambda_.3} parent=11 // pred_check
        %p635 = pneg %p147
      $region22: #{_lambda_.3} parent=11 // pred_check_branch
        %637 = sbr.rel (%p635) target = $region24
      $region23: #{_lambda_.3} parent=11 // pred_region
        _
      $region24: #{_lambda_.3} parent=11 // pred_fallthru
        _
      // Predicated region
      $region25: #{_lambda_.3} parent=11 // pred_check
        %p638 = pneg %p168
      $region26: #{_lambda_.3} parent=11 // pred_check_branch
        %640 = sbr.rel (%p638) target = $region28
      $region27: #{_lambda_.3} parent=11 // pred_region
        _
      $region28: #{_lambda_.3} parent=11 // pred_fallthru
        _
      // Predicated region
      $region29: #{_lambda_.3} parent=11 // pred_check
        %p641 = pneg %p189
      $region30: #{_lambda_.3} parent=11 // pred_check_branch
        %643 = sbr.rel (%p641) target = $region32
      $region31: #{_lambda_.3} parent=11 // pred_region
        _
      $region32: #{_lambda_.3} parent=11 // pred_fallthru
        _
      // Predicated region
      $region33: #{_lambda_.3} parent=11 // pred_check
        %p644 = pneg %p210
      $region34: #{_lambda_.3} parent=11 // pred_check_branch
        %646 = sbr.rel (%p644) target = $region36
      $region35: #{_lambda_.3} parent=11 // pred_region
        _
      $region36: #{_lambda_.3} parent=11 // pred_fallthru
        _
      // Predicated region
      $region37: #{_lambda_.3} parent=11 // pred_check
        %p647 = pneg %p231
      $region38: #{_lambda_.3} parent=11 // pred_check_branch
        %649 = sbr.rel (%p647) target = $region40
      $region39: #{_lambda_.3} parent=11 // pred_region
        _
      $region40: #{_lambda_.3} parent=11 // pred_fallthru
        _
      // Predicated region
      $region41: #{_lambda_.3} parent=11 // pred_check
        %p650 = pneg %p252
      $region42: #{_lambda_.3} parent=11 // pred_check_branch
        %652 = sbr.rel (%p650) target = $region44
      $region43: #{_lambda_.3} parent=11 // pred_region
        _
      $region44: #{_lambda_.3} parent=11 // pred_fallthru
        _
      // Predicated region
      $region45: #{_lambda_.3} parent=11 // pred_check
        %p653 = pneg %p273
      $region46: #{_lambda_.3} parent=11 // pred_check_branch
        %655 = sbr.rel (%p653) target = $region48
      $region47: #{_lambda_.3} parent=11 // pred_region
        _
      $region48: #{_lambda_.3} parent=11 // pred_fallthru
        _
      // Predicated region
      $region49: #{_lambda_.3} parent=11 // pred_check
        %p656 = pneg %p294
      $region50: #{_lambda_.3} parent=11 // pred_check_branch
        %658 = sbr.rel (%p656) target = $region52
      $region51: #{_lambda_.3} parent=11 // pred_region
        _
      $region52: #{_lambda_.3} parent=11 // pred_fallthru
        _
      // Predicated region
      $region53: #{_lambda_.3} parent=11 // pred_check
        %p659 = pneg %p315
      $region54: #{_lambda_.3} parent=11 // pred_check_branch
        %661 = sbr.rel (%p659) target = $region56
      $region55: #{_lambda_.3} parent=11 // pred_region
        _
      $region56: #{_lambda_.3} parent=11 // pred_fallthru
        _
      // Predicated region
      $region57: #{_lambda_.3} parent=11 // pred_check
        %p662 = pneg %p336
      $region58: #{_lambda_.3} parent=11 // pred_check_branch
        %664 = sbr.rel (%p662) target = $region60
      $region59: #{_lambda_.3} parent=11 // pred_region
        _
      $region60: #{_lambda_.3} parent=11 // pred_fallthru
        _
      // Predicated region
      $region61: #{_lambda_.3} parent=11 // pred_check
        %p665 = pneg %p357
      $region62: #{_lambda_.3} parent=11 // pred_check_branch
        %667 = sbr.rel (%p665) target = $region64
      $region63: #{_lambda_.3} parent=11 // pred_region
        _
      $region64: #{_lambda_.3} parent=11 // pred_fallthru
        _
      // Predicated region
      $region65: #{_lambda_.3} parent=11 // pred_check
        %p668 = pneg %p378
      $region66: #{_lambda_.3} parent=11 // pred_check_branch
        %670 = sbr.rel (%p668) target = $region68
      $region67: #{_lambda_.3} parent=11 // pred_region
        _
      $region68: #{_lambda_.3} parent=11 // pred_fallthru
        _
      // Predicated region
      $region69: #{_lambda_.3} parent=11 // pred_check
        %p671 = pneg %p399
      $region70: #{_lambda_.3} parent=11 // pred_check_branch
        %673 = sbr.rel (%p671) target = $region72
      $region71: #{_lambda_.3} parent=11 // pred_region
        _
      $region72: #{_lambda_.3} parent=11 // pred_fallthru
        _
      // Predicated region
      $region73: #{_lambda_.3} parent=11 // pred_check
        %p674 = pneg %p420
      $region74: #{_lambda_.3} parent=11 // pred_check_branch
        %676 = sbr.rel (%p674) target = $region76
      $region75: #{_lambda_.3} parent=11 // pred_region
        _
      $region76: #{_lambda_.3} parent=11 // pred_fallthru
        _
      // Predicated region
      $region77: #{_lambda_.3} parent=11 // pred_check
        %p677 = pneg %p441
      $region78: #{_lambda_.3} parent=11 // pred_check_branch
        %679 = sbr.rel (%p677) target = $region80
      $region79: #{_lambda_.3} parent=11 // pred_region
        _
      $region80: #{_lambda_.3} parent=11 // pred_fallthru
        _
      // Predicated region
      $region81: #{_lambda_.3} parent=11 // pred_check
        %p680 = pneg %p462
      $region82: #{_lambda_.3} parent=11 // pred_check_branch
        %682 = sbr.rel (%p680) target = $region84
      $region83: #{_lambda_.3} parent=11 // pred_region
        _
      $region84: #{_lambda_.3} parent=11 // pred_fallthru
        _
      // Predicated region
      $region85: #{_lambda_.3} parent=11 // pred_check
        %p683 = pneg %p483
      $region86: #{_lambda_.3} parent=11 // pred_check_branch
        %685 = sbr.rel (%p683) target = $region88
      $region87: #{_lambda_.3} parent=11 // pred_region
        _
      $region88: #{_lambda_.3} parent=11 // pred_fallthru
        _
      // Predicated region
      $region89: #{_lambda_.3} parent=11 // pred_check
        %p686 = pneg %p504
      $region90: #{_lambda_.3} parent=11 // pred_check_branch
        %688 = sbr.rel (%p686) target = $region92
      $region91: #{_lambda_.3} parent=11 // pred_region
        _
      $region92: #{_lambda_.3} parent=11 // pred_fallthru
        _
      // Predicated region
      $region93: #{_lambda_.3} parent=11 // pred_check
        %p689 = pneg %p525
      $region94: #{_lambda_.3} parent=11 // pred_check_branch
        %691 = sbr.rel (%p689) target = $region96
      $region95: #{_lambda_.3} parent=11 // pred_region
        _
      $region96: #{_lambda_.3} parent=11 // pred_fallthru
        _
      // Predicated region
      $region97: #{_lambda_.3} parent=11 // pred_check
        %p692 = pneg %p546
      $region98: #{_lambda_.3} parent=11 // pred_check_branch
        %694 = sbr.rel (%p692) target = $region100
      $region99: #{_lambda_.3} parent=11 // pred_region
        _
      $region100: #{_lambda_.3} parent=11 // pred_fallthru
        _
      // Predicated region
      $region101: #{_lambda_.3} parent=11 // pred_check
        %p695 = pneg %p567
      $region102: #{_lambda_.3} parent=11 // pred_check_branch
        %697 = sbr.rel (%p695) target = $region104
      $region103: #{_lambda_.3} parent=11 // pred_region
        _
      $region104: #{_lambda_.3} parent=11 // pred_fallthru
        _
      // Predicated region
      $region105: #{_lambda_.3} parent=11 // pred_check
        %p698 = pneg %p588
      $region106: #{_lambda_.3} parent=11 // pred_check_branch
        %700 = sbr.rel (%p698) target = $region108
      $region107: #{_lambda_.3} parent=11 // pred_region
        _
      $region108: #{_lambda_.3} parent=11 // pred_fallthru
        _
    $region12: #{_lambda_.3} parent=5 // pred_fallthru
      _
    %p701 = scmp.lt.s32.totalorder %s32, 2
    // Predicated region
    $region109: #{_lambda_.3} parent=5 // pred_check
      %p702 = pneg %p701
    $region110: #{_lambda_.3} parent=5 // pred_check_branch
      %704 = sbr.rel (%p702) target = $region112
    $region111: #{_lambda_.3} parent=5 // pred_region
      // Predicated region
      $region113: #{_lambda_.3} parent=111 // pred_check
        %p705 = pneg %p52
      $region114: #{_lambda_.3} parent=111 // pred_check_branch
        %707 = sbr.rel (%p705) target = $region116
      $region115: #{_lambda_.3} parent=111 // pred_region
        %p708 = scmp.lt.s32.totalorder %s32, 1
        %s709 = scalar_select %p708, %s32, 1
        %s710 = smul.addr %s709, 2
        %s711 = smul.addr %s710, 8
        %s712 = scalar_lea.vmem %s0, %s711
      $region116: #{_lambda_.3} parent=111 // pred_fallthru
        _
      // Predicated region
      $region117: #{_lambda_.3} parent=111 // pred_check
        %p713 = pneg %p78
      $region118: #{_lambda_.3} parent=111 // pred_check_branch
        %715 = sbr.rel (%p713) target = $region120
      $region119: #{_lambda_.3} parent=111 // pred_region
        %p716 = scmp.lt.s32.totalorder %s32, 1
        %s717 = scalar_select %p716, %s32, 1
        %s718 = smul.addr %s717, 2
        %s719 = smul.addr %s718, 8
        %s720 = scalar_lea.vmem %s1, %s719
      $region120: #{_lambda_.3} parent=111 // pred_fallthru
        _
    $region112: #{_lambda_.3} parent=5 // pred_fallthru
      _
    %p721 = scmp.le.s32.totalorder 1, %s32
    %p722 = scmp.lt.s32.totalorder %s32, 3
    %p723 = pnand %p721, %p722
    %p724 = pneg %p723
    // Predicated region
    $region121: #{_lambda_.3} parent=5 // pred_check
      _
    $region122: #{_lambda_.3} parent=5 // pred_check_branch
      %726 = sbr.rel (%p723) target = $region124
    $region123: #{_lambda_.3} parent=5 // pred_region
      %s727 = ssub.s32 %s32, 1
      %p728 = scmp.lt.s32.totalorder %s37, 1
      %s729 = scalar_select %p728, %s37, 1
      %s730 = smul.addr %s729, 2
      %s731 = smul.addr %s730, 8
      %s732 = scalar_lea.vmem %s0, %s731
      %p733 = pneg %p58
      %p734 = pneg %p55
      %p735 = scmp.lt.s32.totalorder %s37, 1
      %s736 = scalar_select %p735, %s37, 1
      %s737 = smul.addr %s736, 2
      %s738 = smul.addr %s737, 8
      %s739 = scalar_lea.vmem %s1, %s738
      %p740 = pneg %p84
      %p741 = pneg %p81
      %p742 = pneg %p105
      %p743 = pneg %p102
      %p744 = pneg %p126
      %p745 = pneg %p123
      %p746 = pneg %p147
      %p747 = pneg %p144
      %p748 = pneg %p168
      %p749 = pneg %p165
      %p750 = pneg %p189
      %p751 = pneg %p186
      %p752 = pneg %p210
      %p753 = pneg %p207
      %p754 = pneg %p231
      %p755 = pneg %p228
      %p756 = pneg %p252
      %p757 = pneg %p249
      %p758 = pneg %p273
      %p759 = pneg %p270
      %p760 = pneg %p294
      %p761 = pneg %p291
      %p762 = pneg %p315
      %p763 = pneg %p312
      %p764 = pneg %p336
      %p765 = pneg %p333
      %p766 = pneg %p357
      %p767 = pneg %p354
      %p768 = pneg %p378
      %p769 = pneg %p375
      %p770 = pneg %p399
      %p771 = pneg %p396
      %p772 = pneg %p420
      %p773 = pneg %p417
      %p774 = pneg %p441
      %p775 = pneg %p438
      %p776 = pneg %p462
      %p777 = pneg %p459
      %p778 = pneg %p483
      %p779 = pneg %p480
      %p780 = pneg %p504
      %p781 = pneg %p501
      %p782 = pneg %p525
      %p783 = pneg %p522
      %p784 = pneg %p546
      %p785 = pneg %p543
      %p786 = pneg %p567
      %p787 = pneg %p564
      %p788 = pneg %p588
      %p789 = pneg %p585
      %p790 = pneg %p614
      %p791 = pneg %p611
      %p792 = scmp.lt.s32.totalorder %s37, 1
      %s793 = scalar_select %p792, %s37, 1
      %s794 = smul.addr %s793, 2
      %s795 = smul.addr %s794, 8
      %s796 = scalar_lea.vmem %s26, %s795
      %p797 = scmp.lt.s32.totalorder %s37, 1
      %s798 = scalar_select %p797, %s37, 1
      %s799 = smul.addr %s798, 2
      %s800 = smul.addr %s799, 8
      %s801 = scalar_lea.vmem %s0, %s800
      %p802 = scmp.lt.s32.totalorder %s37, 1
      %s803 = scalar_select %p802, %s37, 1
      %s804 = smul.addr %s803, 2
      %s805 = smul.addr %s804, 8
      %s806 = scalar_lea.vmem %s1, %s805
      %p807 = scmp.lt.s32.totalorder %s37, 1
      %s808 = scalar_select %p807, %s37, 1
      %s809 = smul.addr %s808, 2
      %s810 = smul.addr %s809, 8
      %s811 = scalar_lea.vmem %s26, %s810
      %v813 = vld [vmem:[%s801] sm:$0xff]
      %v814 = vld [vmem:[%s801 + $0x8] sm:$0x3]
      %v815 = vld [vmem:[%s806] sm:$0xff]
      %v816 = vld [vmem:[%s806 + $0x8] sm:$0x3]
      %v817 = vld [vmem:[%s2] sm:$0xff]
      %v818 = vld [vmem:[%s2 + $0x8] sm:$0xff]
      %v819 = vld [vmem:[%s2 + $0x10] sm:$0xff]
      %v820 = vld [vmem:[%s2 + $0x18] sm:$0xff]
      %v821 = vld [vmem:[%s2 + $0x20] sm:$0xff]
      %v822 = vld [vmem:[%s2 + $0x28] sm:$0xff]
      %v823 = vld [vmem:[%s2 + $0x30] sm:$0xff]
      %v824 = vld [vmem:[%s2 + $0x38] sm:$0xff]
      %v825 = vld [vmem:[%s3] sm:$0x3]
      %v826 = vld [vmem:[%s4] sm:$0xf]
      %v827 = vld [vmem:[%s4 + $0x4] sm:$0xf]
      %v828 = vld [vmem:[%s4 + $0x8] sm:$0xf]
      %v829 = vld [vmem:[%s4 + $0xc] sm:$0xf]
      %v830 = vld [vmem:[%s4 + $0x10] sm:$0xf]
      %v831 = vld [vmem:[%s4 + $0x14] sm:$0xf]
      %v832 = vld [vmem:[%s4 + $0x18] sm:$0xf]
      %v833 = vld [vmem:[%s4 + $0x1c] sm:$0xf]
      %v834 = vld [vmem:[%s5] sm:$0x1]
      %v835 = vld [vmem:[%s6] sm:$0x1]
      %v836 = vld [vmem:[%s7] sm:$0x1]
      %v837 = vpack.c.bf16 %v814, %v813
      %v839 = vlaneseq
      %v840 = vshrl.u32 %v839, 7
      %v841 = vsub.s32 0, %v840
      %v842 = vrot.slane %v825, %v841
      %v843 = vlaneseq
      %v844 = vshrl.u32 %v843, 7
      %v845 = vsub.s32 1, %v844
      %v846 = vrot.slane %v825, %v845
      %v857 = vunpack.c.l.b16 %v817
      %v858 = vunpack.c.h.b16 %v817
      %v859 = vunpack.c.l.b16 %v818
      %v860 = vunpack.c.h.b16 %v818
      %v861 = vunpack.c.l.b16 %v819
      %v862 = vunpack.c.h.b16 %v819
      %v863 = vunpack.c.l.b16 %v820
      %v864 = vunpack.c.h.b16 %v820
      %v865 = vunpack.c.l.b16 %v821
      %v866 = vunpack.c.h.b16 %v821
      %v867 = vunpack.c.l.b16 %v822
      %v868 = vunpack.c.h.b16 %v822
      %v869 = vunpack.c.l.b16 %v823
      %v870 = vunpack.c.h.b16 %v823
      %v871 = vunpack.c.l.b16 %v824
      %v872 = vunpack.c.h.b16 %v824
      %v873 = vpack.c.b16 %v859, %v857
      %v874 = vpack.c.b16 %v860, %v858
      %v875 = vpack.c.b16 %v863, %v861
      %v876 = vpack.c.b16 %v864, %v862
      %v877 = vpack.c.b16 %v867, %v865
      %v878 = vpack.c.b16 %v868, %v866
      %v879 = vpack.c.b16 %v871, %v869
      %v880 = vpack.c.b16 %v872, %v870
      %vm889 = vcmask 523264
      %v891 = vsel %vm889, %v837, 0
      %893 = vmatprep.subr.bf16.mxu0 0
      %894 = vmatpush1.bf16.msra.mxu0 0
      %895 = vmatprep.subr.bf16.mxu0 0
      %896 = vmatpush1.bf16.msra.mxu0 0
      %897 = vmatprep.subr.bf16.mxu0 0
      %898 = vmatpush1.bf16.msra.mxu0 0
      %899 = vmatprep.subr.bf16.mxu0 0
      %900 = vmatpush1.bf16.msra.mxu0 0
      %901 = vmatprep.subr.bf16.mxu0 %v880
      %902 = vmatpush1.bf16.msra.mxu0 %v879
      %903 = vmatprep.subr.bf16.mxu0 %v878
      %904 = vmatpush1.bf16.msra.mxu0 %v877
      %905 = vmatprep.subr.bf16.mxu0 %v876
      %906 = vmatpush1.bf16.msra.mxu0 %v875
      %907 = vmatprep.subr.bf16.mxu0 %v874
      %908 = vmatpush1.bf16.msra.mxu0 %v873
      %909 = vmatprep.subr.bf16.mxu0 0
      %910 = vmatpush2.bf16.msra.mxu0 0
      %911 = vmatprep.subr.bf16.mxu0 0
      %912 = vmatpush2.bf16.msra.mxu0 0
      %913 = vmatprep.subr.bf16.mxu0 0
      %914 = vmatpush2.bf16.msra.mxu0 0
      %915 = vmatprep.subr.bf16.mxu0 0
      %916 = vmatpush2.bf16.msra.mxu0 0
      %917 = vmatprep.subr.bf16.mxu0 0
      %918 = vmatpush2.bf16.msra.mxu0 0
      %919 = vmatprep.subr.bf16.mxu0 0
      %920 = vmatpush2.bf16.msra.mxu0 0
      %921 = vmatprep.subr.bf16.mxu0 0
      %922 = vmatpush2.bf16.msra.mxu0 0
      %923 = vmatprep.subr.bf16.mxu0 0
      %924 = vmatpush2.bf16.msra.mxu0 0
      %925 = vmatprep.mubr.bf16.mxu0 0
      %926 = vmatmul.mubr.bf16.gmra.mxu0 %v891
      %v927 = vpop.f32.mrf.mxu0
      %v928 = vadd.f32 %v842, %v927
      %v929 = vpop.f32.mrf.mxu0
      %v930 = vadd.f32 %v846, %v929
      %v931 = vpop.f32.mrf.mxu0
      %v932 = vadd.f32 %v842, %v931
      %v933 = vpop.f32.mrf.mxu0
      %v934 = vadd.f32 %v846, %v933
      %935 = vdwg.mxu0
      %v936 = vmul.f32 %v928, 0.25
      %v937 = vmul.f32 %v932, 0.25
      %v938 = vlaneseq
      %v939 = vshrl.u32 %v938, 7
      %v940 = vadd.s32 %v939, 8
      %v941 = vlaneseq
      %v942 = vand.u32 %v941, 127
      %vm943 = vcmp.le.s32.totalorder %v942, %v939
      %vm944 = vcmp.le.s32.totalorder %v942, %v940
      %v945 = vpack.c.bf16 %v937, %v936
      %v946 = vpack.c.bf16 %v932, %v928
      %v947 = vpack.c.bf16 %v934, %v930
      %949 = vrot.lane.b32.xlu0 %v946, 64
      %v950 = vpop.permute.xlu0 %949
      %vm951 = vcmask 130048
      %v953 = vsel %vm951, %v945, 0
      %v956 = vsel %vm951, %v950, 0
      %958 = vmatprep.subr.bf16.mxu0 0
      %959 = vmatpush1.bf16.xpose.msra.mxu0 0
      %960 = vmatprep.subr.bf16.mxu0 0
      %961 = vmatpush1.bf16.xpose.msra.mxu0 0
      %962 = vmatprep.subr.bf16.mxu0 0
      %963 = vmatpush1.bf16.xpose.msra.mxu0 0
      %964 = vmatprep.subr.bf16.mxu0 0
      %965 = vmatpush1.bf16.xpose.msra.mxu0 0
      %966 = vmatprep.subr.bf16.mxu0 0
      %967 = vmatpush1.bf16.xpose.msra.mxu0 0
      %968 = vmatprep.subr.bf16.mxu0 0
      %969 = vmatpush1.bf16.xpose.msra.mxu0 0
      %970 = vmatprep.subr.bf16.mxu0 0
      %971 = vmatpush1.bf16.xpose.msra.mxu0 0
      %972 = vmatprep.subr.bf16.mxu0 0
      %973 = vmatpush1.bf16.xpose.msra.mxu0 %v956
      %974 = vmatprep.subr.bf16.mxu0 0
      %975 = vmatpush2.bf16.xpose.msra.mxu0 0
      %976 = vmatprep.subr.bf16.mxu0 0
      %977 = vmatpush2.bf16.xpose.msra.mxu0 0
      %978 = vmatprep.subr.bf16.mxu0 0
      %979 = vmatpush2.bf16.xpose.msra.mxu0 0
      %980 = vmatprep.subr.bf16.mxu0 0
      %981 = vmatpush2.bf16.xpose.msra.mxu0 0
      %982 = vmatprep.subr.bf16.mxu0 0
      %983 = vmatpush2.bf16.xpose.msra.mxu0 0
      %984 = vmatprep.subr.bf16.mxu0 0
      %985 = vmatpush2.bf16.xpose.msra.mxu0 0
      %986 = vmatprep.subr.bf16.mxu0 0
      %987 = vmatpush2.bf16.xpose.msra.mxu0 0
      %988 = vmatprep.subr.bf16.mxu0 0
      %989 = vmatpush2.bf16.xpose.msra.mxu0 0
      %990 = vmatprep.mubr.bf16.mxu0 0
      %991 = vmatmul.mubr.bf16.gmra.mxu0 %v953
      %v992 = vpop.f32.mrf.mxu0
      %v993 = vadd.f32 0.0, %v992
      %v994 = vpop.f32.mrf.mxu0
      %v995 = vpop.f32.mrf.mxu0
      %v996 = vadd.f32 0.0, %v995
      %v997 = vpop.f32.mrf.mxu0
      %998 = vdwg.mxu0
      %v999 = vsel %vm943, %v993, -1e+30
      %v1000 = vsel %vm944, %v996, -1e+30
      %vm1001 = vcmask 80896
      %v1002 = vsel %vm1001, %v999, -inf
      %1003 = vmax.xlane.f32.xlu0 %v1002
      %v1004 = vpop.xlane.xlu0 %1003
      %vm1005 = vcmask 74752
      %v1006 = vsel %vm1005, %v1000, -inf
      %1007 = vmax.xlane.f32.xlu0 %v1006
      %v1008 = vpop.xlane.xlu0 %1007
      %v1009 = vsub.f32 %v999, %v1004
      %v1010 = vsub.f32 %v1000, %v1008
      %v1011 = vmul.f32 %v1009, 1.442695
      %v1012 = vpow.pop %v1011
      %v1013 = vmul.f32 %v1010, 1.442695
      %v1014 = vpow.pop %v1013
      %v1015 = vsel %vm1001, %v1012, 0.0
      %1016 = vadd.xlane.f32.xlu0 %v1015
      %v1017 = vpop.xlane.xlu0 %1016
      %v1018 = vsel %vm1005, %v1014, 0.0
      %1019 = vadd.xlane.f32.xlu0 %v1018
      %v1020 = vpop.xlane.xlu0 %1019
      %v1021 = vrcp.pop %v1017
      %v1022 = vrcp.pop %v1020
      %v1023 = vmul.f32 %v1012, %v1021
      %v1024 = vmul.f32 %v1014, %v1022
      %v1025 = vpack.c.bf16 %v1024, %v1023
      %v1027 = vsel %vm1001, %v1025, 0
      %vm1029 = vcmask 1044480
      %v1031 = vsel %vm1029, %v947, 0
      %1033 = vmatprep.subr.bf16.mxu0 0
      %1034 = vmatpush1.bf16.msra.mxu0 0
      %1035 = vmatprep.subr.bf16.mxu0 0
      %1036 = vmatpush1.bf16.msra.mxu0 0
      %1037 = vmatprep.subr.bf16.mxu0 0
      %1038 = vmatpush1.bf16.msra.mxu0 0
      %1039 = vmatprep.subr.bf16.mxu0 0
      %1040 = vmatpush1.bf16.msra.mxu0 0
      %1041 = vmatprep.subr.bf16.mxu0 0
      %1042 = vmatpush1.bf16.msra.mxu0 0
      %1043 = vmatprep.subr.bf16.mxu0 0
      %1044 = vmatpush1.bf16.msra.mxu0 0
      %1045 = vmatprep.subr.bf16.mxu0 0
      %1046 = vmatpush1.bf16.msra.mxu0 0
      %1047 = vmatprep.subr.bf16.mxu0 0
      %1048 = vmatpush1.bf16.msra.mxu0 %v1031
      %1049 = vmatprep.subr.bf16.mxu0 0
      %1050 = vmatpush2.bf16.msra.mxu0 0
      %1051 = vmatprep.subr.bf16.mxu0 0
      %1052 = vmatpush2.bf16.msra.mxu0 0
      %1053 = vmatprep.subr.bf16.mxu0 0
      %1054 = vmatpush2.bf16.msra.mxu0 0
      %1055 = vmatprep.subr.bf16.mxu0 0
      %1056 = vmatpush2.bf16.msra.mxu0 0
      %1057 = vmatprep.subr.bf16.mxu0 0
      %1058 = vmatpush2.bf16.msra.mxu0 0
      %1059 = vmatprep.subr.bf16.mxu0 0
      %1060 = vmatpush2.bf16.msra.mxu0 0
      %1061 = vmatprep.subr.bf16.mxu0 0
      %1062 = vmatpush2.bf16.msra.mxu0 0
      %1063 = vmatprep.subr.bf16.mxu0 0
      %1064 = vmatpush2.bf16.msra.mxu0 0
      %1065 = vmatprep.mubr.bf16.mxu0 0
      %1066 = vmatmul.mubr.bf16.gmra.mxu0 %v1027
      %v1067 = vpop.f32.mrf.mxu0
      %v1068 = vadd.f32 0.0, %v1067
      %v1069 = vpop.f32.mrf.mxu0
      %v1070 = vpop.f32.mrf.mxu0
      %v1071 = vadd.f32 0.0, %v1070
      %v1072 = vpop.f32.mrf.mxu0
      %1073 = vdwg.mxu0
      %v1074 = vpack.c.bf16 %v1071, %v1068
      %1076 = vrot.lane.b32.xlu0 %v945, 112
      %v1077 = vpop.permute.xlu0 %1076
      %1078 = vrot.lane.b32.xlu0 %v946, 48
      %v1079 = vpop.permute.xlu0 %1078
      %v1081 = vsel %vm951, %v1077, 0
      %v1084 = vsel %vm951, %v1079, 0
      %1086 = vmatprep.subr.bf16.mxu0 0
      %1087 = vmatpush1.bf16.xpose.msra.mxu0 0
      %1088 = vmatprep.subr.bf16.mxu0 0
      %1089 = vmatpush1.bf16.xpose.msra.mxu0 0
      %1090 = vmatprep.subr.bf16.mxu0 0
      %1091 = vmatpush1.bf16.xpose.msra.mxu0 0
      %1092 = vmatprep.subr.bf16.mxu0 0
      %1093 = vmatpush1.bf16.xpose.msra.mxu0 0
      %1094 = vmatprep.subr.bf16.mxu0 0
      %1095 = vmatpush1.bf16.xpose.msra.mxu0 0
      %1096 = vmatprep.subr.bf16.mxu0 0
      %1097 = vmatpush1.bf16.xpose.msra.mxu0 0
      %1098 = vmatprep.subr.bf16.mxu0 0
      %1099 = vmatpush1.bf16.xpose.msra.mxu0 0
      %1100 = vmatprep.subr.bf16.mxu0 0
      %1101 = vmatpush1.bf16.xpose.msra.mxu0 %v1084
      %1102 = vmatprep.subr.bf16.mxu0 0
      %1103 = vmatpush2.bf16.xpose.msra.mxu0 0
      %1104 = vmatprep.subr.bf16.mxu0 0
      %1105 = vmatpush2.bf16.xpose.msra.mxu0 0
      %1106 = vmatprep.subr.bf16.mxu0 0
      %1107 = vmatpush2.bf16.xpose.msra.mxu0 0
      %1108 = vmatprep.subr.bf16.mxu0 0
      %1109 = vmatpush2.bf16.xpose.msra.mxu0 0
      %1110 = vmatprep.subr.bf16.mxu0 0
      %1111 = vmatpush2.bf16.xpose.msra.mxu0 0
      %1112 = vmatprep.subr.bf16.mxu0 0
      %1113 = vmatpush2.bf16.xpose.msra.mxu0 0
      %1114 = vmatprep.subr.bf16.mxu0 0
      %1115 = vmatpush2.bf16.xpose.msra.mxu0 0
      %1116 = vmatprep.subr.bf16.mxu0 0
      %1117 = vmatpush2.bf16.xpose.msra.mxu0 0
      %1118 = vmatprep.mubr.bf16.mxu0 0
      %1119 = vmatmul.mubr.bf16.gmra.mxu0 %v1081
      %v1120 = vpop.f32.mrf.mxu0
      %v1121 = vadd.f32 0.0, %v1120
      %v1122 = vpop.f32.mrf.mxu0
      %v1123 = vpop.f32.mrf.mxu0
      %v1124 = vadd.f32 0.0, %v1123
      %v1125 = vpop.f32.mrf.mxu0
      %1126 = vdwg.mxu0
      %v1127 = vsel %vm943, %v1121, -1e+30
      %v1128 = vsel %vm944, %v1124, -1e+30
      %v1129 = vsel %vm1001, %v1127, -inf
      %1130 = vmax.xlane.f32.xlu0 %v1129
      %v1131 = vpop.xlane.xlu0 %1130
      %v1132 = vsel %vm1005, %v1128, -inf
      %1133 = vmax.xlane.f32.xlu0 %v1132
      %v1134 = vpop.xlane.xlu0 %1133
      %v1135 = vsub.f32 %v1127, %v1131
      %v1136 = vsub.f32 %v1128, %v1134
      %v1137 = vmul.f32 %v1135, 1.442695
      %v1138 = vpow.pop %v1137
      %v1139 = vmul.f32 %v1136, 1.442695
      %v1140 = vpow.pop %v1139
      %v1141 = vsel %vm1001, %v1138, 0.0
      %1142 = vadd.xlane.f32.xlu0 %v1141
      %v1143 = vpop.xlane.xlu0 %1142
      %v1144 = vsel %vm1005, %v1140, 0.0
      %1145 = vadd.xlane.f32.xlu0 %v1144
      %v1146 = vpop.xlane.xlu0 %1145
      %v1147 = vrcp.pop %v1143
      %v1148 = vrcp.pop %v1146
      %v1149 = vmul.f32 %v1138, %v1147
      %v1150 = vmul.f32 %v1140, %v1148
      %v1151 = vpack.c.bf16 %v1150, %v1149
      %1153 = vrot.lane.b32.xlu0 %v947, 112
      %v1154 = vpop.permute.xlu0 %1153
      %v1156 = vsel %vm1001, %v1151, 0
      %v1159 = vsel %vm1029, %v1154, 0
      %1161 = vmatprep.subr.bf16.mxu0 0
      %1162 = vmatpush1.bf16.msra.mxu0 0
      %1163 = vmatprep.subr.bf16.mxu0 0
      %1164 = vmatpush1.bf16.msra.mxu0 0
      %1165 = vmatprep.subr.bf16.mxu0 0
      %1166 = vmatpush1.bf16.msra.mxu0 0
      %1167 = vmatprep.subr.bf16.mxu0 0
      %1168 = vmatpush1.bf16.msra.mxu0 0
      %1169 = vmatprep.subr.bf16.mxu0 0
      %1170 = vmatpush1.bf16.msra.mxu0 0
      %1171 = vmatprep.subr.bf16.mxu0 0
      %1172 = vmatpush1.bf16.msra.mxu0 0
      %1173 = vmatprep.subr.bf16.mxu0 0
      %1174 = vmatpush1.bf16.msra.mxu0 0
      %1175 = vmatprep.subr.bf16.mxu0 0
      %1176 = vmatpush1.bf16.msra.mxu0 %v1159
      %1177 = vmatprep.subr.bf16.mxu0 0
      %1178 = vmatpush2.bf16.msra.mxu0 0
      %1179 = vmatprep.subr.bf16.mxu0 0
      %1180 = vmatpush2.bf16.msra.mxu0 0
      %1181 = vmatprep.subr.bf16.mxu0 0
      %1182 = vmatpush2.bf16.msra.mxu0 0
      %1183 = vmatprep.subr.bf16.mxu0 0
      %1184 = vmatpush2.bf16.msra.mxu0 0
      %1185 = vmatprep.subr.bf16.mxu0 0
      %1186 = vmatpush2.bf16.msra.mxu0 0
      %1187 = vmatprep.subr.bf16.mxu0 0
      %1188 = vmatpush2.bf16.msra.mxu0 0
      %1189 = vmatprep.subr.bf16.mxu0 0
      %1190 = vmatpush2.bf16.msra.mxu0 0
      %1191 = vmatprep.subr.bf16.mxu0 0
      %1192 = vmatpush2.bf16.msra.mxu0 0
      %1193 = vmatprep.mubr.bf16.mxu0 0
      %1194 = vmatmul.mubr.bf16.gmra.mxu0 %v1156
      %v1195 = vpop.f32.mrf.mxu0
      %v1196 = vadd.f32 0.0, %v1195
      %v1197 = vpop.f32.mrf.mxu0
      %v1198 = vpop.f32.mrf.mxu0
      %v1199 = vadd.f32 0.0, %v1198
      %v1200 = vpop.f32.mrf.mxu0
      %1201 = vdwg.mxu0
      %v1202 = vpack.c.bf16 %v1199, %v1196
      %v1205 = vunpack.c.l.b16 %v828
      %v1206 = vunpack.c.l.b16 %v829
      %v1207 = vpack.c.b16 %v1206, %v1205
      %v1210 = vsel %vm951, %v1202, 0
      %1212 = vmatprep.subr.bf16.mxu0 0
      %1213 = vmatpush1.bf16.msra.mxu0 0
      %1214 = vmatprep.subr.bf16.mxu0 0
      %1215 = vmatpush1.bf16.msra.mxu0 0
      %1216 = vmatprep.subr.bf16.mxu0 0
      %1217 = vmatpush1.bf16.msra.mxu0 0
      %1218 = vmatprep.subr.bf16.mxu0 0
      %1219 = vmatpush1.bf16.msra.mxu0 0
      %1220 = vmatprep.subr.bf16.mxu0 0
      %1221 = vmatpush1.bf16.msra.mxu0 0
      %1222 = vmatprep.subr.bf16.mxu0 0
      %1223 = vmatpush1.bf16.msra.mxu0 0
      %1224 = vmatprep.subr.bf16.mxu0 0
      %1225 = vmatpush1.bf16.msra.mxu0 0
      %1226 = vmatprep.subr.bf16.mxu0 0
      %1227 = vmatpush1.bf16.msra.mxu0 %v1207
      %1228 = vmatprep.subr.bf16.mxu0 0
      %1229 = vmatpush2.bf16.msra.mxu0 0
      %1230 = vmatprep.subr.bf16.mxu0 0
      %1231 = vmatpush2.bf16.msra.mxu0 0
      %1232 = vmatprep.subr.bf16.mxu0 0
      %1233 = vmatpush2.bf16.msra.mxu0 0
      %1234 = vmatprep.subr.bf16.mxu0 0
      %1235 = vmatpush2.bf16.msra.mxu0 0
      %1236 = vmatprep.subr.bf16.mxu0 0
      %1237 = vmatpush2.bf16.msra.mxu0 0
      %1238 = vmatprep.subr.bf16.mxu0 0
      %1239 = vmatpush2.bf16.msra.mxu0 0
      %1240 = vmatprep.subr.bf16.mxu0 0
      %1241 = vmatpush2.bf16.msra.mxu0 0
      %1242 = vmatprep.subr.bf16.mxu0 0
      %1243 = vmatpush2.bf16.msra.mxu0 0
      %1244 = vmatprep.mubr.bf16.mxu0 0
      %1245 = vmatmul.mubr.bf16.gmra.mxu0 %v1210
      %v1246 = vpop.f32.mrf.mxu0
      %v1247 = vadd.f32 0.0, %v1246
      %v1248 = vpop.f32.mrf.mxu0
      %v1249 = vpop.f32.mrf.mxu0
      %v1250 = vadd.f32 0.0, %v1249
      %v1251 = vpop.f32.mrf.mxu0
      %1252 = vdwg.mxu0
      %v1255 = vunpack.c.l.b16 %v826
      %v1256 = vunpack.c.l.b16 %v827
      %v1257 = vpack.c.b16 %v1256, %v1255
      %v1260 = vsel %vm951, %v1074, 0
      %1262 = vmatprep.subr.bf16.mxu0 0
      %1263 = vmatpush1.bf16.msra.mxu0 0
      %1264 = vmatprep.subr.bf16.mxu0 0
      %1265 = vmatpush1.bf16.msra.mxu0 0
      %1266 = vmatprep.subr.bf16.mxu0 0
      %1267 = vmatpush1.bf16.msra.mxu0 0
      %1268 = vmatprep.subr.bf16.mxu0 0
      %1269 = vmatpush1.bf16.msra.mxu0 0
      %1270 = vmatprep.subr.bf16.mxu0 0
      %1271 = vmatpush1.bf16.msra.mxu0 0
      %1272 = vmatprep.subr.bf16.mxu0 0
      %1273 = vmatpush1.bf16.msra.mxu0 0
      %1274 = vmatprep.subr.bf16.mxu0 0
      %1275 = vmatpush1.bf16.msra.mxu0 0
      %1276 = vmatprep.subr.bf16.mxu0 0
      %1277 = vmatpush1.bf16.msra.mxu0 %v1257
      %1278 = vmatprep.subr.bf16.mxu0 0
      %1279 = vmatpush2.bf16.msra.mxu0 0
      %1280 = vmatprep.subr.bf16.mxu0 0
      %1281 = vmatpush2.bf16.msra.mxu0 0
      %1282 = vmatprep.subr.bf16.mxu0 0
      %1283 = vmatpush2.bf16.msra.mxu0 0
      %1284 = vmatprep.subr.bf16.mxu0 0
      %1285 = vmatpush2.bf16.msra.mxu0 0
      %1286 = vmatprep.subr.bf16.mxu0 0
      %1287 = vmatpush2.bf16.msra.mxu0 0
      %1288 = vmatprep.subr.bf16.mxu0 0
      %1289 = vmatpush2.bf16.msra.mxu0 0
      %1290 = vmatprep.subr.bf16.mxu0 0
      %1291 = vmatpush2.bf16.msra.mxu0 0
      %1292 = vmatprep.subr.bf16.mxu0 0
      %1293 = vmatpush2.bf16.msra.mxu0 0
      %1294 = vmatprep.mubr.bf16.mxu0 0
      %1295 = vmatmul.mubr.bf16.gmra.mxu0 %v1260
      %v1296 = vpop.f32.mrf.mxu0
      %v1297 = vadd.f32 %v1247, %v1296
      %v1298 = vpop.f32.mrf.mxu0
      %v1299 = vpop.f32.mrf.mxu0
      %v1300 = vadd.f32 %v1250, %v1299
      %v1301 = vpop.f32.mrf.mxu0
      %1302 = vdwg.mxu0
      %1303 = vrot.lane.b32.xlu0 %v945, 96
      %v1304 = vpop.permute.xlu0 %1303
      %1305 = vrot.lane.b32.xlu0 %v946, 32
      %v1306 = vpop.permute.xlu0 %1305
      %v1308 = vsel %vm951, %v1304, 0
      %v1311 = vsel %vm951, %v1306, 0
      %1313 = vmatprep.subr.bf16.mxu0 0
      %1314 = vmatpush1.bf16.xpose.msra.mxu0 0
      %1315 = vmatprep.subr.bf16.mxu0 0
      %1316 = vmatpush1.bf16.xpose.msra.mxu0 0
      %1317 = vmatprep.subr.bf16.mxu0 0
      %1318 = vmatpush1.bf16.xpose.msra.mxu0 0
      %1319 = vmatprep.subr.bf16.mxu0 0
      %1320 = vmatpush1.bf16.xpose.msra.mxu0 0
      %1321 = vmatprep.subr.bf16.mxu0 0
      %1322 = vmatpush1.bf16.xpose.msra.mxu0 0
      %1323 = vmatprep.subr.bf16.mxu0 0
      %1324 = vmatpush1.bf16.xpose.msra.mxu0 0
      %1325 = vmatprep.subr.bf16.mxu0 0
      %1326 = vmatpush1.bf16.xpose.msra.mxu0 0
      %1327 = vmatprep.subr.bf16.mxu0 0
      %1328 = vmatpush1.bf16.xpose.msra.mxu0 %v1311
      %1329 = vmatprep.subr.bf16.mxu0 0
      %1330 = vmatpush2.bf16.xpose.msra.mxu0 0
      %1331 = vmatprep.subr.bf16.mxu0 0
      %1332 = vmatpush2.bf16.xpose.msra.mxu0 0
      %1333 = vmatprep.subr.bf16.mxu0 0
      %1334 = vmatpush2.bf16.xpose.msra.mxu0 0
      %1335 = vmatprep.subr.bf16.mxu0 0
      %1336 = vmatpush2.bf16.xpose.msra.mxu0 0
      %1337 = vmatprep.subr.bf16.mxu0 0
      %1338 = vmatpush2.bf16.xpose.msra.mxu0 0
      %1339 = vmatprep.subr.bf16.mxu0 0
      %1340 = vmatpush2.bf16.xpose.msra.mxu0 0
      %1341 = vmatprep.subr.bf16.mxu0 0
      %1342 = vmatpush2.bf16.xpose.msra.mxu0 0
      %1343 = vmatprep.subr.bf16.mxu0 0
      %1344 = vmatpush2.bf16.xpose.msra.mxu0 0
      %1345 = vmatprep.mubr.bf16.mxu0 0
      %1346 = vmatmul.mubr.bf16.gmra.mxu0 %v1308
      %v1347 = vpop.f32.mrf.mxu0
      %v1348 = vadd.f32 0.0, %v1347
      %v1349 = vpop.f32.mrf.mxu0
      %v1350 = vpop.f32.mrf.mxu0
      %v1351 = vadd.f32 0.0, %v1350
      %v1352 = vpop.f32.mrf.mxu0
      %1353 = vdwg.mxu0
      %v1354 = vsel %vm943, %v1348, -1e+30
      %v1355 = vsel %vm944, %v1351, -1e+30
      %v1356 = vsel %vm1001, %v1354, -inf
      %1357 = vmax.xlane.f32.xlu0 %v1356
      %v1358 = vpop.xlane.xlu0 %1357
      %v1359 = vsel %vm1005, %v1355, -inf
      %1360 = vmax.xlane.f32.xlu0 %v1359
      %v1361 = vpop.xlane.xlu0 %1360
      %v1362 = vsub.f32 %v1354, %v1358
      %v1363 = vsub.f32 %v1355, %v1361
      %v1364 = vmul.f32 %v1362, 1.442695
      %v1365 = vpow.pop %v1364
      %v1366 = vmul.f32 %v1363, 1.442695
      %v1367 = vpow.pop %v1366
      %v1368 = vsel %vm1001, %v1365, 0.0
      %1369 = vadd.xlane.f32.xlu0 %v1368
      %v1370 = vpop.xlane.xlu0 %1369
      %v1371 = vsel %vm1005, %v1367, 0.0
      %1372 = vadd.xlane.f32.xlu0 %v1371
      %v1373 = vpop.xlane.xlu0 %1372
      %v1374 = vrcp.pop %v1370
      %v1375 = vrcp.pop %v1373
      %v1376 = vmul.f32 %v1365, %v1374
      %v1377 = vmul.f32 %v1367, %v1375
      %v1378 = vpack.c.bf16 %v1377, %v1376
      %1379 = vrot.lane.b32.xlu0 %v947, 96
      %v1380 = vpop.permute.xlu0 %1379
      %v1382 = vsel %vm1001, %v1378, 0
      %v1385 = vsel %vm1029, %v1380, 0
      %1387 = vmatprep.subr.bf16.mxu0 0
      %1388 = vmatpush1.bf16.msra.mxu0 0
      %1389 = vmatprep.subr.bf16.mxu0 0
      %1390 = vmatpush1.bf16.msra.mxu0 0
      %1391 = vmatprep.subr.bf16.mxu0 0
      %1392 = vmatpush1.bf16.msra.mxu0 0
      %1393 = vmatprep.subr.bf16.mxu0 0
      %1394 = vmatpush1.bf16.msra.mxu0 0
      %1395 = vmatprep.subr.bf16.mxu0 0
      %1396 = vmatpush1.bf16.msra.mxu0 0
      %1397 = vmatprep.subr.bf16.mxu0 0
      %1398 = vmatpush1.bf16.msra.mxu0 0
      %1399 = vmatprep.subr.bf16.mxu0 0
      %1400 = vmatpush1.bf16.msra.mxu0 0
      %1401 = vmatprep.subr.bf16.mxu0 0
      %1402 = vmatpush1.bf16.msra.mxu0 %v1385
      %1403 = vmatprep.subr.bf16.mxu0 0
      %1404 = vmatpush2.bf16.msra.mxu0 0
      %1405 = vmatprep.subr.bf16.mxu0 0
      %1406 = vmatpush2.bf16.msra.mxu0 0
      %1407 = vmatprep.subr.bf16.mxu0 0
      %1408 = vmatpush2.bf16.msra.mxu0 0
      %1409 = vmatprep.subr.bf16.mxu0 0
      %1410 = vmatpush2.bf16.msra.mxu0 0
      %1411 = vmatprep.subr.bf16.mxu0 0
      %1412 = vmatpush2.bf16.msra.mxu0 0
      %1413 = vmatprep.subr.bf16.mxu0 0
      %1414 = vmatpush2.bf16.msra.mxu0 0
      %1415 = vmatprep.subr.bf16.mxu0 0
      %1416 = vmatpush2.bf16.msra.mxu0 0
      %1417 = vmatprep.subr.bf16.mxu0 0
      %1418 = vmatpush2.bf16.msra.mxu0 0
      %1419 = vmatprep.mubr.bf16.mxu0 0
      %1420 = vmatmul.mubr.bf16.gmra.mxu0 %v1382
      %v1421 = vpop.f32.mrf.mxu0
      %v1422 = vadd.f32 0.0, %v1421
      %v1423 = vpop.f32.mrf.mxu0
      %v1424 = vpop.f32.mrf.mxu0
      %v1425 = vadd.f32 0.0, %v1424
      %v1426 = vpop.f32.mrf.mxu0
      %1427 = vdwg.mxu0
      %v1428 = vpack.c.bf16 %v1425, %v1422
      %v1431 = vunpack.c.l.b16 %v830
      %v1432 = vunpack.c.l.b16 %v831
      %v1433 = vpack.c.b16 %v1432, %v1431
      %v1436 = vsel %vm951, %v1428, 0
      %1438 = vmatprep.subr.bf16.mxu0 0
      %1439 = vmatpush1.bf16.msra.mxu0 0
      %1440 = vmatprep.subr.bf16.mxu0 0
      %1441 = vmatpush1.bf16.msra.mxu0 0
      %1442 = vmatprep.subr.bf16.mxu0 0
      %1443 = vmatpush1.bf16.msra.mxu0 0
      %1444 = vmatprep.subr.bf16.mxu0 0
      %1445 = vmatpush1.bf16.msra.mxu0 0
      %1446 = vmatprep.subr.bf16.mxu0 0
      %1447 = vmatpush1.bf16.msra.mxu0 0
      %1448 = vmatprep.subr.bf16.mxu0 0
      %1449 = vmatpush1.bf16.msra.mxu0 0
      %1450 = vmatprep.subr.bf16.mxu0 0
      %1451 = vmatpush1.bf16.msra.mxu0 0
      %1452 = vmatprep.subr.bf16.mxu0 0
      %1453 = vmatpush1.bf16.msra.mxu0 %v1433
      %1454 = vmatprep.subr.bf16.mxu0 0
      %1455 = vmatpush2.bf16.msra.mxu0 0
      %1456 = vmatprep.subr.bf16.mxu0 0
      %1457 = vmatpush2.bf16.msra.mxu0 0
      %1458 = vmatprep.subr.bf16.mxu0 0
      %1459 = vmatpush2.bf16.msra.mxu0 0
      %1460 = vmatprep.subr.bf16.mxu0 0
      %1461 = vmatpush2.bf16.msra.mxu0 0
      %1462 = vmatprep.subr.bf16.mxu0 0
      %1463 = vmatpush2.bf16.msra.mxu0 0
      %1464 = vmatprep.subr.bf16.mxu0 0
      %1465 = vmatpush2.bf16.msra.mxu0 0
      %1466 = vmatprep.subr.bf16.mxu0 0
      %1467 = vmatpush2.bf16.msra.mxu0 0
      %1468 = vmatprep.subr.bf16.mxu0 0
      %1469 = vmatpush2.bf16.msra.mxu0 0
      %1470 = vmatprep.mubr.bf16.mxu0 0
      %1471 = vmatmul.mubr.bf16.gmra.mxu0 %v1436
      %v1472 = vpop.f32.mrf.mxu0
      %v1473 = vadd.f32 0.0, %v1472
      %v1474 = vpop.f32.mrf.mxu0
      %v1475 = vpop.f32.mrf.mxu0
      %v1476 = vadd.f32 0.0, %v1475
      %v1477 = vpop.f32.mrf.mxu0
      %1478 = vdwg.mxu0
      %v1479 = vadd.f32 %v1297, %v1473
      %v1480 = vadd.f32 %v1300, %v1476
      %1481 = vrot.lane.b32.xlu0 %v945, 80
      %v1482 = vpop.permute.xlu0 %1481
      %1483 = vrot.lane.b32.xlu0 %v946, 16
      %v1484 = vpop.permute.xlu0 %1483
      %v1486 = vsel %vm951, %v1482, 0
      %v1489 = vsel %vm951, %v1484, 0
      %1491 = vmatprep.subr.bf16.mxu0 0
      %1492 = vmatpush1.bf16.xpose.msra.mxu0 0
      %1493 = vmatprep.subr.bf16.mxu0 0
      %1494 = vmatpush1.bf16.xpose.msra.mxu0 0
      %1495 = vmatprep.subr.bf16.mxu0 0
      %1496 = vmatpush1.bf16.xpose.msra.mxu0 0
      %1497 = vmatprep.subr.bf16.mxu0 0
      %1498 = vmatpush1.bf16.xpose.msra.mxu0 0
      %1499 = vmatprep.subr.bf16.mxu0 0
      %1500 = vmatpush1.bf16.xpose.msra.mxu0 0
      %1501 = vmatprep.subr.bf16.mxu0 0
      %1502 = vmatpush1.bf16.xpose.msra.mxu0 0
      %1503 = vmatprep.subr.bf16.mxu0 0
      %1504 = vmatpush1.bf16.xpose.msra.mxu0 0
      %1505 = vmatprep.subr.bf16.mxu0 0
      %1506 = vmatpush1.bf16.xpose.msra.mxu0 %v1489
      %1507 = vmatprep.subr.bf16.mxu0 0
      %1508 = vmatpush2.bf16.xpose.msra.mxu0 0
      %1509 = vmatprep.subr.bf16.mxu0 0
      %1510 = vmatpush2.bf16.xpose.msra.mxu0 0
      %1511 = vmatprep.subr.bf16.mxu0 0
      %1512 = vmatpush2.bf16.xpose.msra.mxu0 0
      %1513 = vmatprep.subr.bf16.mxu0 0
      %1514 = vmatpush2.bf16.xpose.msra.mxu0 0
      %1515 = vmatprep.subr.bf16.mxu0 0
      %1516 = vmatpush2.bf16.xpose.msra.mxu0 0
      %1517 = vmatprep.subr.bf16.mxu0 0
      %1518 = vmatpush2.bf16.xpose.msra.mxu0 0
      %1519 = vmatprep.subr.bf16.mxu0 0
      %1520 = vmatpush2.bf16.xpose.msra.mxu0 0
      %1521 = vmatprep.subr.bf16.mxu0 0
      %1522 = vmatpush2.bf16.xpose.msra.mxu0 0
      %1523 = vmatprep.mubr.bf16.mxu0 0
      %1524 = vmatmul.mubr.bf16.gmra.mxu0 %v1486
      %v1525 = vpop.f32.mrf.mxu0
      %v1526 = vadd.f32 0.0, %v1525
      %v1527 = vpop.f32.mrf.mxu0
      %v1528 = vpop.f32.mrf.mxu0
      %v1529 = vadd.f32 0.0, %v1528
      %v1530 = vpop.f32.mrf.mxu0
      %1531 = vdwg.mxu0
      %v1532 = vsel %vm943, %v1526, -1e+30
      %v1533 = vsel %vm944, %v1529, -1e+30
      %v1534 = vsel %vm1001, %v1532, -inf
      %1535 = vmax.xlane.f32.xlu0 %v1534
      %v1536 = vpop.xlane.xlu0 %1535
      %v1537 = vsel %vm1005, %v1533, -inf
      %1538 = vmax.xlane.f32.xlu0 %v1537
      %v1539 = vpop.xlane.xlu0 %1538
      %v1540 = vsub.f32 %v1532, %v1536
      %v1541 = vsub.f32 %v1533, %v1539
      %v1542 = vmul.f32 %v1540, 1.442695
      %v1543 = vpow.pop %v1542
      %v1544 = vmul.f32 %v1541, 1.442695
      %v1545 = vpow.pop %v1544
      %v1546 = vsel %vm1001, %v1543, 0.0
      %1547 = vadd.xlane.f32.xlu0 %v1546
      %v1548 = vpop.xlane.xlu0 %1547
      %v1549 = vsel %vm1005, %v1545, 0.0
      %1550 = vadd.xlane.f32.xlu0 %v1549
      %v1551 = vpop.xlane.xlu0 %1550
      %v1552 = vrcp.pop %v1548
      %v1553 = vrcp.pop %v1551
      %v1554 = vmul.f32 %v1543, %v1552
      %v1555 = vmul.f32 %v1545, %v1553
      %v1556 = vpack.c.bf16 %v1555, %v1554
      %1557 = vrot.lane.b32.xlu0 %v947, 80
      %v1558 = vpop.permute.xlu0 %1557
      %v1560 = vsel %vm1001, %v1556, 0
      %v1563 = vsel %vm1029, %v1558, 0
      %1565 = vmatprep.subr.bf16.mxu0 0
      %1566 = vmatpush1.bf16.msra.mxu0 0
      %1567 = vmatprep.subr.bf16.mxu0 0
      %1568 = vmatpush1.bf16.msra.mxu0 0
      %1569 = vmatprep.subr.bf16.mxu0 0
      %1570 = vmatpush1.bf16.msra.mxu0 0
      %1571 = vmatprep.subr.bf16.mxu0 0
      %1572 = vmatpush1.bf16.msra.mxu0 0
      %1573 = vmatprep.subr.bf16.mxu0 0
      %1574 = vmatpush1.bf16.msra.mxu0 0
      %1575 = vmatprep.subr.bf16.mxu0 0
      %1576 = vmatpush1.bf16.msra.mxu0 0
      %1577 = vmatprep.subr.bf16.mxu0 0
      %1578 = vmatpush1.bf16.msra.mxu0 0
      %1579 = vmatprep.subr.bf16.mxu0 0
      %1580 = vmatpush1.bf16.msra.mxu0 %v1563
      %1581 = vmatprep.subr.bf16.mxu0 0
      %1582 = vmatpush2.bf16.msra.mxu0 0
      %1583 = vmatprep.subr.bf16.mxu0 0
      %1584 = vmatpush2.bf16.msra.mxu0 0
      %1585 = vmatprep.subr.bf16.mxu0 0
      %1586 = vmatpush2.bf16.msra.mxu0 0
      %1587 = vmatprep.subr.bf16.mxu0 0
      %1588 = vmatpush2.bf16.msra.mxu0 0
      %1589 = vmatprep.subr.bf16.mxu0 0
      %1590 = vmatpush2.bf16.msra.mxu0 0
      %1591 = vmatprep.subr.bf16.mxu0 0
      %1592 = vmatpush2.bf16.msra.mxu0 0
      %1593 = vmatprep.subr.bf16.mxu0 0
      %1594 = vmatpush2.bf16.msra.mxu0 0
      %1595 = vmatprep.subr.bf16.mxu0 0
      %1596 = vmatpush2.bf16.msra.mxu0 0
      %1597 = vmatprep.mubr.bf16.mxu0 0
      %1598 = vmatmul.mubr.bf16.gmra.mxu0 %v1560
      %v1599 = vpop.f32.mrf.mxu0
      %v1600 = vadd.f32 0.0, %v1599
      %v1601 = vpop.f32.mrf.mxu0
      %v1602 = vpop.f32.mrf.mxu0
      %v1603 = vadd.f32 0.0, %v1602
      %v1604 = vpop.f32.mrf.mxu0
      %1605 = vdwg.mxu0
      %v1606 = vpack.c.bf16 %v1603, %v1600
      %v1609 = vunpack.c.l.b16 %v832
      %v1610 = vunpack.c.l.b16 %v833
      %v1611 = vpack.c.b16 %v1610, %v1609
      %v1614 = vsel %vm951, %v1606, 0
      %1616 = vmatprep.subr.bf16.mxu0 0
      %1617 = vmatpush1.bf16.msra.mxu0 0
      %1618 = vmatprep.subr.bf16.mxu0 0
      %1619 = vmatpush1.bf16.msra.mxu0 0
      %1620 = vmatprep.subr.bf16.mxu0 0
      %1621 = vmatpush1.bf16.msra.mxu0 0
      %1622 = vmatprep.subr.bf16.mxu0 0
      %1623 = vmatpush1.bf16.msra.mxu0 0
      %1624 = vmatprep.subr.bf16.mxu0 0
      %1625 = vmatpush1.bf16.msra.mxu0 0
      %1626 = vmatprep.subr.bf16.mxu0 0
      %1627 = vmatpush1.bf16.msra.mxu0 0
      %1628 = vmatprep.subr.bf16.mxu0 0
      %1629 = vmatpush1.bf16.msra.mxu0 0
      %1630 = vmatprep.subr.bf16.mxu0 0
      %1631 = vmatpush1.bf16.msra.mxu0 %v1611
      %1632 = vmatprep.subr.bf16.mxu0 0
      %1633 = vmatpush2.bf16.msra.mxu0 0
      %1634 = vmatprep.subr.bf16.mxu0 0
      %1635 = vmatpush2.bf16.msra.mxu0 0
      %1636 = vmatprep.subr.bf16.mxu0 0
      %1637 = vmatpush2.bf16.msra.mxu0 0
      %1638 = vmatprep.subr.bf16.mxu0 0
      %1639 = vmatpush2.bf16.msra.mxu0 0
      %1640 = vmatprep.subr.bf16.mxu0 0
      %1641 = vmatpush2.bf16.msra.mxu0 0
      %1642 = vmatprep.subr.bf16.mxu0 0
      %1643 = vmatpush2.bf16.msra.mxu0 0
      %1644 = vmatprep.subr.bf16.mxu0 0
      %1645 = vmatpush2.bf16.msra.mxu0 0
      %1646 = vmatprep.subr.bf16.mxu0 0
      %1647 = vmatpush2.bf16.msra.mxu0 0
      %1648 = vmatprep.mubr.bf16.mxu0 0
      %1649 = vmatmul.mubr.bf16.gmra.mxu0 %v1614
      %v1650 = vpop.f32.mrf.mxu0
      %v1651 = vadd.f32 0.0, %v1650
      %v1652 = vpop.f32.mrf.mxu0
      %v1653 = vpop.f32.mrf.mxu0
      %v1654 = vadd.f32 0.0, %v1653
      %v1655 = vpop.f32.mrf.mxu0
      %1656 = vdwg.mxu0
      %v1657 = vadd.f32 %v1479, %v1651
      %v1658 = vadd.f32 %v1480, %v1654
      %v1660 = vlaneseq
      %v1661 = vshrl.u32 %v1660, 7
      %v1662 = vsub.s32 0, %v1661
      %v1663 = vrot.slane %v834, %v1662
      %v1665 = vadd.f32 %v1657, %v1663
      %v1666 = vadd.f32 %v1658, %v1663
      %v1667 = vadd.f32 %v813, %v1665
      %v1668 = vadd.f32 %v814, %v1666
      %v1669 = vsel %vm889, %v1667, 0.0
      %1670 = vadd.xlane.f32.xlu0 %v1669
      %v1671 = vpop.xlane.xlu0 %1670
      %vm1672 = vcmask 517120
      %v1673 = vsel %vm1672, %v1668, 0.0
      %1674 = vadd.xlane.f32.xlu0 %v1673
      %v1675 = vpop.xlane.xlu0 %1674
      %v1676 = vrcp.pop 64.0
      %v1677 = vmul.f32 %v1671, %v1676
      %v1678 = vmul.f32 %v1675, %v1676
      %v1679 = vsub.f32 %v1667, %v1677
      %v1680 = vsub.f32 %v1668, %v1678
      %v1681 = vmul.f32 %v1679, %v1679
      %v1682 = vmul.f32 %v1680, %v1680
      %v1683 = vsel %vm889, %v1681, 0.0
      %1684 = vadd.xlane.f32.xlu0 %v1683
      %v1685 = vpop.xlane.xlu0 %1684
      %v1686 = vsel %vm1672, %v1682, 0.0
      %1687 = vadd.xlane.f32.xlu0 %v1686
      %v1688 = vpop.xlane.xlu0 %1687
      %v1689 = vmul.f32 %v1685, %v1676
      %v1690 = vmul.f32 %v1688, %v1676
      %v1691 = vadd.f32 %v1689, 1e-05
      %v1692 = vadd.f32 %v1690, 1e-05
      %v1693 = vrsqrt.pop %v1691
      %v1694 = vrsqrt.pop %v1692
      %v1695 = vmul.f32 %v1679, %v1693
      %v1696 = vmul.f32 %v1680, %v1694
      %v1698 = vlaneseq
      %v1699 = vshrl.u32 %v1698, 7
      %v1700 = vsub.s32 0, %v1699
      %v1701 = vrot.slane %v835, %v1700
      %v1703 = vmul.f32 %v1695, %v1701
      %v1704 = vmul.f32 %v1696, %v1701
      %v1706 = vlaneseq
      %v1707 = vshrl.u32 %v1706, 7
      %v1708 = vsub.s32 0, %v1707
      %v1709 = vrot.slane %v836, %v1708
      %v1711 = vadd.f32 %v1703, %v1709
      %v1712 = vadd.f32 %v1704, %v1709
      %v1713 = vld [vmem:[%s8] sm:$0xf]
      %v1714 = vld [vmem:[%s8 + $0x4] sm:$0xf]
      %v1715 = vld [vmem:[%s8 + $0x8] sm:$0xf]
      %v1716 = vld [vmem:[%s8 + $0xc] sm:$0xf]
      %v1717 = vld [vmem:[%s8 + $0x10] sm:$0xf]
      %v1718 = vld [vmem:[%s8 + $0x14] sm:$0xf]
      %v1719 = vld [vmem:[%s8 + $0x18] sm:$0xf]
      %v1720 = vld [vmem:[%s8 + $0x1c] sm:$0xf]
      %v1721 = vld [vmem:[%s9] sm:$0x1]
      %v1722 = vld [vmem:[%s10] sm:$0xf]
      %v1723 = vld [vmem:[%s10 + $0x4] sm:$0xf]
      %v1724 = vld [vmem:[%s10 + $0x8] sm:$0xf]
      %v1725 = vld [vmem:[%s10 + $0xc] sm:$0xf]
      %v1726 = vld [vmem:[%s10 + $0x10] sm:$0xf]
      %v1727 = vld [vmem:[%s10 + $0x14] sm:$0xf]
      %v1728 = vld [vmem:[%s10 + $0x18] sm:$0xf]
      %v1729 = vld [vmem:[%s10 + $0x1c] sm:$0xf]
      %v1730 = vld [vmem:[%s11] sm:$0x1]
      %v1731 = vld [vmem:[%s12] sm:$0xf]
      %v1732 = vld [vmem:[%s12 + $0x4] sm:$0xf]
      %v1733 = vld [vmem:[%s12 + $0x8] sm:$0xf]
      %v1734 = vld [vmem:[%s12 + $0xc] sm:$0xf]
      %v1735 = vld [vmem:[%s12 + $0x10] sm:$0xf]
      %v1736 = vld [vmem:[%s12 + $0x14] sm:$0xf]
      %v1737 = vld [vmem:[%s12 + $0x18] sm:$0xf]
      %v1738 = vld [vmem:[%s12 + $0x1c] sm:$0xf]
      %v1739 = vld [vmem:[%s13] sm:$0x1]
      %v1740 = vld [vmem:[%s14] sm:$0x1]
      %v1741 = vld [vmem:[%s15] sm:$0x1]
      %v1742 = vpack.c.bf16 %v1712, %v1711
      %v1744 = vlaneseq
      %v1745 = vshrl.u32 %v1744, 7
      %v1746 = vsub.s32 0, %v1745
      %v1747 = vrot.slane %v1721, %v1746
      %v1757 = vunpack.c.l.b16 %v1713
      %v1758 = vunpack.c.l.b16 %v1714
      %v1759 = vunpack.c.l.b16 %v1715
      %v1760 = vunpack.c.l.b16 %v1716
      %v1761 = vunpack.c.l.b16 %v1717
      %v1762 = vunpack.c.l.b16 %v1718
      %v1763 = vunpack.c.l.b16 %v1719
      %v1764 = vunpack.c.l.b16 %v1720
      %v1765 = vpack.c.b16 %v1758, %v1757
      %v1766 = vpack.c.b16 %v1760, %v1759
      %v1767 = vpack.c.b16 %v1762, %v1761
      %v1768 = vpack.c.b16 %v1764, %v1763
      %v1774 = vsel %vm889, %v1742, 0
      %1776 = vmatprep.subr.bf16.mxu0 0
      %1777 = vmatpush1.bf16.msra.mxu0 0
      %1778 = vmatprep.subr.bf16.mxu0 0
      %1779 = vmatpush1.bf16.msra.mxu0 0
      %1780 = vmatprep.subr.bf16.mxu0 0
      %1781 = vmatpush1.bf16.msra.mxu0 0
      %1782 = vmatprep.subr.bf16.mxu0 0
      %1783 = vmatpush1.bf16.msra.mxu0 0
      %1784 = vmatprep.subr.bf16.mxu0 0
      %1785 = vmatpush1.bf16.msra.mxu0 %v1768
      %1786 = vmatprep.subr.bf16.mxu0 0
      %1787 = vmatpush1.bf16.msra.mxu0 %v1767
      %1788 = vmatprep.subr.bf16.mxu0 0
      %1789 = vmatpush1.bf16.msra.mxu0 %v1766
      %1790 = vmatprep.subr.bf16.mxu0 0
      %1791 = vmatpush1.bf16.msra.mxu0 %v1765
      %1792 = vmatprep.subr.bf16.mxu0 0
      %1793 = vmatpush2.bf16.msra.mxu0 0
      %1794 = vmatprep.subr.bf16.mxu0 0
      %1795 = vmatpush2.bf16.msra.mxu0 0
      %1796 = vmatprep.subr.bf16.mxu0 0
      %1797 = vmatpush2.bf16.msra.mxu0 0
      %1798 = vmatprep.subr.bf16.mxu0 0
      %1799 = vmatpush2.bf16.msra.mxu0 0
      %1800 = vmatprep.subr.bf16.mxu0 0
      %1801 = vmatpush2.bf16.msra.mxu0 0
      %1802 = vmatprep.subr.bf16.mxu0 0
      %1803 = vmatpush2.bf16.msra.mxu0 0
      %1804 = vmatprep.subr.bf16.mxu0 0
      %1805 = vmatpush2.bf16.msra.mxu0 0
      %1806 = vmatprep.subr.bf16.mxu0 0
      %1807 = vmatpush2.bf16.msra.mxu0 0
      %1808 = vmatprep.mubr.bf16.mxu0 0
      %1809 = vmatmul.mubr.bf16.gmra.mxu0 %v1774
      %v1810 = vpop.f32.mrf.mxu0
      %v1811 = vadd.f32 %v1747, %v1810
      %v1812 = vpop.f32.mrf.mxu0
      %v1813 = vpop.f32.mrf.mxu0
      %v1814 = vadd.f32 %v1747, %v1813
      %v1815 = vpop.f32.mrf.mxu0
      %1816 = vdwg.mxu0
      %v1817 = vmul.f32 %v1811, 0.25
      %v1818 = vmul.f32 %v1814, 0.25
      %v1819 = vpack.c.bf16 %v816, %v815
      %v1821 = vlaneseq
      %v1822 = vshrl.u32 %v1821, 7
      %v1823 = vsub.s32 0, %v1822
      %v1824 = vrot.slane %v1730, %v1823
      %v1834 = vunpack.c.l.b16 %v1722
      %v1835 = vunpack.c.l.b16 %v1723
      %v1836 = vunpack.c.l.b16 %v1724
      %v1837 = vunpack.c.l.b16 %v1725
      %v1838 = vunpack.c.l.b16 %v1726
      %v1839 = vunpack.c.l.b16 %v1727
      %v1840 = vunpack.c.l.b16 %v1728
      %v1841 = vunpack.c.l.b16 %v1729
      %v1842 = vpack.c.b16 %v1835, %v1834
      %v1843 = vpack.c.b16 %v1837, %v1836
      %v1844 = vpack.c.b16 %v1839, %v1838
      %v1845 = vpack.c.b16 %v1841, %v1840
      %v1851 = vsel %vm889, %v1819, 0
      %1853 = vmatprep.subr.bf16.mxu0 0
      %1854 = vmatpush1.bf16.msra.mxu0 0
      %1855 = vmatprep.subr.bf16.mxu0 0
      %1856 = vmatpush1.bf16.msra.mxu0 0
      %1857 = vmatprep.subr.bf16.mxu0 0
      %1858 = vmatpush1.bf16.msra.mxu0 0
      %1859 = vmatprep.subr.bf16.mxu0 0
      %1860 = vmatpush1.bf16.msra.mxu0 0
      %1861 = vmatprep.subr.bf16.mxu0 0
      %1862 = vmatpush1.bf16.msra.mxu0 %v1845
      %1863 = vmatprep.subr.bf16.mxu0 0
      %1864 = vmatpush1.bf16.msra.mxu0 %v1844
      %1865 = vmatprep.subr.bf16.mxu0 0
      %1866 = vmatpush1.bf16.msra.mxu0 %v1843
      %1867 = vmatprep.subr.bf16.mxu0 0
      %1868 = vmatpush1.bf16.msra.mxu0 %v1842
      %1869 = vmatprep.subr.bf16.mxu0 0
      %1870 = vmatpush2.bf16.msra.mxu0 0
      %1871 = vmatprep.subr.bf16.mxu0 0
      %1872 = vmatpush2.bf16.msra.mxu0 0
      %1873 = vmatprep.subr.bf16.mxu0 0
      %1874 = vmatpush2.bf16.msra.mxu0 0
      %1875 = vmatprep.subr.bf16.mxu0 0
      %1876 = vmatpush2.bf16.msra.mxu0 0
      %1877 = vmatprep.subr.bf16.mxu0 0
      %1878 = vmatpush2.bf16.msra.mxu0 0
      %1879 = vmatprep.subr.bf16.mxu0 0
      %1880 = vmatpush2.bf16.msra.mxu0 0
      %1881 = vmatprep.subr.bf16.mxu0 0
      %1882 = vmatpush2.bf16.msra.mxu0 0
      %1883 = vmatprep.subr.bf16.mxu0 0
      %1884 = vmatpush2.bf16.msra.mxu0 0
      %1885 = vmatprep.mubr.bf16.mxu0 0
      %1886 = vmatmul.mubr.bf16.gmra.mxu0 %v1851
      %v1887 = vpop.f32.mrf.mxu0
      %v1888 = vadd.f32 %v1824, %v1887
      %v1889 = vpop.f32.mrf.mxu0
      %v1890 = vpop.f32.mrf.mxu0
      %v1891 = vadd.f32 %v1824, %v1890
      %v1892 = vpop.f32.mrf.mxu0
      %1893 = vdwg.mxu0
      %v1894 = vpack.c.bf16 %v1818, %v1817
      %v1895 = vpack.c.bf16 %v1891, %v1888
      %v1897 = vsel %vm951, %v1894, 0
      %v1900 = vsel %vm951, %v1895, 0
      %1902 = vmatprep.subr.bf16.mxu0 0
      %1903 = vmatpush1.bf16.xpose.msra.mxu0 0
      %1904 = vmatprep.subr.bf16.mxu0 0
      %1905 = vmatpush1.bf16.xpose.msra.mxu0 0
      %1906 = vmatprep.subr.bf16.mxu0 0
      %1907 = vmatpush1.bf16.xpose.msra.mxu0 0
      %1908 = vmatprep.subr.bf16.mxu0 0
      %1909 = vmatpush1.bf16.xpose.msra.mxu0 0
      %1910 = vmatprep.subr.bf16.mxu0 0
      %1911 = vmatpush1.bf16.xpose.msra.mxu0 0
      %1912 = vmatprep.subr.bf16.mxu0 0
      %1913 = vmatpush1.bf16.xpose.msra.mxu0 0
      %1914 = vmatprep.subr.bf16.mxu0 0
      %1915 = vmatpush1.bf16.xpose.msra.mxu0 0
      %1916 = vmatprep.subr.bf16.mxu0 0
      %1917 = vmatpush1.bf16.xpose.msra.mxu0 %v1900
      %1918 = vmatprep.subr.bf16.mxu0 0
      %1919 = vmatpush2.bf16.xpose.msra.mxu0 0
      %1920 = vmatprep.subr.bf16.mxu0 0
      %1921 = vmatpush2.bf16.xpose.msra.mxu0 0
      %1922 = vmatprep.subr.bf16.mxu0 0
      %1923 = vmatpush2.bf16.xpose.msra.mxu0 0
      %1924 = vmatprep.subr.bf16.mxu0 0
      %1925 = vmatpush2.bf16.xpose.msra.mxu0 0
      %1926 = vmatprep.subr.bf16.mxu0 0
      %1927 = vmatpush2.bf16.xpose.msra.mxu0 0
      %1928 = vmatprep.subr.bf16.mxu0 0
      %1929 = vmatpush2.bf16.xpose.msra.mxu0 0
      %1930 = vmatprep.subr.bf16.mxu0 0
      %1931 = vmatpush2.bf16.xpose.msra.mxu0 0
      %1932 = vmatprep.subr.bf16.mxu0 0
      %1933 = vmatpush2.bf16.xpose.msra.mxu0 0
      %1934 = vmatprep.mubr.bf16.mxu0 0
      %1935 = vmatmul.mubr.bf16.gmra.mxu0 %v1897
      %v1936 = vpop.f32.mrf.mxu0
      %v1937 = vadd.f32 0.0, %v1936
      %v1938 = vpop.f32.mrf.mxu0
      %v1939 = vpop.f32.mrf.mxu0
      %v1940 = vadd.f32 0.0, %v1939
      %v1941 = vpop.f32.mrf.mxu0
      %1942 = vdwg.mxu0
      %v1943 = vsel %vm1001, %v1937, -inf
      %1944 = vmax.xlane.f32.xlu0 %v1943
      %v1945 = vpop.xlane.xlu0 %1944
      %v1946 = vsel %vm1005, %v1940, -inf
      %1947 = vmax.xlane.f32.xlu0 %v1946
      %v1948 = vpop.xlane.xlu0 %1947
      %v1949 = vsub.f32 %v1937, %v1945
      %v1950 = vsub.f32 %v1940, %v1948
      %v1951 = vmul.f32 %v1949, 1.442695
      %v1952 = vpow.pop %v1951
      %v1953 = vmul.f32 %v1950, 1.442695
      %v1954 = vpow.pop %v1953
      %v1955 = vsel %vm1001, %v1952, 0.0
      %1956 = vadd.xlane.f32.xlu0 %v1955
      %v1957 = vpop.xlane.xlu0 %1956
      %v1958 = vsel %vm1005, %v1954, 0.0
      %1959 = vadd.xlane.f32.xlu0 %v1958
      %v1960 = vpop.xlane.xlu0 %1959
      %v1961 = vrcp.pop %v1957
      %v1962 = vrcp.pop %v1960
      %v1963 = vmul.f32 %v1952, %v1961
      %v1964 = vmul.f32 %v1954, %v1962
      %v1965 = vpack.c.bf16 %v1964, %v1963
      %1967 = vrot.lane.b32.xlu0 %v1895, 64
      %v1968 = vpop.permute.xlu0 %1967
      %v1970 = vsel %vm1001, %v1965, 0
      %v1973 = vsel %vm1029, %v1968, 0
      %1975 = vmatprep.subr.bf16.mxu0 0
      %1976 = vmatpush1.bf16.msra.mxu0 0
      %1977 = vmatprep.subr.bf16.mxu0 0
      %1978 = vmatpush1.bf16.msra.mxu0 0
      %1979 = vmatprep.subr.bf16.mxu0 0
      %1980 = vmatpush1.bf16.msra.mxu0 0
      %1981 = vmatprep.subr.bf16.mxu0 0
      %1982 = vmatpush1.bf16.msra.mxu0 0
      %1983 = vmatprep.subr.bf16.mxu0 0
      %1984 = vmatpush1.bf16.msra.mxu0 0
      %1985 = vmatprep.subr.bf16.mxu0 0
      %1986 = vmatpush1.bf16.msra.mxu0 0
      %1987 = vmatprep.subr.bf16.mxu0 0
      %1988 = vmatpush1.bf16.msra.mxu0 0
      %1989 = vmatprep.subr.bf16.mxu0 0
      %1990 = vmatpush1.bf16.msra.mxu0 %v1973
      %1991 = vmatprep.subr.bf16.mxu0 0
      %1992 = vmatpush2.bf16.msra.mxu0 0
      %1993 = vmatprep.subr.bf16.mxu0 0
      %1994 = vmatpush2.bf16.msra.mxu0 0
      %1995 = vmatprep.subr.bf16.mxu0 0
      %1996 = vmatpush2.bf16.msra.mxu0 0
      %1997 = vmatprep.subr.bf16.mxu0 0
      %1998 = vmatpush2.bf16.msra.mxu0 0
      %1999 = vmatprep.subr.bf16.mxu0 0
      %2000 = vmatpush2.bf16.msra.mxu0 0
      %2001 = vmatprep.subr.bf16.mxu0 0
      %2002 = vmatpush2.bf16.msra.mxu0 0
      %2003 = vmatprep.subr.bf16.mxu0 0
      %2004 = vmatpush2.bf16.msra.mxu0 0
      %2005 = vmatprep.subr.bf16.mxu0 0
      %2006 = vmatpush2.bf16.msra.mxu0 0
      %2007 = vmatprep.mubr.bf16.mxu0 0
      %2008 = vmatmul.mubr.bf16.gmra.mxu0 %v1970
      %v2009 = vpop.f32.mrf.mxu0
      %v2010 = vadd.f32 0.0, %v2009
      %v2011 = vpop.f32.mrf.mxu0
      %v2012 = vpop.f32.mrf.mxu0
      %v2013 = vadd.f32 0.0, %v2012
      %v2014 = vpop.f32.mrf.mxu0
      %2015 = vdwg.mxu0
      %v2016 = vpack.c.bf16 %v2013, %v2010
      %2018 = vrot.lane.b32.xlu0 %v1894, 112
      %v2019 = vpop.permute.xlu0 %2018
      %2020 = vrot.lane.b32.xlu0 %v1895, 112
      %v2021 = vpop.permute.xlu0 %2020
      %v2023 = vsel %vm951, %v2019, 0
      %v2026 = vsel %vm951, %v2021, 0
      %2028 = vmatprep.subr.bf16.mxu0 0
      %2029 = vmatpush1.bf16.xpose.msra.mxu0 0
      %2030 = vmatprep.subr.bf16.mxu0 0
      %2031 = vmatpush1.bf16.xpose.msra.mxu0 0
      %2032 = vmatprep.subr.bf16.mxu0 0
      %2033 = vmatpush1.bf16.xpose.msra.mxu0 0
      %2034 = vmatprep.subr.bf16.mxu0 0
      %2035 = vmatpush1.bf16.xpose.msra.mxu0 0
      %2036 = vmatprep.subr.bf16.mxu0 0
      %2037 = vmatpush1.bf16.xpose.msra.mxu0 0
      %2038 = vmatprep.subr.bf16.mxu0 0
      %2039 = vmatpush1.bf16.xpose.msra.mxu0 0
      %2040 = vmatprep.subr.bf16.mxu0 0
      %2041 = vmatpush1.bf16.xpose.msra.mxu0 0
      %2042 = vmatprep.subr.bf16.mxu0 0
      %2043 = vmatpush1.bf16.xpose.msra.mxu0 %v2026
      %2044 = vmatprep.subr.bf16.mxu0 0
      %2045 = vmatpush2.bf16.xpose.msra.mxu0 0
      %2046 = vmatprep.subr.bf16.mxu0 0
      %2047 = vmatpush2.bf16.xpose.msra.mxu0 0
      %2048 = vmatprep.subr.bf16.mxu0 0
      %2049 = vmatpush2.bf16.xpose.msra.mxu0 0
      %2050 = vmatprep.subr.bf16.mxu0 0
      %2051 = vmatpush2.bf16.xpose.msra.mxu0 0
      %2052 = vmatprep.subr.bf16.mxu0 0
      %2053 = vmatpush2.bf16.xpose.msra.mxu0 0
      %2054 = vmatprep.subr.bf16.mxu0 0
      %2055 = vmatpush2.bf16.xpose.msra.mxu0 0
      %2056 = vmatprep.subr.bf16.mxu0 0
      %2057 = vmatpush2.bf16.xpose.msra.mxu0 0
      %2058 = vmatprep.subr.bf16.mxu0 0
      %2059 = vmatpush2.bf16.xpose.msra.mxu0 0
      %2060 = vmatprep.mubr.bf16.mxu0 0
      %2061 = vmatmul.mubr.bf16.gmra.mxu0 %v2023
      %v2062 = vpop.f32.mrf.mxu0
      %v2063 = vadd.f32 0.0, %v2062
      %v2064 = vpop.f32.mrf.mxu0
      %v2065 = vpop.f32.mrf.mxu0
      %v2066 = vadd.f32 0.0, %v2065
      %v2067 = vpop.f32.mrf.mxu0
      %2068 = vdwg.mxu0
      %v2069 = vsel %vm1001, %v2063, -inf
      %2070 = vmax.xlane.f32.xlu0 %v2069
      %v2071 = vpop.xlane.xlu0 %2070
      %v2072 = vsel %vm1005, %v2066, -inf
      %2073 = vmax.xlane.f32.xlu0 %v2072
      %v2074 = vpop.xlane.xlu0 %2073
      %v2075 = vsub.f32 %v2063, %v2071
      %v2076 = vsub.f32 %v2066, %v2074
      %v2077 = vmul.f32 %v2075, 1.442695
      %v2078 = vpow.pop %v2077
      %v2079 = vmul.f32 %v2076, 1.442695
      %v2080 = vpow.pop %v2079
      %v2081 = vsel %vm1001, %v2078, 0.0
      %2082 = vadd.xlane.f32.xlu0 %v2081
      %v2083 = vpop.xlane.xlu0 %2082
      %v2084 = vsel %vm1005, %v2080, 0.0
      %2085 = vadd.xlane.f32.xlu0 %v2084
      %v2086 = vpop.xlane.xlu0 %2085
      %v2087 = vrcp.pop %v2083
      %v2088 = vrcp.pop %v2086
      %v2089 = vmul.f32 %v2078, %v2087
      %v2090 = vmul.f32 %v2080, %v2088
      %v2091 = vpack.c.bf16 %v2090, %v2089
      %2092 = vrot.lane.b32.xlu0 %v1895, 48
      %v2093 = vpop.permute.xlu0 %2092
      %v2095 = vsel %vm1001, %v2091, 0
      %v2098 = vsel %vm1029, %v2093, 0
      %2100 = vmatprep.subr.bf16.mxu0 0
      %2101 = vmatpush1.bf16.msra.mxu0 0
      %2102 = vmatprep.subr.bf16.mxu0 0
      %2103 = vmatpush1.bf16.msra.mxu0 0
      %2104 = vmatprep.subr.bf16.mxu0 0
      %2105 = vmatpush1.bf16.msra.mxu0 0
      %2106 = vmatprep.subr.bf16.mxu0 0
      %2107 = vmatpush1.bf16.msra.mxu0 0
      %2108 = vmatprep.subr.bf16.mxu0 0
      %2109 = vmatpush1.bf16.msra.mxu0 0
      %2110 = vmatprep.subr.bf16.mxu0 0
      %2111 = vmatpush1.bf16.msra.mxu0 0
      %2112 = vmatprep.subr.bf16.mxu0 0
      %2113 = vmatpush1.bf16.msra.mxu0 0
      %2114 = vmatprep.subr.bf16.mxu0 0
      %2115 = vmatpush1.bf16.msra.mxu0 %v2098
      %2116 = vmatprep.subr.bf16.mxu0 0
      %2117 = vmatpush2.bf16.msra.mxu0 0
      %2118 = vmatprep.subr.bf16.mxu0 0
      %2119 = vmatpush2.bf16.msra.mxu0 0
      %2120 = vmatprep.subr.bf16.mxu0 0
      %2121 = vmatpush2.bf16.msra.mxu0 0
      %2122 = vmatprep.subr.bf16.mxu0 0
      %2123 = vmatpush2.bf16.msra.mxu0 0
      %2124 = vmatprep.subr.bf16.mxu0 0
      %2125 = vmatpush2.bf16.msra.mxu0 0
      %2126 = vmatprep.subr.bf16.mxu0 0
      %2127 = vmatpush2.bf16.msra.mxu0 0
      %2128 = vmatprep.subr.bf16.mxu0 0
      %2129 = vmatpush2.bf16.msra.mxu0 0
      %2130 = vmatprep.subr.bf16.mxu0 0
      %2131 = vmatpush2.bf16.msra.mxu0 0
      %2132 = vmatprep.mubr.bf16.mxu0 0
      %2133 = vmatmul.mubr.bf16.gmra.mxu0 %v2095
      %v2134 = vpop.f32.mrf.mxu0
      %v2135 = vadd.f32 0.0, %v2134
      %v2136 = vpop.f32.mrf.mxu0
      %v2137 = vpop.f32.mrf.mxu0
      %v2138 = vadd.f32 0.0, %v2137
      %v2139 = vpop.f32.mrf.mxu0
      %2140 = vdwg.mxu0
      %v2141 = vpack.c.bf16 %v2138, %v2135
      %v2144 = vunpack.c.l.b16 %v1733
      %v2145 = vunpack.c.l.b16 %v1734
      %v2146 = vpack.c.b16 %v2145, %v2144
      %v2149 = vsel %vm951, %v2141, 0
      %2151 = vmatprep.subr.bf16.mxu0 0
      %2152 = vmatpush1.bf16.msra.mxu0 0
      %2153 = vmatprep.subr.bf16.mxu0 0
      %2154 = vmatpush1.bf16.msra.mxu0 0
      %2155 = vmatprep.subr.bf16.mxu0 0
      %2156 = vmatpush1.bf16.msra.mxu0 0
      %2157 = vmatprep.subr.bf16.mxu0 0
      %2158 = vmatpush1.bf16.msra.mxu0 0
      %2159 = vmatprep.subr.bf16.mxu0 0
      %2160 = vmatpush1.bf16.msra.mxu0 0
      %2161 = vmatprep.subr.bf16.mxu0 0
      %2162 = vmatpush1.bf16.msra.mxu0 0
      %2163 = vmatprep.subr.bf16.mxu0 0
      %2164 = vmatpush1.bf16.msra.mxu0 0
      %2165 = vmatprep.subr.bf16.mxu0 0
      %2166 = vmatpush1.bf16.msra.mxu0 %v2146
      %2167 = vmatprep.subr.bf16.mxu0 0
      %2168 = vmatpush2.bf16.msra.mxu0 0
      %2169 = vmatprep.subr.bf16.mxu0 0
      %2170 = vmatpush2.bf16.msra.mxu0 0
      %2171 = vmatprep.subr.bf16.mxu0 0
      %2172 = vmatpush2.bf16.msra.mxu0 0
      %2173 = vmatprep.subr.bf16.mxu0 0
      %2174 = vmatpush2.bf16.msra.mxu0 0
      %2175 = vmatprep.subr.bf16.mxu0 0
      %2176 = vmatpush2.bf16.msra.mxu0 0
      %2177 = vmatprep.subr.bf16.mxu0 0
      %2178 = vmatpush2.bf16.msra.mxu0 0
      %2179 = vmatprep.subr.bf16.mxu0 0
      %2180 = vmatpush2.bf16.msra.mxu0 0
      %2181 = vmatprep.subr.bf16.mxu0 0
      %2182 = vmatpush2.bf16.msra.mxu0 0
      %2183 = vmatprep.mubr.bf16.mxu0 0
      %2184 = vmatmul.mubr.bf16.gmra.mxu0 %v2149
      %v2185 = vpop.f32.mrf.mxu0
      %v2186 = vadd.f32 0.0, %v2185
      %v2187 = vpop.f32.mrf.mxu0
      %v2188 = vpop.f32.mrf.mxu0
      %v2189 = vadd.f32 0.0, %v2188
      %v2190 = vpop.f32.mrf.mxu0
      %2191 = vdwg.mxu0
      %v2194 = vunpack.c.l.b16 %v1731
      %v2195 = vunpack.c.l.b16 %v1732
      %v2196 = vpack.c.b16 %v2195, %v2194
      %v2199 = vsel %vm951, %v2016, 0
      %2201 = vmatprep.subr.bf16.mxu0 0
      %2202 = vmatpush1.bf16.msra.mxu0 0
      %2203 = vmatprep.subr.bf16.mxu0 0
      %2204 = vmatpush1.bf16.msra.mxu0 0
      %2205 = vmatprep.subr.bf16.mxu0 0
      %2206 = vmatpush1.bf16.msra.mxu0 0
      %2207 = vmatprep.subr.bf16.mxu0 0
      %2208 = vmatpush1.bf16.msra.mxu0 0
      %2209 = vmatprep.subr.bf16.mxu0 0
      %2210 = vmatpush1.bf16.msra.mxu0 0
      %2211 = vmatprep.subr.bf16.mxu0 0
      %2212 = vmatpush1.bf16.msra.mxu0 0
      %2213 = vmatprep.subr.bf16.mxu0 0
      %2214 = vmatpush1.bf16.msra.mxu0 0
      %2215 = vmatprep.subr.bf16.mxu0 0
      %2216 = vmatpush1.bf16.msra.mxu0 %v2196
      %2217 = vmatprep.subr.bf16.mxu0 0
      %2218 = vmatpush2.bf16.msra.mxu0 0
      %2219 = vmatprep.subr.bf16.mxu0 0
      %2220 = vmatpush2.bf16.msra.mxu0 0
      %2221 = vmatprep.subr.bf16.mxu0 0
      %2222 = vmatpush2.bf16.msra.mxu0 0
      %2223 = vmatprep.subr.bf16.mxu0 0
      %2224 = vmatpush2.bf16.msra.mxu0 0
      %2225 = vmatprep.subr.bf16.mxu0 0
      %2226 = vmatpush2.bf16.msra.mxu0 0
      %2227 = vmatprep.subr.bf16.mxu0 0
      %2228 = vmatpush2.bf16.msra.mxu0 0
      %2229 = vmatprep.subr.bf16.mxu0 0
      %2230 = vmatpush2.bf16.msra.mxu0 0
      %2231 = vmatprep.subr.bf16.mxu0 0
      %2232 = vmatpush2.bf16.msra.mxu0 0
      %2233 = vmatprep.mubr.bf16.mxu0 0
      %2234 = vmatmul.mubr.bf16.gmra.mxu0 %v2199
      %v2235 = vpop.f32.mrf.mxu0
      %v2236 = vadd.f32 %v2186, %v2235
      %v2237 = vpop.f32.mrf.mxu0
      %v2238 = vpop.f32.mrf.mxu0
      %v2239 = vadd.f32 %v2189, %v2238
      %v2240 = vpop.f32.mrf.mxu0
      %2241 = vdwg.mxu0
      %2242 = vrot.lane.b32.xlu0 %v1894, 96
      %v2243 = vpop.permute.xlu0 %2242
      %2244 = vrot.lane.b32.xlu0 %v1895, 96
      %v2245 = vpop.permute.xlu0 %2244
      %v2247 = vsel %vm951, %v2243, 0
      %v2250 = vsel %vm951, %v2245, 0
      %2252 = vmatprep.subr.bf16.mxu0 0
      %2253 = vmatpush1.bf16.xpose.msra.mxu0 0
      %2254 = vmatprep.subr.bf16.mxu0 0
      %2255 = vmatpush1.bf16.xpose.msra.mxu0 0
      %2256 = vmatprep.subr.bf16.mxu0 0
      %2257 = vmatpush1.bf16.xpose.msra.mxu0 0
      %2258 = vmatprep.subr.bf16.mxu0 0
      %2259 = vmatpush1.bf16.xpose.msra.mxu0 0
      %2260 = vmatprep.subr.bf16.mxu0 0
      %2261 = vmatpush1.bf16.xpose.msra.mxu0 0
      %2262 = vmatprep.subr.bf16.mxu0 0
      %2263 = vmatpush1.bf16.xpose.msra.mxu0 0
      %2264 = vmatprep.subr.bf16.mxu0 0
      %2265 = vmatpush1.bf16.xpose.msra.mxu0 0
      %2266 = vmatprep.subr.bf16.mxu0 0
      %2267 = vmatpush1.bf16.xpose.msra.mxu0 %v2250
      %2268 = vmatprep.subr.bf16.mxu0 0
      %2269 = vmatpush2.bf16.xpose.msra.mxu0 0
      %2270 = vmatprep.subr.bf16.mxu0 0
      %2271 = vmatpush2.bf16.xpose.msra.mxu0 0
      %2272 = vmatprep.subr.bf16.mxu0 0
      %2273 = vmatpush2.bf16.xpose.msra.mxu0 0
      %2274 = vmatprep.subr.bf16.mxu0 0
      %2275 = vmatpush2.bf16.xpose.msra.mxu0 0
      %2276 = vmatprep.subr.bf16.mxu0 0
      %2277 = vmatpush2.bf16.xpose.msra.mxu0 0
      %2278 = vmatprep.subr.bf16.mxu0 0
      %2279 = vmatpush2.bf16.xpose.msra.mxu0 0
      %2280 = vmatprep.subr.bf16.mxu0 0
      %2281 = vmatpush2.bf16.xpose.msra.mxu0 0
      %2282 = vmatprep.subr.bf16.mxu0 0
      %2283 = vmatpush2.bf16.xpose.msra.mxu0 0
      %2284 = vmatprep.mubr.bf16.mxu0 0
      %2285 = vmatmul.mubr.bf16.gmra.mxu0 %v2247
      %v2286 = vpop.f32.mrf.mxu0
      %v2287 = vadd.f32 0.0, %v2286
      %v2288 = vpop.f32.mrf.mxu0
      %v2289 = vpop.f32.mrf.mxu0
      %v2290 = vadd.f32 0.0, %v2289
      %v2291 = vpop.f32.mrf.mxu0
      %2292 = vdwg.mxu0
      %v2293 = vsel %vm1001, %v2287, -inf
      %2294 = vmax.xlane.f32.xlu0 %v2293
      %v2295 = vpop.xlane.xlu0 %2294
      %v2296 = vsel %vm1005, %v2290, -inf
      %2297 = vmax.xlane.f32.xlu0 %v2296
      %v2298 = vpop.xlane.xlu0 %2297
      %v2299 = vsub.f32 %v2287, %v2295
      %v2300 = vsub.f32 %v2290, %v2298
      %v2301 = vmul.f32 %v2299, 1.442695
      %v2302 = vpow.pop %v2301
      %v2303 = vmul.f32 %v2300, 1.442695
      %v2304 = vpow.pop %v2303
      %v2305 = vsel %vm1001, %v2302, 0.0
      %2306 = vadd.xlane.f32.xlu0 %v2305
      %v2307 = vpop.xlane.xlu0 %2306
      %v2308 = vsel %vm1005, %v2304, 0.0
      %2309 = vadd.xlane.f32.xlu0 %v2308
      %v2310 = vpop.xlane.xlu0 %2309
      %v2311 = vrcp.pop %v2307
      %v2312 = vrcp.pop %v2310
      %v2313 = vmul.f32 %v2302, %v2311
      %v2314 = vmul.f32 %v2304, %v2312
      %v2315 = vpack.c.bf16 %v2314, %v2313
      %2316 = vrot.lane.b32.xlu0 %v1895, 32
      %v2317 = vpop.permute.xlu0 %2316
      %v2319 = vsel %vm1001, %v2315, 0
      %v2322 = vsel %vm1029, %v2317, 0
      %2324 = vmatprep.subr.bf16.mxu0 0
      %2325 = vmatpush1.bf16.msra.mxu0 0
      %2326 = vmatprep.subr.bf16.mxu0 0
      %2327 = vmatpush1.bf16.msra.mxu0 0
      %2328 = vmatprep.subr.bf16.mxu0 0
      %2329 = vmatpush1.bf16.msra.mxu0 0
      %2330 = vmatprep.subr.bf16.mxu0 0
      %2331 = vmatpush1.bf16.msra.mxu0 0
      %2332 = vmatprep.subr.bf16.mxu0 0
      %2333 = vmatpush1.bf16.msra.mxu0 0
      %2334 = vmatprep.subr.bf16.mxu0 0
      %2335 = vmatpush1.bf16.msra.mxu0 0
      %2336 = vmatprep.subr.bf16.mxu0 0
      %2337 = vmatpush1.bf16.msra.mxu0 0
      %2338 = vmatprep.subr.bf16.mxu0 0
      %2339 = vmatpush1.bf16.msra.mxu0 %v2322
      %2340 = vmatprep.subr.bf16.mxu0 0
      %2341 = vmatpush2.bf16.msra.mxu0 0
      %2342 = vmatprep.subr.bf16.mxu0 0
      %2343 = vmatpush2.bf16.msra.mxu0 0
      %2344 = vmatprep.subr.bf16.mxu0 0
      %2345 = vmatpush2.bf16.msra.mxu0 0
      %2346 = vmatprep.subr.bf16.mxu0 0
      %2347 = vmatpush2.bf16.msra.mxu0 0
      %2348 = vmatprep.subr.bf16.mxu0 0
      %2349 = vmatpush2.bf16.msra.mxu0 0
      %2350 = vmatprep.subr.bf16.mxu0 0
      %2351 = vmatpush2.bf16.msra.mxu0 0
      %2352 = vmatprep.subr.bf16.mxu0 0
      %2353 = vmatpush2.bf16.msra.mxu0 0
      %2354 = vmatprep.subr.bf16.mxu0 0
      %2355 = vmatpush2.bf16.msra.mxu0 0
      %2356 = vmatprep.mubr.bf16.mxu0 0
      %2357 = vmatmul.mubr.bf16.gmra.mxu0 %v2319
      %v2358 = vpop.f32.mrf.mxu0
      %v2359 = vadd.f32 0.0, %v2358
      %v2360 = vpop.f32.mrf.mxu0
      %v2361 = vpop.f32.mrf.mxu0
      %v2362 = vadd.f32 0.0, %v2361
      %v2363 = vpop.f32.mrf.mxu0
      %2364 = vdwg.mxu0
      %v2365 = vpack.c.bf16 %v2362, %v2359
      %v2368 = vunpack.c.l.b16 %v1735
      %v2369 = vunpack.c.l.b16 %v1736
      %v2370 = vpack.c.b16 %v2369, %v2368
      %v2373 = vsel %vm951, %v2365, 0
      %2375 = vmatprep.subr.bf16.mxu0 0
      %2376 = vmatpush1.bf16.msra.mxu0 0
      %2377 = vmatprep.subr.bf16.mxu0 0
      %2378 = vmatpush1.bf16.msra.mxu0 0
      %2379 = vmatprep.subr.bf16.mxu0 0
      %2380 = vmatpush1.bf16.msra.mxu0 0
      %2381 = vmatprep.subr.bf16.mxu0 0
      %2382 = vmatpush1.bf16.msra.mxu0 0
      %2383 = vmatprep.subr.bf16.mxu0 0
      %2384 = vmatpush1.bf16.msra.mxu0 0
      %2385 = vmatprep.subr.bf16.mxu0 0
      %2386 = vmatpush1.bf16.msra.mxu0 0
      %2387 = vmatprep.subr.bf16.mxu0 0
      %2388 = vmatpush1.bf16.msra.mxu0 0
      %2389 = vmatprep.subr.bf16.mxu0 0
      %2390 = vmatpush1.bf16.msra.mxu0 %v2370
      %2391 = vmatprep.subr.bf16.mxu0 0
      %2392 = vmatpush2.bf16.msra.mxu0 0
      %2393 = vmatprep.subr.bf16.mxu0 0
      %2394 = vmatpush2.bf16.msra.mxu0 0
      %2395 = vmatprep.subr.bf16.mxu0 0
      %2396 = vmatpush2.bf16.msra.mxu0 0
      %2397 = vmatprep.subr.bf16.mxu0 0
      %2398 = vmatpush2.bf16.msra.mxu0 0
      %2399 = vmatprep.subr.bf16.mxu0 0
      %2400 = vmatpush2.bf16.msra.mxu0 0
      %2401 = vmatprep.subr.bf16.mxu0 0
      %2402 = vmatpush2.bf16.msra.mxu0 0
      %2403 = vmatprep.subr.bf16.mxu0 0
      %2404 = vmatpush2.bf16.msra.mxu0 0
      %2405 = vmatprep.subr.bf16.mxu0 0
      %2406 = vmatpush2.bf16.msra.mxu0 0
      %2407 = vmatprep.mubr.bf16.mxu0 0
      %2408 = vmatmul.mubr.bf16.gmra.mxu0 %v2373
      %v2409 = vpop.f32.mrf.mxu0
      %v2410 = vadd.f32 0.0, %v2409
      %v2411 = vpop.f32.mrf.mxu0
      %v2412 = vpop.f32.mrf.mxu0
      %v2413 = vadd.f32 0.0, %v2412
      %v2414 = vpop.f32.mrf.mxu0
      %2415 = vdwg.mxu0
      %v2416 = vadd.f32 %v2236, %v2410
      %v2417 = vadd.f32 %v2239, %v2413
      %2418 = vrot.lane.b32.xlu0 %v1894, 80
      %v2419 = vpop.permute.xlu0 %2418
      %2420 = vrot.lane.b32.xlu0 %v1895, 80
      %v2421 = vpop.permute.xlu0 %2420
      %v2423 = vsel %vm951, %v2419, 0
      %v2426 = vsel %vm951, %v2421, 0
      %2428 = vmatprep.subr.bf16.mxu0 0
      %2429 = vmatpush1.bf16.xpose.msra.mxu0 0
      %2430 = vmatprep.subr.bf16.mxu0 0
      %2431 = vmatpush1.bf16.xpose.msra.mxu0 0
      %2432 = vmatprep.subr.bf16.mxu0 0
      %2433 = vmatpush1.bf16.xpose.msra.mxu0 0
      %2434 = vmatprep.subr.bf16.mxu0 0
      %2435 = vmatpush1.bf16.xpose.msra.mxu0 0
      %2436 = vmatprep.subr.bf16.mxu0 0
      %2437 = vmatpush1.bf16.xpose.msra.mxu0 0
      %2438 = vmatprep.subr.bf16.mxu0 0
      %2439 = vmatpush1.bf16.xpose.msra.mxu0 0
      %2440 = vmatprep.subr.bf16.mxu0 0
      %2441 = vmatpush1.bf16.xpose.msra.mxu0 0
      %2442 = vmatprep.subr.bf16.mxu0 0
      %2443 = vmatpush1.bf16.xpose.msra.mxu0 %v2426
      %2444 = vmatprep.subr.bf16.mxu0 0
      %2445 = vmatpush2.bf16.xpose.msra.mxu0 0
      %2446 = vmatprep.subr.bf16.mxu0 0
      %2447 = vmatpush2.bf16.xpose.msra.mxu0 0
      %2448 = vmatprep.subr.bf16.mxu0 0
      %2449 = vmatpush2.bf16.xpose.msra.mxu0 0
      %2450 = vmatprep.subr.bf16.mxu0 0
      %2451 = vmatpush2.bf16.xpose.msra.mxu0 0
      %2452 = vmatprep.subr.bf16.mxu0 0
      %2453 = vmatpush2.bf16.xpose.msra.mxu0 0
      %2454 = vmatprep.subr.bf16.mxu0 0
      %2455 = vmatpush2.bf16.xpose.msra.mxu0 0
      %2456 = vmatprep.subr.bf16.mxu0 0
      %2457 = vmatpush2.bf16.xpose.msra.mxu0 0
      %2458 = vmatprep.subr.bf16.mxu0 0
      %2459 = vmatpush2.bf16.xpose.msra.mxu0 0
      %2460 = vmatprep.mubr.bf16.mxu0 0
      %2461 = vmatmul.mubr.bf16.gmra.mxu0 %v2423
      %v2462 = vpop.f32.mrf.mxu0
      %v2463 = vadd.f32 0.0, %v2462
      %v2464 = vpop.f32.mrf.mxu0
      %v2465 = vpop.f32.mrf.mxu0
      %v2466 = vadd.f32 0.0, %v2465
      %v2467 = vpop.f32.mrf.mxu0
      %2468 = vdwg.mxu0
      %v2469 = vsel %vm1001, %v2463, -inf
      %2470 = vmax.xlane.f32.xlu0 %v2469
      %v2471 = vpop.xlane.xlu0 %2470
      %v2472 = vsel %vm1005, %v2466, -inf
      %2473 = vmax.xlane.f32.xlu0 %v2472
      %v2474 = vpop.xlane.xlu0 %2473
      %v2475 = vsub.f32 %v2463, %v2471
      %v2476 = vsub.f32 %v2466, %v2474
      %v2477 = vmul.f32 %v2475, 1.442695
      %v2478 = vpow.pop %v2477
      %v2479 = vmul.f32 %v2476, 1.442695
      %v2480 = vpow.pop %v2479
      %v2481 = vsel %vm1001, %v2478, 0.0
      %2482 = vadd.xlane.f32.xlu0 %v2481
      %v2483 = vpop.xlane.xlu0 %2482
      %v2484 = vsel %vm1005, %v2480, 0.0
      %2485 = vadd.xlane.f32.xlu0 %v2484
      %v2486 = vpop.xlane.xlu0 %2485
      %v2487 = vrcp.pop %v2483
      %v2488 = vrcp.pop %v2486
      %v2489 = vmul.f32 %v2478, %v2487
      %v2490 = vmul.f32 %v2480, %v2488
      %v2491 = vpack.c.bf16 %v2490, %v2489
      %2492 = vrot.lane.b32.xlu0 %v1895, 16
      %v2493 = vpop.permute.xlu0 %2492
      %v2495 = vsel %vm1001, %v2491, 0
      %v2498 = vsel %vm1029, %v2493, 0
      %2500 = vmatprep.subr.bf16.mxu0 0
      %2501 = vmatpush1.bf16.msra.mxu0 0
      %2502 = vmatprep.subr.bf16.mxu0 0
      %2503 = vmatpush1.bf16.msra.mxu0 0
      %2504 = vmatprep.subr.bf16.mxu0 0
      %2505 = vmatpush1.bf16.msra.mxu0 0
      %2506 = vmatprep.subr.bf16.mxu0 0
      %2507 = vmatpush1.bf16.msra.mxu0 0
      %2508 = vmatprep.subr.bf16.mxu0 0
      %2509 = vmatpush1.bf16.msra.mxu0 0
      %2510 = vmatprep.subr.bf16.mxu0 0
      %2511 = vmatpush1.bf16.msra.mxu0 0
      %2512 = vmatprep.subr.bf16.mxu0 0
      %2513 = vmatpush1.bf16.msra.mxu0 0
      %2514 = vmatprep.subr.bf16.mxu0 0
      %2515 = vmatpush1.bf16.msra.mxu0 %v2498
      %2516 = vmatprep.subr.bf16.mxu0 0
      %2517 = vmatpush2.bf16.msra.mxu0 0
      %2518 = vmatprep.subr.bf16.mxu0 0
      %2519 = vmatpush2.bf16.msra.mxu0 0
      %2520 = vmatprep.subr.bf16.mxu0 0
      %2521 = vmatpush2.bf16.msra.mxu0 0
      %2522 = vmatprep.subr.bf16.mxu0 0
      %2523 = vmatpush2.bf16.msra.mxu0 0
      %2524 = vmatprep.subr.bf16.mxu0 0
      %2525 = vmatpush2.bf16.msra.mxu0 0
      %2526 = vmatprep.subr.bf16.mxu0 0
      %2527 = vmatpush2.bf16.msra.mxu0 0
      %2528 = vmatprep.subr.bf16.mxu0 0
      %2529 = vmatpush2.bf16.msra.mxu0 0
      %2530 = vmatprep.subr.bf16.mxu0 0
      %2531 = vmatpush2.bf16.msra.mxu0 0
      %2532 = vmatprep.mubr.bf16.mxu0 0
      %2533 = vmatmul.mubr.bf16.gmra.mxu0 %v2495
      %v2534 = vpop.f32.mrf.mxu0
      %v2535 = vadd.f32 0.0, %v2534
      %v2536 = vpop.f32.mrf.mxu0
      %v2537 = vpop.f32.mrf.mxu0
      %v2538 = vadd.f32 0.0, %v2537
      %v2539 = vpop.f32.mrf.mxu0
      %2540 = vdwg.mxu0
      %v2541 = vpack.c.bf16 %v2538, %v2535
      %v2544 = vunpack.c.l.b16 %v1737
      %v2545 = vunpack.c.l.b16 %v1738
      %v2546 = vpack.c.b16 %v2545, %v2544
      %v2549 = vsel %vm951, %v2541, 0
      %2551 = vmatprep.subr.bf16.mxu0 0
      %2552 = vmatpush1.bf16.msra.mxu0 0
      %2553 = vmatprep.subr.bf16.mxu0 0
      %2554 = vmatpush1.bf16.msra.mxu0 0
      %2555 = vmatprep.subr.bf16.mxu0 0
      %2556 = vmatpush1.bf16.msra.mxu0 0
      %2557 = vmatprep.subr.bf16.mxu0 0
      %2558 = vmatpush1.bf16.msra.mxu0 0
      %2559 = vmatprep.subr.bf16.mxu0 0
      %2560 = vmatpush1.bf16.msra.mxu0 0
      %2561 = vmatprep.subr.bf16.mxu0 0
      %2562 = vmatpush1.bf16.msra.mxu0 0
      %2563 = vmatprep.subr.bf16.mxu0 0
      %2564 = vmatpush1.bf16.msra.mxu0 0
      %2565 = vmatprep.subr.bf16.mxu0 0
      %2566 = vmatpush1.bf16.msra.mxu0 %v2546
      %2567 = vmatprep.subr.bf16.mxu0 0
      %2568 = vmatpush2.bf16.msra.mxu0 0
      %2569 = vmatprep.subr.bf16.mxu0 0
      %2570 = vmatpush2.bf16.msra.mxu0 0
      %2571 = vmatprep.subr.bf16.mxu0 0
      %2572 = vmatpush2.bf16.msra.mxu0 0
      %2573 = vmatprep.subr.bf16.mxu0 0
      %2574 = vmatpush2.bf16.msra.mxu0 0
      %2575 = vmatprep.subr.bf16.mxu0 0
      %2576 = vmatpush2.bf16.msra.mxu0 0
      %2577 = vmatprep.subr.bf16.mxu0 0
      %2578 = vmatpush2.bf16.msra.mxu0 0
      %2579 = vmatprep.subr.bf16.mxu0 0
      %2580 = vmatpush2.bf16.msra.mxu0 0
      %2581 = vmatprep.subr.bf16.mxu0 0
      %2582 = vmatpush2.bf16.msra.mxu0 0
      %2583 = vmatprep.mubr.bf16.mxu0 0
      %2584 = vmatmul.mubr.bf16.gmra.mxu0 %v2549
      %v2585 = vpop.f32.mrf.mxu0
      %v2586 = vadd.f32 0.0, %v2585
      %v2587 = vpop.f32.mrf.mxu0
      %v2588 = vpop.f32.mrf.mxu0
      %v2589 = vadd.f32 0.0, %v2588
      %v2590 = vpop.f32.mrf.mxu0
      %2591 = vdwg.mxu0
      %v2592 = vadd.f32 %v2416, %v2586
      %v2593 = vadd.f32 %v2417, %v2589
      %v2595 = vlaneseq
      %v2596 = vshrl.u32 %v2595, 7
      %v2597 = vsub.s32 0, %v2596
      %v2598 = vrot.slane %v1739, %v2597
      %v2600 = vadd.f32 %v2592, %v2598
      %v2601 = vadd.f32 %v2593, %v2598
      %v2602 = vadd.f32 %v1711, %v2600
      %v2603 = vadd.f32 %v1712, %v2601
      %v2604 = vsel %vm889, %v2602, 0.0
      %2605 = vadd.xlane.f32.xlu0 %v2604
      %v2606 = vpop.xlane.xlu0 %2605
      %v2607 = vsel %vm1672, %v2603, 0.0
      %2608 = vadd.xlane.f32.xlu0 %v2607
      %v2609 = vpop.xlane.xlu0 %2608
      %v2610 = vmul.f32 %v2606, %v1676
      %v2611 = vmul.f32 %v2609, %v1676
      %v2612 = vsub.f32 %v2602, %v2610
      %v2613 = vsub.f32 %v2603, %v2611
      %v2614 = vmul.f32 %v2612, %v2612
      %v2615 = vmul.f32 %v2613, %v2613
      %v2616 = vsel %vm889, %v2614, 0.0
      %2617 = vadd.xlane.f32.xlu0 %v2616
      %v2618 = vpop.xlane.xlu0 %2617
      %v2619 = vsel %vm1672, %v2615, 0.0
      %2620 = vadd.xlane.f32.xlu0 %v2619
      %v2621 = vpop.xlane.xlu0 %2620
      %v2622 = vmul.f32 %v2618, %v1676
      %v2623 = vmul.f32 %v2621, %v1676
      %v2624 = vadd.f32 %v2622, 1e-05
      %v2625 = vadd.f32 %v2623, 1e-05
      %v2626 = vrsqrt.pop %v2624
      %v2627 = vrsqrt.pop %v2625
      %v2628 = vmul.f32 %v2612, %v2626
      %v2629 = vmul.f32 %v2613, %v2627
      %v2631 = vlaneseq
      %v2632 = vshrl.u32 %v2631, 7
      %v2633 = vsub.s32 0, %v2632
      %v2634 = vrot.slane %v1740, %v2633
      %v2636 = vmul.f32 %v2628, %v2634
      %v2637 = vmul.f32 %v2629, %v2634
      %v2639 = vlaneseq
      %v2640 = vshrl.u32 %v2639, 7
      %v2641 = vsub.s32 0, %v2640
      %v2642 = vrot.slane %v1741, %v2641
      %v2644 = vadd.f32 %v2636, %v2642
      %v2645 = vadd.f32 %v2637, %v2642
      %v2646 = vld [vmem:[%s16] sm:$0xf]
      %v2647 = vld [vmem:[%s16 + $0x4] sm:$0xf]
      %v2648 = vld [vmem:[%s16 + $0x8] sm:$0xf]
      %v2649 = vld [vmem:[%s16 + $0xc] sm:$0xf]
      %v2650 = vld [vmem:[%s16 + $0x10] sm:$0xf]
      %v2651 = vld [vmem:[%s16 + $0x14] sm:$0xf]
      %v2652 = vld [vmem:[%s16 + $0x18] sm:$0xf]
      %v2653 = vld [vmem:[%s16 + $0x1c] sm:$0xf]
      %v2654 = vld [vmem:[%s17] sm:$0x1]
      %v2655 = vld [vmem:[%s18] sm:$0xf]
      %v2656 = vld [vmem:[%s18 + $0x4] sm:$0xf]
      %v2657 = vld [vmem:[%s18 + $0x8] sm:$0xf]
      %v2658 = vld [vmem:[%s18 + $0xc] sm:$0xf]
      %v2659 = vld [vmem:[%s19] sm:$0x1]
      %v2660 = vld [vmem:[%s20] sm:$0x1]
      %v2661 = vld [vmem:[%s21] sm:$0x1]
      %v2662 = vpack.c.bf16 %v2645, %v2644
      %v2664 = vlaneseq
      %v2665 = vshrl.u32 %v2664, 7
      %v2666 = vsub.s32 0, %v2665
      %v2667 = vrot.slane %v2654, %v2666
      %v2677 = vunpack.c.l.b16 %v2646
      %v2678 = vunpack.c.l.b16 %v2647
      %v2679 = vunpack.c.l.b16 %v2648
      %v2680 = vunpack.c.l.b16 %v2649
      %v2681 = vunpack.c.l.b16 %v2650
      %v2682 = vunpack.c.l.b16 %v2651
      %v2683 = vunpack.c.l.b16 %v2652
      %v2684 = vunpack.c.l.b16 %v2653
      %v2685 = vpack.c.b16 %v2678, %v2677
      %v2686 = vpack.c.b16 %v2680, %v2679
      %v2687 = vpack.c.b16 %v2682, %v2681
      %v2688 = vpack.c.b16 %v2684, %v2683
      %v2694 = vsel %vm889, %v2662, 0
      %2696 = vmatprep.subr.bf16.mxu0 0
      %2697 = vmatpush1.bf16.msra.mxu0 0
      %2698 = vmatprep.subr.bf16.mxu0 0
      %2699 = vmatpush1.bf16.msra.mxu0 0
      %2700 = vmatprep.subr.bf16.mxu0 0
      %2701 = vmatpush1.bf16.msra.mxu0 0
      %2702 = vmatprep.subr.bf16.mxu0 0
      %2703 = vmatpush1.bf16.msra.mxu0 0
      %2704 = vmatprep.subr.bf16.mxu0 0
      %2705 = vmatpush1.bf16.msra.mxu0 %v2688
      %2706 = vmatprep.subr.bf16.mxu0 0
      %2707 = vmatpush1.bf16.msra.mxu0 %v2687
      %2708 = vmatprep.subr.bf16.mxu0 0
      %2709 = vmatpush1.bf16.msra.mxu0 %v2686
      %2710 = vmatprep.subr.bf16.mxu0 0
      %2711 = vmatpush1.bf16.msra.mxu0 %v2685
      %2712 = vmatprep.subr.bf16.mxu0 0
      %2713 = vmatpush2.bf16.msra.mxu0 0
      %2714 = vmatprep.subr.bf16.mxu0 0
      %2715 = vmatpush2.bf16.msra.mxu0 0
      %2716 = vmatprep.subr.bf16.mxu0 0
      %2717 = vmatpush2.bf16.msra.mxu0 0
      %2718 = vmatprep.subr.bf16.mxu0 0
      %2719 = vmatpush2.bf16.msra.mxu0 0
      %2720 = vmatprep.subr.bf16.mxu0 0
      %2721 = vmatpush2.bf16.msra.mxu0 0
      %2722 = vmatprep.subr.bf16.mxu0 0
      %2723 = vmatpush2.bf16.msra.mxu0 0
      %2724 = vmatprep.subr.bf16.mxu0 0
      %2725 = vmatpush2.bf16.msra.mxu0 0
      %2726 = vmatprep.subr.bf16.mxu0 0
      %2727 = vmatpush2.bf16.msra.mxu0 0
      %2728 = vmatprep.mubr.bf16.mxu0 0
      %2729 = vmatmul.mubr.bf16.gmra.mxu0 %v2694
      %v2730 = vpop.f32.mrf.mxu0
      %v2731 = vadd.f32 %v2667, %v2730
      %v2732 = vpop.f32.mrf.mxu0
      %v2733 = vpop.f32.mrf.mxu0
      %v2734 = vadd.f32 %v2667, %v2733
      %v2735 = vpop.f32.mrf.mxu0
      %2736 = vdwg.mxu0
      %v2737 = vmax.f32 %v2731, 0.0
      %v2738 = vmax.f32 %v2734, 0.0
      %v2739 = vpack.c.bf16 %v2738, %v2737
      %v2741 = vlaneseq
      %v2742 = vshrl.u32 %v2741, 7
      %v2743 = vsub.s32 0, %v2742
      %v2744 = vrot.slane %v2659, %v2743
      %v2750 = vunpack.c.l.b16 %v2655
      %v2751 = vunpack.c.l.b16 %v2656
      %v2752 = vunpack.c.l.b16 %v2657
      %v2753 = vunpack.c.l.b16 %v2658
      %v2754 = vpack.c.b16 %v2751, %v2750
      %v2755 = vpack.c.b16 %v2753, %v2752
      %vm2758 = vcmask 261120
      %v2760 = vsel %vm2758, %v2739, 0
      %2762 = vmatprep.subr.bf16.mxu0 0
      %2763 = vmatpush1.bf16.msra.mxu0 0
      %2764 = vmatprep.subr.bf16.mxu0 0
      %2765 = vmatpush1.bf16.msra.mxu0 0
      %2766 = vmatprep.subr.bf16.mxu0 0
      %2767 = vmatpush1.bf16.msra.mxu0 0
      %2768 = vmatprep.subr.bf16.mxu0 0
      %2769 = vmatpush1.bf16.msra.mxu0 0
      %2770 = vmatprep.subr.bf16.mxu0 0
      %2771 = vmatpush1.bf16.msra.mxu0 0
      %2772 = vmatprep.subr.bf16.mxu0 0
      %2773 = vmatpush1.bf16.msra.mxu0 0
      %2774 = vmatprep.subr.bf16.mxu0 0
      %2775 = vmatpush1.bf16.msra.mxu0 %v2755
      %2776 = vmatprep.subr.bf16.mxu0 0
      %2777 = vmatpush1.bf16.msra.mxu0 %v2754
      %2778 = vmatprep.subr.bf16.mxu0 0
      %2779 = vmatpush2.bf16.msra.mxu0 0
      %2780 = vmatprep.subr.bf16.mxu0 0
      %2781 = vmatpush2.bf16.msra.mxu0 0
      %2782 = vmatprep.subr.bf16.mxu0 0
      %2783 = vmatpush2.bf16.msra.mxu0 0
      %2784 = vmatprep.subr.bf16.mxu0 0
      %2785 = vmatpush2.bf16.msra.mxu0 0
      %2786 = vmatprep.subr.bf16.mxu0 0
      %2787 = vmatpush2.bf16.msra.mxu0 0
      %2788 = vmatprep.subr.bf16.mxu0 0
      %2789 = vmatpush2.bf16.msra.mxu0 0
      %2790 = vmatprep.subr.bf16.mxu0 0
      %2791 = vmatpush2.bf16.msra.mxu0 0
      %2792 = vmatprep.subr.bf16.mxu0 0
      %2793 = vmatpush2.bf16.msra.mxu0 0
      %2794 = vmatprep.mubr.bf16.mxu0 0
      %2795 = vmatmul.mubr.bf16.gmra.mxu0 %v2760
      %v2796 = vpop.f32.mrf.mxu0
      %v2797 = vadd.f32 %v2744, %v2796
      %v2798 = vpop.f32.mrf.mxu0
      %v2799 = vpop.f32.mrf.mxu0
      %v2800 = vadd.f32 %v2744, %v2799
      %v2801 = vpop.f32.mrf.mxu0
      %2802 = vdwg.mxu0
      %v2803 = vadd.f32 %v2644, %v2797
      %v2804 = vadd.f32 %v2645, %v2800
      %v2805 = vsel %vm889, %v2803, 0.0
      %2806 = vadd.xlane.f32.xlu0 %v2805
      %v2807 = vpop.xlane.xlu0 %2806
      %v2808 = vsel %vm1672, %v2804, 0.0
      %2809 = vadd.xlane.f32.xlu0 %v2808
      %v2810 = vpop.xlane.xlu0 %2809
      %v2811 = vmul.f32 %v2807, %v1676
      %v2812 = vmul.f32 %v2810, %v1676
      %v2813 = vsub.f32 %v2803, %v2811
      %v2814 = vsub.f32 %v2804, %v2812
      %v2815 = vmul.f32 %v2813, %v2813
      %v2816 = vmul.f32 %v2814, %v2814
      %v2817 = vsel %vm889, %v2815, 0.0
      %2818 = vadd.xlane.f32.xlu0 %v2817
      %v2819 = vpop.xlane.xlu0 %2818
      %v2820 = vsel %vm1672, %v2816, 0.0
      %2821 = vadd.xlane.f32.xlu0 %v2820
      %v2822 = vpop.xlane.xlu0 %2821
      %v2823 = vmul.f32 %v2819, %v1676
      %v2824 = vmul.f32 %v2822, %v1676
      %v2825 = vadd.f32 %v2823, 1e-05
      %v2826 = vadd.f32 %v2824, 1e-05
      %v2827 = vrsqrt.pop %v2825
      %v2828 = vrsqrt.pop %v2826
      %v2829 = vmul.f32 %v2813, %v2827
      %v2830 = vmul.f32 %v2814, %v2828
      %v2832 = vlaneseq
      %v2833 = vshrl.u32 %v2832, 7
      %v2834 = vsub.s32 0, %v2833
      %v2835 = vrot.slane %v2660, %v2834
      %v2837 = vmul.f32 %v2829, %v2835
      %v2838 = vmul.f32 %v2830, %v2835
      %v2840 = vlaneseq
      %v2841 = vshrl.u32 %v2840, 7
      %v2842 = vsub.s32 0, %v2841
      %v2843 = vrot.slane %v2661, %v2842
      %v2845 = vadd.f32 %v2837, %v2843
      %v2846 = vadd.f32 %v2838, %v2843
      %v2847 = vld [vmem:[%s22] sm:$0x1]
      %v2848 = vld [vmem:[%s23] sm:$0x1]
      %v2849 = vsel %vm889, %v2845, 0.0
      %2850 = vadd.xlane.f32.xlu0 %v2849
      %v2851 = vpop.xlane.xlu0 %2850
      %v2852 = vsel %vm1672, %v2846, 0.0
      %2853 = vadd.xlane.f32.xlu0 %v2852
      %v2854 = vpop.xlane.xlu0 %2853
      %v2855 = vmul.f32 %v2851, %v1676
      %v2856 = vmul.f32 %v2854, %v1676
      %v2857 = vsub.f32 %v2845, %v2855
      %v2858 = vsub.f32 %v2846, %v2856
      %v2859 = vmul.f32 %v2857, %v2857
      %v2860 = vmul.f32 %v2858, %v2858
      %v2861 = vsel %vm889, %v2859, 0.0
      %2862 = vadd.xlane.f32.xlu0 %v2861
      %v2863 = vpop.xlane.xlu0 %2862
      %v2864 = vsel %vm1672, %v2860, 0.0
      %2865 = vadd.xlane.f32.xlu0 %v2864
      %v2866 = vpop.xlane.xlu0 %2865
      %v2867 = vmul.f32 %v2863, %v1676
      %v2868 = vmul.f32 %v2866, %v1676
      %v2869 = vadd.f32 %v2867, 1e-05
      %v2870 = vadd.f32 %v2868, 1e-05
      %v2871 = vrsqrt.pop %v2869
      %v2872 = vrsqrt.pop %v2870
      %v2873 = vmul.f32 %v2857, %v2871
      %v2874 = vmul.f32 %v2858, %v2872
      %v2876 = vlaneseq
      %v2877 = vshrl.u32 %v2876, 7
      %v2878 = vsub.s32 0, %v2877
      %v2879 = vrot.slane %v2847, %v2878
      %v2881 = vmul.f32 %v2873, %v2879
      %v2882 = vmul.f32 %v2874, %v2879
      %v2884 = vlaneseq
      %v2885 = vshrl.u32 %v2884, 7
      %v2886 = vsub.s32 0, %v2885
      %v2887 = vrot.slane %v2848, %v2886
      %v2889 = vadd.f32 %v2881, %v2887
      %v2890 = vadd.f32 %v2882, %v2887
      %v2891 = vpack.c.bf16 %v2890, %v2889
      %v2892 = vld [vmem:[%s24] sm:$0xf]
      %v2893 = vld [vmem:[%s24 + $0x4] sm:$0xf]
      %v2894 = vld [vmem:[%s24 + $0x8] sm:$0xf]
      %v2895 = vld [vmem:[%s24 + $0xc] sm:$0xf]
      %v2896 = vld [vmem:[%s24 + $0x10] sm:$0xf]
      %v2897 = vld [vmem:[%s24 + $0x14] sm:$0xf]
      %v2898 = vld [vmem:[%s24 + $0x18] sm:$0xf]
      %v2899 = vld [vmem:[%s24 + $0x1c] sm:$0xf]
      %v2900 = vld [vmem:[%s25] sm:$0x1]
      %v2902 = vlaneseq
      %v2903 = vshrl.u32 %v2902, 7
      %v2904 = vsub.s32 0, %v2903
      %v2905 = vrot.slane %v2900, %v2904
      %v2915 = vunpack.c.l.b16 %v2892
      %v2916 = vunpack.c.l.b16 %v2893
      %v2917 = vunpack.c.l.b16 %v2894
      %v2918 = vunpack.c.l.b16 %v2895
      %v2919 = vunpack.c.l.b16 %v2896
      %v2920 = vunpack.c.l.b16 %v2897
      %v2921 = vunpack.c.l.b16 %v2898
      %v2922 = vunpack.c.l.b16 %v2899
      %v2923 = vpack.c.b16 %v2916, %v2915
      %v2924 = vpack.c.b16 %v2918, %v2917
      %v2925 = vpack.c.b16 %v2920, %v2919
      %v2926 = vpack.c.b16 %v2922, %v2921
      %v2932 = vsel %vm889, %v2891, 0
      %2934 = vmatprep.subr.bf16.mxu0 0
      %2935 = vmatpush1.bf16.msra.mxu0 0
      %2936 = vmatprep.subr.bf16.mxu0 0
      %2937 = vmatpush1.bf16.msra.mxu0 0
      %2938 = vmatprep.subr.bf16.mxu0 0
      %2939 = vmatpush1.bf16.msra.mxu0 0
      %2940 = vmatprep.subr.bf16.mxu0 0
      %2941 = vmatpush1.bf16.msra.mxu0 0
      %2942 = vmatprep.subr.bf16.mxu0 0
      %2943 = vmatpush1.bf16.msra.mxu0 %v2926
      %2944 = vmatprep.subr.bf16.mxu0 0
      %2945 = vmatpush1.bf16.msra.mxu0 %v2925
      %2946 = vmatprep.subr.bf16.mxu0 0
      %2947 = vmatpush1.bf16.msra.mxu0 %v2924
      %2948 = vmatprep.subr.bf16.mxu0 0
      %2949 = vmatpush1.bf16.msra.mxu0 %v2923
      %2950 = vmatprep.subr.bf16.mxu0 0
      %2951 = vmatpush2.bf16.msra.mxu0 0
      %2952 = vmatprep.subr.bf16.mxu0 0
      %2953 = vmatpush2.bf16.msra.mxu0 0
      %2954 = vmatprep.subr.bf16.mxu0 0
      %2955 = vmatpush2.bf16.msra.mxu0 0
      %2956 = vmatprep.subr.bf16.mxu0 0
      %2957 = vmatpush2.bf16.msra.mxu0 0
      %2958 = vmatprep.subr.bf16.mxu0 0
      %2959 = vmatpush2.bf16.msra.mxu0 0
      %2960 = vmatprep.subr.bf16.mxu0 0
      %2961 = vmatpush2.bf16.msra.mxu0 0
      %2962 = vmatprep.subr.bf16.mxu0 0
      %2963 = vmatpush2.bf16.msra.mxu0 0
      %2964 = vmatprep.subr.bf16.mxu0 0
      %2965 = vmatpush2.bf16.msra.mxu0 0
      %2966 = vmatprep.mubr.bf16.mxu0 0
      %2967 = vmatmul.mubr.bf16.gmra.mxu0 %v2932
      %v2968 = vpop.f32.mrf.mxu0
      %v2969 = vadd.f32 %v2905, %v2968
      %v2970 = vpop.f32.mrf.mxu0
      %v2971 = vpop.f32.mrf.mxu0
      %v2972 = vadd.f32 %v2905, %v2971
      %v2973 = vpop.f32.mrf.mxu0
      %2974 = vdwg.mxu0
      %2975 = vst.msk [vmem:[%s811] sm:$0xff] %vm889, %v2969
      %2976 = vst.msk [vmem:[%s811 + $0x8] sm:$0x3] %vm1672, %v2972
      %p2977 = scmp.lt.s32.totalorder %s37, 1
      %s2978 = scalar_select %p2977, %s37, 1
      %s2979 = smul.addr %s2978, 2
      %s2980 = smul.addr %s2979, 8
      %s2981 = scalar_lea.vmem %s26, %s2980
      // Predicated region
      $region125: #{_lambda_.3} parent=123 // pred_check
        %p2982 = pneg %p611
      $region126: #{_lambda_.3} parent=123 // pred_check_branch
        %2984 = sbr.rel (%p2982) target = $region128
      $region127: #{_lambda_.3} parent=123 // pred_region
        _
      $region128: #{_lambda_.3} parent=123 // pred_fallthru
        _
    $region124: #{_lambda_.3} parent=5 // pred_fallthru
      _
    %p2985 = scmp.le.s32.totalorder 2, %s32
    // Predicated region
    $region129: #{_lambda_.3} parent=5 // pred_check
      %p2986 = pneg %p2985
    $region130: #{_lambda_.3} parent=5 // pred_check_branch
      %2988 = sbr.rel (%p2986) target = $region132
    $region131: #{_lambda_.3} parent=5 // pred_region
      %s2989 = ssub.s32 %s32, 2
      // Predicated region
      $region133: #{_lambda_.3} parent=131 // pred_check
        %p2990 = pneg %p617
      $region134: #{_lambda_.3} parent=131 // pred_check_branch
        %2992 = sbr.rel (%p2990) target = $region136
      $region135: #{_lambda_.3} parent=131 // pred_region
        %p2993 = scmp.lt.s32.totalorder %s38, 1
        %s2994 = scalar_select %p2993, %s38, 1
        %s2995 = smul.addr %s2994, 2
        %s2996 = smul.addr %s2995, 8
        %s2997 = scalar_lea.vmem %s26, %s2996
      $region136: #{_lambda_.3} parent=131 // pred_fallthru
        _
    $region132: #{_lambda_.3} parent=5 // pred_fallthru
      _
  $region6: #{_lambda_.3} parent=0 // loop_footer
    %s36 = sadd.s32 1, %s32
  $region7: #{_lambda_.3} parent=0 // loop_footer_branch
    %31 = sbr.rel target = $region3
  $region8: #{_lambda_.3} parent=0 // loop_exit
    _

</llo_original>
